<compile_context>
chip_gen: v7x
topology: tpu7x:2x2x1
jax: 0.10.0
libtpu: 0.0.40
codegen_flags: <defaults>
</compile_context>

<pallas_src>
import functools

import jax
import jax.numpy as jnp
from jax.experimental import pallas as pl
from jax.experimental.pallas import tpu as pltpu


# ------------------------------ Pallas kernel ------------------------------

def conv3x3_do_relu_kernel(w_ref, xc_ref, top_ref, bot_ref, out_ref, pad_ref):
    """3x3 conv (stride 1, zero pad 1) + ReLU on one (batch, row-tile) block.

    w_ref   : SMEM (9*Cin*Cout,) f32, flattened in (dy, dx, ci, co) order.
    xc_ref  : VMEM (1, Cin, TH, W)   center rows of the tile.
    top_ref : VMEM (1, 1, Cin, W)    row above the tile (zeros at image top).
    bot_ref : VMEM (1, 1, Cin, W)    row below the tile (zeros at image bottom).
    out_ref : VMEM (1, Cout, TH, W)
    pad_ref : VMEM scratch (Cin, TH+2, W+2) zero-padded staging tile.
    """
    _, Cin, TH, W = xc_ref.shape
    Cout = out_ref.shape[1]

    # ---- stage the zero-padded input tile once per grid step -------------
    # (Unconditional zero: scratch is per-core, so do not rely on grid point
    #  (0,0) running on every core under "parallel" megacore sharding.)
    pad_ref[...] = jnp.zeros_like(pad_ref)
    pad_ref[:, 1:TH + 1, 1:W + 1] = xc_ref[0]          # interior rows
    pad_ref[:, 0, 1:W + 1] = top_ref[0, 0]             # halo row above
    pad_ref[:, TH + 1, 1:W + 1] = bot_ref[0, 0]        # halo row below

    # ---- load the 9 shifted taps per input channel once, reuse for all co --
    taps = [[[pad_ref[ci, dy:dy + TH, dx:dx + W] for dx in range(3)]
             for dy in range(3)]
            for ci in range(Cin)]

    # ---- VPU conv: 9*Cin*Cout scalar-broadcast FMAs over (TH, W) tiles -----
    for co in range(Cout):
        acc = None
        for ci in range(Cin):
            for dy in range(3):
                for dx in range(3):
                    wv = w_ref[((dy * 3 + dx) * Cin + ci) * Cout + co]
                    term = wv * taps[ci][dy][dx]
                    acc = term if acc is None else acc + term
        out_ref[0, co] = jnp.maximum(acc, 0.0)          # ReLU


# ------------------------------- JAX wrapper --------------------------------

def basic_conv_do_relu(x, W_param, D_param, D_diag, *, tile_h=None):
    """BasicConv_do forward: ReLU(DOConv2d_3x3(x)).  x: (B, Cin, H, W) f32."""
    x = x.astype(jnp.float32)
    B, Cin, H, Wd = x.shape
    Cout, Cin_w, Dmul = W_param.shape
    assert Cin_w == Cin and Dmul == 9

    # --- DOConv2d effective weight composition (tiny einsum; left to XLA) ---
    dow = jnp.einsum('ims,ois->oim', D_param + D_diag,
                     W_param.reshape(Cout, Cin, 9),
                     precision=jax.lax.Precision.HIGHEST)
    dow = dow.reshape(Cout, Cin, 3, 3)                         # OIHW
    # flatten in (dy, dx, ci, co) order -> SMEM scalar table for the kernel
    w_flat = jnp.transpose(dow, (2, 3, 1, 0)).reshape(-1)

    # --- row-tile size: largest multiple-of-8 divisor of H under a VMEM
    #     budget that is comfortable even on v7x (64 MiB physical / 32 MiB
    #     default scoped, double-buffered in+out tiles). ---
    if tile_h is None:
        tile_h = H
        budget = 4 * 1024 * 1024                              # bytes per tile pair
        for cand in (128, 64, 32, 16, 8):
            if H % cand == 0 and (Cin + Cout) * cand * Wd * 4 <= budget:
                tile_h = cand
                break
    assert H % tile_h == 0, (H, tile_h)
    nb = H // tile_h

    # --- per-tile halo rows (row above / below each row tile; zeros at the
    #     image border).  Tiny side arrays (~1/tile_h of the input) instead of
    #     materializing a full padded copy of x in HBM. ---
    zrow = jnp.zeros((B, Cin, 1, Wd), jnp.float32)
    above = x[:, :, tile_h - 1:H - 1:tile_h, :]                # (B,Cin,nb-1,W)
    below = x[:, :, tile_h:H:tile_h, :]                        # (B,Cin,nb-1,W)
    top_halo = jnp.transpose(jnp.concatenate([zrow, above], axis=2),
                             (0, 2, 1, 3))                     # (B,nb,Cin,W)
    bot_halo = jnp.transpose(jnp.concatenate([below, zrow], axis=2),
                             (0, 2, 1, 3))                     # (B,nb,Cin,W)

    out_bytes = B * Cout * H * Wd * 4
    cost = pl.CostEstimate(
        flops=2 * B * H * Wd * 9 * Cin * Cout,
        transcendentals=0,
        bytes_accessed=4 * (x.size + top_halo.size + bot_halo.size
                            + w_flat.size) + out_bytes)

    return pl.pallas_call(
        conv3x3_do_relu_kernel,
        out_shape=jax.ShapeDtypeStruct((B, Cout, H, Wd), jnp.float32),
        grid=(B, nb),
        in_specs=[
            # flattened conv weights, resident in SMEM (scalar reads)
            pl.BlockSpec(memory_space=pltpu.MemorySpace.SMEM),
            # center rows of the tile
            pl.BlockSpec((1, Cin, tile_h, Wd), lambda b, i: (b, 0, i, 0)),
            # halo row above / below this tile
            pl.BlockSpec((1, 1, Cin, Wd), lambda b, i: (b, i, 0, 0)),
            pl.BlockSpec((1, 1, Cin, Wd), lambda b, i: (b, i, 0, 0)),
        ],
        out_specs=pl.BlockSpec((1, Cout, tile_h, Wd), lambda b, i: (b, 0, i, 0)),
        scratch_shapes=[pltpu.VMEM((Cin, tile_h + 2, Wd + 2), jnp.float32)],
        compiler_params=pltpu.CompilerParams(
            dimension_semantics=("parallel", "parallel"),
            vmem_limit_bytes=32 * 1024 * 1024),
        cost_estimate=cost,
    )(w_flat, x, top_halo, bot_halo)


# ---------------------------- pure-JAX reference ----------------------------

def reference(x, W_param, D_param, D_diag):
    Cout, Cin, _ = W_param.shape
    dow = jnp.einsum('ims,ois->oim', D_param + D_diag,
                     W_param.reshape(Cout, Cin, 9),
                     precision=jax.lax.Precision.HIGHEST)
    dow = dow.reshape(Cout, Cin, 3, 3)                         # OIHW
    y = jax.lax.conv_general_dilated(
        x.astype(jnp.float32), dow, window_strides=(1, 1),
        padding=((1, 1), (1, 1)),
        dimension_numbers=("NCHW", "OIHW", "NCHW"),
        precision=jax.lax.Precision.HIGHEST)
    return jnp.maximum(y, 0.0)                                 # ReLU


# ----------------------------------- main ------------------------------------

if __name__ == "__main__":
    key = jax.random.PRNGKey(0)
    kx, kw, kd = jax.random.split(key, 3)

    B, Cin, H, W = 2, 4, 16, 16
    Cout = 8

    x = jax.random.normal(kx, (B, Cin, H, W), jnp.float32)
    # DOConv2d parameters (D_mul = 9): W (out, in, 9), D (in, 9, 9), D_diag = I.
    W_param = 0.2 * jax.random.normal(kw, (Cout, Cin, 9), jnp.float32)
    D_param = 0.05 * jax.random.normal(kd, (Cin, 9, 9), jnp.float32)
    D_diag = jnp.tile(jnp.eye(9, dtype=jnp.float32)[None], (Cin, 1, 1))

    # tile_h=8 -> 2 row tiles, exercising the cross-tile halo path.
    fwd = jax.jit(functools.partial(basic_conv_do_relu, tile_h=8))
    out = fwd(x, W_param, D_param, D_diag)
    jax.block_until_ready(out)

    ref = reference(x, W_param, D_param, D_diag)
    assert out.shape == (B, Cout, H, W), out.shape
    max_err = float(jnp.max(jnp.abs(out - ref)))
    assert jnp.allclose(out, ref, atol=1e-3, rtol=1e-3), max_err

    print("KERNEL_OK")
</pallas_src>

<mosaic_0001>
module attributes {stable_mosaic.version = 11 : i64} {
  func.func @conv3x3_do_relu_kernel(%arg0: i32, %arg1: i32, %arg2: memref<288xf32, #tpu.memory_space<smem>>, %arg3: memref<1x4x8x16xf32, #tpu.memory_space<vmem>>, %arg4: memref<1x1x4x16xf32, #tpu.memory_space<vmem>>, %arg5: memref<1x1x4x16xf32, #tpu.memory_space<vmem>>, %arg6: memref<1x8x8x16xf32, #tpu.memory_space<vmem>>, %arg7: memref<4x10x18xf32, #tpu.memory_space<vmem>>) attributes {dimension_semantics = [#tpu.dimension_semantics<parallel>, #tpu.dimension_semantics<parallel>], iteration_bounds = array<i64: 2, 2>, scalar_prefetch = 0 : i64, scratch_operands = 1 : i64, tpu.core_type = #tpu.core_type<tc>, window_params = [{transform_indices = @transform_0, window_bounds = array<i64: 288>}, {transform_indices = @transform_1, window_bounds = array<i64: 1, 4, 8, 16>}, {transform_indices = @transform_2, window_bounds = array<i64: 1, 1, 4, 16>}, {transform_indices = @transform_3, window_bounds = array<i64: 1, 1, 4, 16>}, {transform_indices = @transform_4, window_bounds = array<i64: 1, 8, 8, 16>}]} {
    %cst = arith.constant 0.000000e+00 : f32
    %0 = vector.broadcast %cst : f32 to vector<4x10x18xf32>
    %c0 = arith.constant 0 : index
    %c0_0 = arith.constant 0 : index
    %c0_1 = arith.constant 0 : index
    %1 = vector.load %arg7[%c0, %c0_0, %c0_1] : memref<4x10x18xf32, #tpu.memory_space<vmem>>, vector<4x10x18xf32>
    tpu.vector_store %arg7[%c0, %c0_0, %c0_1], %0 {strides = array<i32>} : memref<4x10x18xf32, #tpu.memory_space<vmem>>, vector<4x10x18xf32>,
    %c0_2 = arith.constant 0 : index
    %c0_3 = arith.constant 0 : index
    %c0_4 = arith.constant 0 : index
    %c0_5 = arith.constant 0 : index
    %2 = vector.load %arg3[%c0_2, %c0_3, %c0_4, %c0_5] : memref<1x4x8x16xf32, #tpu.memory_space<vmem>>, vector<1x4x8x16xf32>
    %3 = vector.shape_cast %2 : vector<1x4x8x16xf32> to vector<4x8x16xf32>
    %c0_6 = arith.constant 0 : index
    %c1 = arith.constant 1 : index
    %c1_7 = arith.constant 1 : index
    %4 = vector.load %arg7[%c0_6, %c1, %c1_7] : memref<4x10x18xf32, #tpu.memory_space<vmem>>, vector<4x8x16xf32>
    tpu.vector_store %arg7[%c0_6, %c1, %c1_7], %3 {strides = array<i32>} : memref<4x10x18xf32, #tpu.memory_space<vmem>>, vector<4x8x16xf32>,
    %c0_8 = arith.constant 0 : index
    %c0_9 = arith.constant 0 : index
    %c0_10 = arith.constant 0 : index
    %c0_11 = arith.constant 0 : index
    %5 = vector.load %arg4[%c0_8, %c0_9, %c0_10, %c0_11] : memref<1x1x4x16xf32, #tpu.memory_space<vmem>>, vector<1x1x4x16xf32>
    %6 = vector.shape_cast %5 : vector<1x1x4x16xf32> to vector<4x16xf32>
    %c0_12 = arith.constant 0 : index
    %c0_13 = arith.constant 0 : index
    %c1_14 = arith.constant 1 : index
    %7 = vector.load %arg7[%c0_12, %c0_13, %c1_14] : memref<4x10x18xf32, #tpu.memory_space<vmem>>, vector<4x1x16xf32>
    %8 = vector.shape_cast %7 : vector<4x1x16xf32> to vector<4x16xf32>
    %9 = vector.shape_cast %6 : vector<4x16xf32> to vector<4x1x16xf32>
    tpu.vector_store %arg7[%c0_12, %c0_13, %c1_14], %9 {strides = array<i32>} : memref<4x10x18xf32, #tpu.memory_space<vmem>>, vector<4x1x16xf32>,
    %c0_15 = arith.constant 0 : index
    %c0_16 = arith.constant 0 : index
    %c0_17 = arith.constant 0 : index
    %c0_18 = arith.constant 0 : index
    %10 = vector.load %arg5[%c0_15, %c0_16, %c0_17, %c0_18] : memref<1x1x4x16xf32, #tpu.memory_space<vmem>>, vector<1x1x4x16xf32>
    %11 = vector.shape_cast %10 : vector<1x1x4x16xf32> to vector<4x16xf32>
    %c0_19 = arith.constant 0 : index
    %c9 = arith.constant 9 : index
    %c1_20 = arith.constant 1 : index
    %12 = vector.load %arg7[%c0_19, %c9, %c1_20] : memref<4x10x18xf32, #tpu.memory_space<vmem>>, vector<4x1x16xf32>
    %13 = vector.shape_cast %12 : vector<4x1x16xf32> to vector<4x16xf32>
    %14 = vector.shape_cast %11 : vector<4x16xf32> to vector<4x1x16xf32>
    tpu.vector_store %arg7[%c0_19, %c9, %c1_20], %14 {strides = array<i32>} : memref<4x10x18xf32, #tpu.memory_space<vmem>>, vector<4x1x16xf32>,
    %c0_21 = arith.constant 0 : index
    %c0_22 = arith.constant 0 : index
    %c0_23 = arith.constant 0 : index
    %15 = vector.load %arg7[%c0_21, %c0_22, %c0_23] : memref<4x10x18xf32, #tpu.memory_space<vmem>>, vector<1x8x16xf32>
    %16 = vector.shape_cast %15 : vector<1x8x16xf32> to vector<8x16xf32>
    %c0_24 = arith.constant 0 : index
    %c0_25 = arith.constant 0 : index
    %c1_26 = arith.constant 1 : index
    %17 = vector.load %arg7[%c0_24, %c0_25, %c1_26] : memref<4x10x18xf32, #tpu.memory_space<vmem>>, vector<1x8x16xf32>
    %18 = vector.shape_cast %17 : vector<1x8x16xf32> to vector<8x16xf32>
    %c0_27 = arith.constant 0 : index
    %c0_28 = arith.constant 0 : index
    %c2 = arith.constant 2 : index
    %19 = vector.load %arg7[%c0_27, %c0_28, %c2] : memref<4x10x18xf32, #tpu.memory_space<vmem>>, vector<1x8x16xf32>
    %20 = vector.shape_cast %19 : vector<1x8x16xf32> to vector<8x16xf32>
    %c0_29 = arith.constant 0 : index
    %c1_30 = arith.constant 1 : index
    %c0_31 = arith.constant 0 : index
    %21 = vector.load %arg7[%c0_29, %c1_30, %c0_31] : memref<4x10x18xf32, #tpu.memory_space<vmem>>, vector<1x8x16xf32>
    %22 = vector.shape_cast %21 : vector<1x8x16xf32> to vector<8x16xf32>
    %c0_32 = arith.constant 0 : index
    %c1_33 = arith.constant 1 : index
    %c1_34 = arith.constant 1 : index
    %23 = vector.load %arg7[%c0_32, %c1_33, %c1_34] : memref<4x10x18xf32, #tpu.memory_space<vmem>>, vector<1x8x16xf32>
    %24 = vector.shape_cast %23 : vector<1x8x16xf32> to vector<8x16xf32>
    %c0_35 = arith.constant 0 : index
    %c1_36 = arith.constant 1 : index
    %c2_37 = arith.constant 2 : index
    %25 = vector.load %arg7[%c0_35, %c1_36, %c2_37] : memref<4x10x18xf32, #tpu.memory_space<vmem>>, vector<1x8x16xf32>
    %26 = vector.shape_cast %25 : vector<1x8x16xf32> to vector<8x16xf32>
    %c0_38 = arith.constant 0 : index
    %c2_39 = arith.constant 2 : index
    %c0_40 = arith.constant 0 : index
    %27 = vector.load %arg7[%c0_38, %c2_39, %c0_40] : memref<4x10x18xf32, #tpu.memory_space<vmem>>, vector<1x8x16xf32>
    %28 = vector.shape_cast %27 : vector<1x8x16xf32> to vector<8x16xf32>
    %c0_41 = arith.constant 0 : index
    %c2_42 = arith.constant 2 : index
    %c1_43 = arith.constant 1 : index
    %29 = vector.load %arg7[%c0_41, %c2_42, %c1_43] : memref<4x10x18xf32, #tpu.memory_space<vmem>>, vector<1x8x16xf32>
    %30 = vector.shape_cast %29 : vector<1x8x16xf32> to vector<8x16xf32>
    %c0_44 = arith.constant 0 : index
    %c2_45 = arith.constant 2 : index
    %c2_46 = arith.constant 2 : index
    %31 = vector.load %arg7[%c0_44, %c2_45, %c2_46] : memref<4x10x18xf32, #tpu.memory_space<vmem>>, vector<1x8x16xf32>
    %32 = vector.shape_cast %31 : vector<1x8x16xf32> to vector<8x16xf32>
    %c1_47 = arith.constant 1 : index
    %c0_48 = arith.constant 0 : index
    %c0_49 = arith.constant 0 : index
    %33 = vector.load %arg7[%c1_47, %c0_48, %c0_49] : memref<4x10x18xf32, #tpu.memory_space<vmem>>, vector<1x8x16xf32>
    %34 = vector.shape_cast %33 : vector<1x8x16xf32> to vector<8x16xf32>
    %c1_50 = arith.constant 1 : index
    %c0_51 = arith.constant 0 : index
    %c1_52 = arith.constant 1 : index
    %35 = vector.load %arg7[%c1_50, %c0_51, %c1_52] : memref<4x10x18xf32, #tpu.memory_space<vmem>>, vector<1x8x16xf32>
    %36 = vector.shape_cast %35 : vector<1x8x16xf32> to vector<8x16xf32>
    %c1_53 = arith.constant 1 : index
    %c0_54 = arith.constant 0 : index
    %c2_55 = arith.constant 2 : index
    %37 = vector.load %arg7[%c1_53, %c0_54, %c2_55] : memref<4x10x18xf32, #tpu.memory_space<vmem>>, vector<1x8x16xf32>
    %38 = vector.shape_cast %37 : vector<1x8x16xf32> to vector<8x16xf32>
    %c1_56 = arith.constant 1 : index
    %c1_57 = arith.constant 1 : index
    %c0_58 = arith.constant 0 : index
    %39 = vector.load %arg7[%c1_56, %c1_57, %c0_58] : memref<4x10x18xf32, #tpu.memory_space<vmem>>, vector<1x8x16xf32>
    %40 = vector.shape_cast %39 : vector<1x8x16xf32> to vector<8x16xf32>
    %c1_59 = arith.constant 1 : index
    %c1_60 = arith.constant 1 : index
    %c1_61 = arith.constant 1 : index
    %41 = vector.load %arg7[%c1_59, %c1_60, %c1_61] : memref<4x10x18xf32, #tpu.memory_space<vmem>>, vector<1x8x16xf32>
    %42 = vector.shape_cast %41 : vector<1x8x16xf32> to vector<8x16xf32>
    %c1_62 = arith.constant 1 : index
    %c1_63 = arith.constant 1 : index
    %c2_64 = arith.constant 2 : index
    %43 = vector.load %arg7[%c1_62, %c1_63, %c2_64] : memref<4x10x18xf32, #tpu.memory_space<vmem>>, vector<1x8x16xf32>
    %44 = vector.shape_cast %43 : vector<1x8x16xf32> to vector<8x16xf32>
    %c1_65 = arith.constant 1 : index
    %c2_66 = arith.constant 2 : index
    %c0_67 = arith.constant 0 : index
    %45 = vector.load %arg7[%c1_65, %c2_66, %c0_67] : memref<4x10x18xf32, #tpu.memory_space<vmem>>, vector<1x8x16xf32>
    %46 = vector.shape_cast %45 : vector<1x8x16xf32> to vector<8x16xf32>
    %c1_68 = arith.constant 1 : index
    %c2_69 = arith.constant 2 : index
    %c1_70 = arith.constant 1 : index
    %47 = vector.load %arg7[%c1_68, %c2_69, %c1_70] : memref<4x10x18xf32, #tpu.memory_space<vmem>>, vector<1x8x16xf32>
    %48 = vector.shape_cast %47 : vector<1x8x16xf32> to vector<8x16xf32>
    %c1_71 = arith.constant 1 : index
    %c2_72 = arith.constant 2 : index
    %c2_73 = arith.constant 2 : index
    %49 = vector.load %arg7[%c1_71, %c2_72, %c2_73] : memref<4x10x18xf32, #tpu.memory_space<vmem>>, vector<1x8x16xf32>
    %50 = vector.shape_cast %49 : vector<1x8x16xf32> to vector<8x16xf32>
    %c2_74 = arith.constant 2 : index
    %c0_75 = arith.constant 0 : index
    %c0_76 = arith.constant 0 : index
    %51 = vector.load %arg7[%c2_74, %c0_75, %c0_76] : memref<4x10x18xf32, #tpu.memory_space<vmem>>, vector<1x8x16xf32>
    %52 = vector.shape_cast %51 : vector<1x8x16xf32> to vector<8x16xf32>
    %c2_77 = arith.constant 2 : index
    %c0_78 = arith.constant 0 : index
    %c1_79 = arith.constant 1 : index
    %53 = vector.load %arg7[%c2_77, %c0_78, %c1_79] : memref<4x10x18xf32, #tpu.memory_space<vmem>>, vector<1x8x16xf32>
    %54 = vector.shape_cast %53 : vector<1x8x16xf32> to vector<8x16xf32>
    %c2_80 = arith.constant 2 : index
    %c0_81 = arith.constant 0 : index
    %c2_82 = arith.constant 2 : index
    %55 = vector.load %arg7[%c2_80, %c0_81, %c2_82] : memref<4x10x18xf32, #tpu.memory_space<vmem>>, vector<1x8x16xf32>
    %56 = vector.shape_cast %55 : vector<1x8x16xf32> to vector<8x16xf32>
    %c2_83 = arith.constant 2 : index
    %c1_84 = arith.constant 1 : index
    %c0_85 = arith.constant 0 : index
    %57 = vector.load %arg7[%c2_83, %c1_84, %c0_85] : memref<4x10x18xf32, #tpu.memory_space<vmem>>, vector<1x8x16xf32>
    %58 = vector.shape_cast %57 : vector<1x8x16xf32> to vector<8x16xf32>
    %c2_86 = arith.constant 2 : index
    %c1_87 = arith.constant 1 : index
    %c1_88 = arith.constant 1 : index
    %59 = vector.load %arg7[%c2_86, %c1_87, %c1_88] : memref<4x10x18xf32, #tpu.memory_space<vmem>>, vector<1x8x16xf32>
    %60 = vector.shape_cast %59 : vector<1x8x16xf32> to vector<8x16xf32>
    %c2_89 = arith.constant 2 : index
    %c1_90 = arith.constant 1 : index
    %c2_91 = arith.constant 2 : index
    %61 = vector.load %arg7[%c2_89, %c1_90, %c2_91] : memref<4x10x18xf32, #tpu.memory_space<vmem>>, vector<1x8x16xf32>
    %62 = vector.shape_cast %61 : vector<1x8x16xf32> to vector<8x16xf32>
    %c2_92 = arith.constant 2 : index
    %c2_93 = arith.constant 2 : index
    %c0_94 = arith.constant 0 : index
    %63 = vector.load %arg7[%c2_92, %c2_93, %c0_94] : memref<4x10x18xf32, #tpu.memory_space<vmem>>, vector<1x8x16xf32>
    %64 = vector.shape_cast %63 : vector<1x8x16xf32> to vector<8x16xf32>
    %c2_95 = arith.constant 2 : index
    %c2_96 = arith.constant 2 : index
    %c1_97 = arith.constant 1 : index
    %65 = vector.load %arg7[%c2_95, %c2_96, %c1_97] : memref<4x10x18xf32, #tpu.memory_space<vmem>>, vector<1x8x16xf32>
    %66 = vector.shape_cast %65 : vector<1x8x16xf32> to vector<8x16xf32>
    %c2_98 = arith.constant 2 : index
    %c2_99 = arith.constant 2 : index
    %c2_100 = arith.constant 2 : index
    %67 = vector.load %arg7[%c2_98, %c2_99, %c2_100] : memref<4x10x18xf32, #tpu.memory_space<vmem>>, vector<1x8x16xf32>
    %68 = vector.shape_cast %67 : vector<1x8x16xf32> to vector<8x16xf32>
    %c3 = arith.constant 3 : index
    %c0_101 = arith.constant 0 : index
    %c0_102 = arith.constant 0 : index
    %69 = vector.load %arg7[%c3, %c0_101, %c0_102] : memref<4x10x18xf32, #tpu.memory_space<vmem>>, vector<1x8x16xf32>
    %70 = vector.shape_cast %69 : vector<1x8x16xf32> to vector<8x16xf32>
    %c3_103 = arith.constant 3 : index
    %c0_104 = arith.constant 0 : index
    %c1_105 = arith.constant 1 : index
    %71 = vector.load %arg7[%c3_103, %c0_104, %c1_105] : memref<4x10x18xf32, #tpu.memory_space<vmem>>, vector<1x8x16xf32>
    %72 = vector.shape_cast %71 : vector<1x8x16xf32> to vector<8x16xf32>
    %c3_106 = arith.constant 3 : index
    %c0_107 = arith.constant 0 : index
    %c2_108 = arith.constant 2 : index
    %73 = vector.load %arg7[%c3_106, %c0_107, %c2_108] : memref<4x10x18xf32, #tpu.memory_space<vmem>>, vector<1x8x16xf32>
    %74 = vector.shape_cast %73 : vector<1x8x16xf32> to vector<8x16xf32>
    %c3_109 = arith.constant 3 : index
    %c1_110 = arith.constant 1 : index
    %c0_111 = arith.constant 0 : index
    %75 = vector.load %arg7[%c3_109, %c1_110, %c0_111] : memref<4x10x18xf32, #tpu.memory_space<vmem>>, vector<1x8x16xf32>
    %76 = vector.shape_cast %75 : vector<1x8x16xf32> to vector<8x16xf32>
    %c3_112 = arith.constant 3 : index
    %c1_113 = arith.constant 1 : index
    %c1_114 = arith.constant 1 : index
    %77 = vector.load %arg7[%c3_112, %c1_113, %c1_114] : memref<4x10x18xf32, #tpu.memory_space<vmem>>, vector<1x8x16xf32>
    %78 = vector.shape_cast %77 : vector<1x8x16xf32> to vector<8x16xf32>
    %c3_115 = arith.constant 3 : index
    %c1_116 = arith.constant 1 : index
    %c2_117 = arith.constant 2 : index
    %79 = vector.load %arg7[%c3_115, %c1_116, %c2_117] : memref<4x10x18xf32, #tpu.memory_space<vmem>>, vector<1x8x16xf32>
    %80 = vector.shape_cast %79 : vector<1x8x16xf32> to vector<8x16xf32>
    %c3_118 = arith.constant 3 : index
    %c2_119 = arith.constant 2 : index
    %c0_120 = arith.constant 0 : index
    %81 = vector.load %arg7[%c3_118, %c2_119, %c0_120] : memref<4x10x18xf32, #tpu.memory_space<vmem>>, vector<1x8x16xf32>
    %82 = vector.shape_cast %81 : vector<1x8x16xf32> to vector<8x16xf32>
    %c3_121 = arith.constant 3 : index
    %c2_122 = arith.constant 2 : index
    %c1_123 = arith.constant 1 : index
    %83 = vector.load %arg7[%c3_121, %c2_122, %c1_123] : memref<4x10x18xf32, #tpu.memory_space<vmem>>, vector<1x8x16xf32>
    %84 = vector.shape_cast %83 : vector<1x8x16xf32> to vector<8x16xf32>
    %c3_124 = arith.constant 3 : index
    %c2_125 = arith.constant 2 : index
    %c2_126 = arith.constant 2 : index
    %85 = vector.load %arg7[%c3_124, %c2_125, %c2_126] : memref<4x10x18xf32, #tpu.memory_space<vmem>>, vector<1x8x16xf32>
    %86 = vector.shape_cast %85 : vector<1x8x16xf32> to vector<8x16xf32>
    %c0_127 = arith.constant 0 : index
    %87 = memref.load %arg2[%c0_127] : memref<288xf32, #tpu.memory_space<smem>>
    %88 = vector.broadcast %87 : f32 to vector<8x16xf32>
    %89 = arith.mulf %88, %16 : vector<8x16xf32>
    %c32 = arith.constant 32 : index
    %90 = memref.load %arg2[%c32] : memref<288xf32, #tpu.memory_space<smem>>
    %91 = vector.broadcast %90 : f32 to vector<8x16xf32>
    %92 = arith.mulf %91, %18 : vector<8x16xf32>
    %93 = arith.addf %89, %92 : vector<8x16xf32>
    %c64 = arith.constant 64 : index
    %94 = memref.load %arg2[%c64] : memref<288xf32, #tpu.memory_space<smem>>
    %95 = vector.broadcast %94 : f32 to vector<8x16xf32>
    %96 = arith.mulf %95, %20 : vector<8x16xf32>
    %97 = arith.addf %93, %96 : vector<8x16xf32>
    %c96 = arith.constant 96 : index
    %98 = memref.load %arg2[%c96] : memref<288xf32, #tpu.memory_space<smem>>
    %99 = vector.broadcast %98 : f32 to vector<8x16xf32>
    %100 = arith.mulf %99, %22 : vector<8x16xf32>
    %101 = arith.addf %97, %100 : vector<8x16xf32>
    %c128 = arith.constant 128 : index
    %102 = memref.load %arg2[%c128] : memref<288xf32, #tpu.memory_space<smem>>
    %103 = vector.broadcast %102 : f32 to vector<8x16xf32>
    %104 = arith.mulf %103, %24 : vector<8x16xf32>
    %105 = arith.addf %101, %104 : vector<8x16xf32>
    %c160 = arith.constant 160 : index
    %106 = memref.load %arg2[%c160] : memref<288xf32, #tpu.memory_space<smem>>
    %107 = vector.broadcast %106 : f32 to vector<8x16xf32>
    %108 = arith.mulf %107, %26 : vector<8x16xf32>
    %109 = arith.addf %105, %108 : vector<8x16xf32>
    %c192 = arith.constant 192 : index
    %110 = memref.load %arg2[%c192] : memref<288xf32, #tpu.memory_space<smem>>
    %111 = vector.broadcast %110 : f32 to vector<8x16xf32>
    %112 = arith.mulf %111, %28 : vector<8x16xf32>
    %113 = arith.addf %109, %112 : vector<8x16xf32>
    %c224 = arith.constant 224 : index
    %114 = memref.load %arg2[%c224] : memref<288xf32, #tpu.memory_space<smem>>
    %115 = vector.broadcast %114 : f32 to vector<8x16xf32>
    %116 = arith.mulf %115, %30 : vector<8x16xf32>
    %117 = arith.addf %113, %116 : vector<8x16xf32>
    %c256 = arith.constant 256 : index
    %118 = memref.load %arg2[%c256] : memref<288xf32, #tpu.memory_space<smem>>
    %119 = vector.broadcast %118 : f32 to vector<8x16xf32>
    %120 = arith.mulf %119, %32 : vector<8x16xf32>
    %121 = arith.addf %117, %120 : vector<8x16xf32>
    %c8 = arith.constant 8 : index
    %122 = memref.load %arg2[%c8] : memref<288xf32, #tpu.memory_space<smem>>
    %123 = vector.broadcast %122 : f32 to vector<8x16xf32>
    %124 = arith.mulf %123, %34 : vector<8x16xf32>
    %125 = arith.addf %121, %124 : vector<8x16xf32>
    %c40 = arith.constant 40 : index
    %126 = memref.load %arg2[%c40] : memref<288xf32, #tpu.memory_space<smem>>
    %127 = vector.broadcast %126 : f32 to vector<8x16xf32>
    %128 = arith.mulf %127, %36 : vector<8x16xf32>
    %129 = arith.addf %125, %128 : vector<8x16xf32>
    %c72 = arith.constant 72 : index
    %130 = memref.load %arg2[%c72] : memref<288xf32, #tpu.memory_space<smem>>
    %131 = vector.broadcast %130 : f32 to vector<8x16xf32>
    %132 = arith.mulf %131, %38 : vector<8x16xf32>
    %133 = arith.addf %129, %132 : vector<8x16xf32>
    %c104 = arith.constant 104 : index
    %134 = memref.load %arg2[%c104] : memref<288xf32, #tpu.memory_space<smem>>
    %135 = vector.broadcast %134 : f32 to vector<8x16xf32>
    %136 = arith.mulf %135, %40 : vector<8x16xf32>
    %137 = arith.addf %133, %136 : vector<8x16xf32>
    %c136 = arith.constant 136 : index
    %138 = memref.load %arg2[%c136] : memref<288xf32, #tpu.memory_space<smem>>
    %139 = vector.broadcast %138 : f32 to vector<8x16xf32>
    %140 = arith.mulf %139, %42 : vector<8x16xf32>
    %141 = arith.addf %137, %140 : vector<8x16xf32>
    %c168 = arith.constant 168 : index
    %142 = memref.load %arg2[%c168] : memref<288xf32, #tpu.memory_space<smem>>
    %143 = vector.broadcast %142 : f32 to vector<8x16xf32>
    %144 = arith.mulf %143, %44 : vector<8x16xf32>
    %145 = arith.addf %141, %144 : vector<8x16xf32>
    %c200 = arith.constant 200 : index
    %146 = memref.load %arg2[%c200] : memref<288xf32, #tpu.memory_space<smem>>
    %147 = vector.broadcast %146 : f32 to vector<8x16xf32>
    %148 = arith.mulf %147, %46 : vector<8x16xf32>
    %149 = arith.addf %145, %148 : vector<8x16xf32>
    %c232 = arith.constant 232 : index
    %150 = memref.load %arg2[%c232] : memref<288xf32, #tpu.memory_space<smem>>
    %151 = vector.broadcast %150 : f32 to vector<8x16xf32>
    %152 = arith.mulf %151, %48 : vector<8x16xf32>
    %153 = arith.addf %149, %152 : vector<8x16xf32>
    %c264 = arith.constant 264 : index
    %154 = memref.load %arg2[%c264] : memref<288xf32, #tpu.memory_space<smem>>
    %155 = vector.broadcast %154 : f32 to vector<8x16xf32>
    %156 = arith.mulf %155, %50 : vector<8x16xf32>
    %157 = arith.addf %153, %156 : vector<8x16xf32>
    %c16 = arith.constant 16 : index
    %158 = memref.load %arg2[%c16] : memref<288xf32, #tpu.memory_space<smem>>
    %159 = vector.broadcast %158 : f32 to vector<8x16xf32>
    %160 = arith.mulf %159, %52 : vector<8x16xf32>
    %161 = arith.addf %157, %160 : vector<8x16xf32>
    %c48 = arith.constant 48 : index
    %162 = memref.load %arg2[%c48] : memref<288xf32, #tpu.memory_space<smem>>
    %163 = vector.broadcast %162 : f32 to vector<8x16xf32>
    %164 = arith.mulf %163, %54 : vector<8x16xf32>
    %165 = arith.addf %161, %164 : vector<8x16xf32>
    %c80 = arith.constant 80 : index
    %166 = memref.load %arg2[%c80] : memref<288xf32, #tpu.memory_space<smem>>
    %167 = vector.broadcast %166 : f32 to vector<8x16xf32>
    %168 = arith.mulf %167, %56 : vector<8x16xf32>
    %169 = arith.addf %165, %168 : vector<8x16xf32>
    %c112 = arith.constant 112 : index
    %170 = memref.load %arg2[%c112] : memref<288xf32, #tpu.memory_space<smem>>
    %171 = vector.broadcast %170 : f32 to vector<8x16xf32>
    %172 = arith.mulf %171, %58 : vector<8x16xf32>
    %173 = arith.addf %169, %172 : vector<8x16xf32>
    %c144 = arith.constant 144 : index
    %174 = memref.load %arg2[%c144] : memref<288xf32, #tpu.memory_space<smem>>
    %175 = vector.broadcast %174 : f32 to vector<8x16xf32>
    %176 = arith.mulf %175, %60 : vector<8x16xf32>
    %177 = arith.addf %173, %176 : vector<8x16xf32>
    %c176 = arith.constant 176 : index
    %178 = memref.load %arg2[%c176] : memref<288xf32, #tpu.memory_space<smem>>
    %179 = vector.broadcast %178 : f32 to vector<8x16xf32>
    %180 = arith.mulf %179, %62 : vector<8x16xf32>
    %181 = arith.addf %177, %180 : vector<8x16xf32>
    %c208 = arith.constant 208 : index
    %182 = memref.load %arg2[%c208] : memref<288xf32, #tpu.memory_space<smem>>
    %183 = vector.broadcast %182 : f32 to vector<8x16xf32>
    %184 = arith.mulf %183, %64 : vector<8x16xf32>
    %185 = arith.addf %181, %184 : vector<8x16xf32>
    %c240 = arith.constant 240 : index
    %186 = memref.load %arg2[%c240] : memref<288xf32, #tpu.memory_space<smem>>
    %187 = vector.broadcast %186 : f32 to vector<8x16xf32>
    %188 = arith.mulf %187, %66 : vector<8x16xf32>
    %189 = arith.addf %185, %188 : vector<8x16xf32>
    %c272 = arith.constant 272 : index
    %190 = memref.load %arg2[%c272] : memref<288xf32, #tpu.memory_space<smem>>
    %191 = vector.broadcast %190 : f32 to vector<8x16xf32>
    %192 = arith.mulf %191, %68 : vector<8x16xf32>
    %193 = arith.addf %189, %192 : vector<8x16xf32>
    %c24 = arith.constant 24 : index
    %194 = memref.load %arg2[%c24] : memref<288xf32, #tpu.memory_space<smem>>
    %195 = vector.broadcast %194 : f32 to vector<8x16xf32>
    %196 = arith.mulf %195, %70 : vector<8x16xf32>
    %197 = arith.addf %193, %196 : vector<8x16xf32>
    %c56 = arith.constant 56 : index
    %198 = memref.load %arg2[%c56] : memref<288xf32, #tpu.memory_space<smem>>
    %199 = vector.broadcast %198 : f32 to vector<8x16xf32>
    %200 = arith.mulf %199, %72 : vector<8x16xf32>
    %201 = arith.addf %197, %200 : vector<8x16xf32>
    %c88 = arith.constant 88 : index
    %202 = memref.load %arg2[%c88] : memref<288xf32, #tpu.memory_space<smem>>
    %203 = vector.broadcast %202 : f32 to vector<8x16xf32>
    %204 = arith.mulf %203, %74 : vector<8x16xf32>
    %205 = arith.addf %201, %204 : vector<8x16xf32>
    %c120 = arith.constant 120 : index
    %206 = memref.load %arg2[%c120] : memref<288xf32, #tpu.memory_space<smem>>
    %207 = vector.broadcast %206 : f32 to vector<8x16xf32>
    %208 = arith.mulf %207, %76 : vector<8x16xf32>
    %209 = arith.addf %205, %208 : vector<8x16xf32>
    %c152 = arith.constant 152 : index
    %210 = memref.load %arg2[%c152] : memref<288xf32, #tpu.memory_space<smem>>
    %211 = vector.broadcast %210 : f32 to vector<8x16xf32>
    %212 = arith.mulf %211, %78 : vector<8x16xf32>
    %213 = arith.addf %209, %212 : vector<8x16xf32>
    %c184 = arith.constant 184 : index
    %214 = memref.load %arg2[%c184] : memref<288xf32, #tpu.memory_space<smem>>
    %215 = vector.broadcast %214 : f32 to vector<8x16xf32>
    %216 = arith.mulf %215, %80 : vector<8x16xf32>
    %217 = arith.addf %213, %216 : vector<8x16xf32>
    %c216 = arith.constant 216 : index
    %218 = memref.load %arg2[%c216] : memref<288xf32, #tpu.memory_space<smem>>
    %219 = vector.broadcast %218 : f32 to vector<8x16xf32>
    %220 = arith.mulf %219, %82 : vector<8x16xf32>
    %221 = arith.addf %217, %220 : vector<8x16xf32>
    %c248 = arith.constant 248 : index
    %222 = memref.load %arg2[%c248] : memref<288xf32, #tpu.memory_space<smem>>
    %223 = vector.broadcast %222 : f32 to vector<8x16xf32>
    %224 = arith.mulf %223, %84 : vector<8x16xf32>
    %225 = arith.addf %221, %224 : vector<8x16xf32>
    %c280 = arith.constant 280 : index
    %226 = memref.load %arg2[%c280] : memref<288xf32, #tpu.memory_space<smem>>
    %227 = vector.broadcast %226 : f32 to vector<8x16xf32>
    %228 = arith.mulf %227, %86 : vector<8x16xf32>
    %229 = arith.addf %225, %228 : vector<8x16xf32>
    %cst_128 = arith.constant 0.000000e+00 : f32
    %230 = vector.broadcast %cst_128 : f32 to vector<8x16xf32>
    %231 = arith.maximumf %229, %230 : vector<8x16xf32>
    %c0_129 = arith.constant 0 : index
    %c0_130 = arith.constant 0 : index
    %c0_131 = arith.constant 0 : index
    %c0_132 = arith.constant 0 : index
    %232 = vector.load %arg6[%c0_129, %c0_130, %c0_131, %c0_132] : memref<1x8x8x16xf32, #tpu.memory_space<vmem>>, vector<1x1x8x16xf32>
    %233 = vector.shape_cast %232 : vector<1x1x8x16xf32> to vector<8x16xf32>
    %234 = vector.shape_cast %231 : vector<8x16xf32> to vector<1x1x8x16xf32>
    tpu.vector_store %arg6[%c0_129, %c0_130, %c0_131, %c0_132], %234 {strides = array<i32>} : memref<1x8x8x16xf32, #tpu.memory_space<vmem>>, vector<1x1x8x16xf32>,
    %c1_133 = arith.constant 1 : index
    %235 = memref.load %arg2[%c1_133] : memref<288xf32, #tpu.memory_space<smem>>
    %236 = vector.broadcast %235 : f32 to vector<8x16xf32>
    %237 = arith.mulf %236, %16 : vector<8x16xf32>
    %c33 = arith.constant 33 : index
    %238 = memref.load %arg2[%c33] : memref<288xf32, #tpu.memory_space<smem>>
    %239 = vector.broadcast %238 : f32 to vector<8x16xf32>
    %240 = arith.mulf %239, %18 : vector<8x16xf32>
    %241 = arith.addf %237, %240 : vector<8x16xf32>
    %c65 = arith.constant 65 : index
    %242 = memref.load %arg2[%c65] : memref<288xf32, #tpu.memory_space<smem>>
    %243 = vector.broadcast %242 : f32 to vector<8x16xf32>
    %244 = arith.mulf %243, %20 : vector<8x16xf32>
    %245 = arith.addf %241, %244 : vector<8x16xf32>
    %c97 = arith.constant 97 : index
    %246 = memref.load %arg2[%c97] : memref<288xf32, #tpu.memory_space<smem>>
    %247 = vector.broadcast %246 : f32 to vector<8x16xf32>
    %248 = arith.mulf %247, %22 : vector<8x16xf32>
    %249 = arith.addf %245, %248 : vector<8x16xf32>
    %c129 = arith.constant 129 : index
    %250 = memref.load %arg2[%c129] : memref<288xf32, #tpu.memory_space<smem>>
    %251 = vector.broadcast %250 : f32 to vector<8x16xf32>
    %252 = arith.mulf %251, %24 : vector<8x16xf32>
    %253 = arith.addf %249, %252 : vector<8x16xf32>
    %c161 = arith.constant 161 : index
    %254 = memref.load %arg2[%c161] : memref<288xf32, #tpu.memory_space<smem>>
    %255 = vector.broadcast %254 : f32 to vector<8x16xf32>
    %256 = arith.mulf %255, %26 : vector<8x16xf32>
    %257 = arith.addf %253, %256 : vector<8x16xf32>
    %c193 = arith.constant 193 : index
    %258 = memref.load %arg2[%c193] : memref<288xf32, #tpu.memory_space<smem>>
    %259 = vector.broadcast %258 : f32 to vector<8x16xf32>
    %260 = arith.mulf %259, %28 : vector<8x16xf32>
    %261 = arith.addf %257, %260 : vector<8x16xf32>
    %c225 = arith.constant 225 : index
    %262 = memref.load %arg2[%c225] : memref<288xf32, #tpu.memory_space<smem>>
    %263 = vector.broadcast %262 : f32 to vector<8x16xf32>
    %264 = arith.mulf %263, %30 : vector<8x16xf32>
    %265 = arith.addf %261, %264 : vector<8x16xf32>
    %c257 = arith.constant 257 : index
    %266 = memref.load %arg2[%c257] : memref<288xf32, #tpu.memory_space<smem>>
    %267 = vector.broadcast %266 : f32 to vector<8x16xf32>
    %268 = arith.mulf %267, %32 : vector<8x16xf32>
    %269 = arith.addf %265, %268 : vector<8x16xf32>
    %c9_134 = arith.constant 9 : index
    %270 = memref.load %arg2[%c9_134] : memref<288xf32, #tpu.memory_space<smem>>
    %271 = vector.broadcast %270 : f32 to vector<8x16xf32>
    %272 = arith.mulf %271, %34 : vector<8x16xf32>
    %273 = arith.addf %269, %272 : vector<8x16xf32>
    %c41 = arith.constant 41 : index
    %274 = memref.load %arg2[%c41] : memref<288xf32, #tpu.memory_space<smem>>
    %275 = vector.broadcast %274 : f32 to vector<8x16xf32>
    %276 = arith.mulf %275, %36 : vector<8x16xf32>
    %277 = arith.addf %273, %276 : vector<8x16xf32>
    %c73 = arith.constant 73 : index
    %278 = memref.load %arg2[%c73] : memref<288xf32, #tpu.memory_space<smem>>
    %279 = vector.broadcast %278 : f32 to vector<8x16xf32>
    %280 = arith.mulf %279, %38 : vector<8x16xf32>
    %281 = arith.addf %277, %280 : vector<8x16xf32>
    %c105 = arith.constant 105 : index
    %282 = memref.load %arg2[%c105] : memref<288xf32, #tpu.memory_space<smem>>
    %283 = vector.broadcast %282 : f32 to vector<8x16xf32>
    %284 = arith.mulf %283, %40 : vector<8x16xf32>
    %285 = arith.addf %281, %284 : vector<8x16xf32>
    %c137 = arith.constant 137 : index
    %286 = memref.load %arg2[%c137] : memref<288xf32, #tpu.memory_space<smem>>
    %287 = vector.broadcast %286 : f32 to vector<8x16xf32>
    %288 = arith.mulf %287, %42 : vector<8x16xf32>
    %289 = arith.addf %285, %288 : vector<8x16xf32>
    %c169 = arith.constant 169 : index
    %290 = memref.load %arg2[%c169] : memref<288xf32, #tpu.memory_space<smem>>
    %291 = vector.broadcast %290 : f32 to vector<8x16xf32>
    %292 = arith.mulf %291, %44 : vector<8x16xf32>
    %293 = arith.addf %289, %292 : vector<8x16xf32>
    %c201 = arith.constant 201 : index
    %294 = memref.load %arg2[%c201] : memref<288xf32, #tpu.memory_space<smem>>
    %295 = vector.broadcast %294 : f32 to vector<8x16xf32>
    %296 = arith.mulf %295, %46 : vector<8x16xf32>
    %297 = arith.addf %293, %296 : vector<8x16xf32>
    %c233 = arith.constant 233 : index
    %298 = memref.load %arg2[%c233] : memref<288xf32, #tpu.memory_space<smem>>
    %299 = vector.broadcast %298 : f32 to vector<8x16xf32>
    %300 = arith.mulf %299, %48 : vector<8x16xf32>
    %301 = arith.addf %297, %300 : vector<8x16xf32>
    %c265 = arith.constant 265 : index
    %302 = memref.load %arg2[%c265] : memref<288xf32, #tpu.memory_space<smem>>
    %303 = vector.broadcast %302 : f32 to vector<8x16xf32>
    %304 = arith.mulf %303, %50 : vector<8x16xf32>
    %305 = arith.addf %301, %304 : vector<8x16xf32>
    %c17 = arith.constant 17 : index
    %306 = memref.load %arg2[%c17] : memref<288xf32, #tpu.memory_space<smem>>
    %307 = vector.broadcast %306 : f32 to vector<8x16xf32>
    %308 = arith.mulf %307, %52 : vector<8x16xf32>
    %309 = arith.addf %305, %308 : vector<8x16xf32>
    %c49 = arith.constant 49 : index
    %310 = memref.load %arg2[%c49] : memref<288xf32, #tpu.memory_space<smem>>
    %311 = vector.broadcast %310 : f32 to vector<8x16xf32>
    %312 = arith.mulf %311, %54 : vector<8x16xf32>
    %313 = arith.addf %309, %312 : vector<8x16xf32>
    %c81 = arith.constant 81 : index
    %314 = memref.load %arg2[%c81] : memref<288xf32, #tpu.memory_space<smem>>
    %315 = vector.broadcast %314 : f32 to vector<8x16xf32>
    %316 = arith.mulf %315, %56 : vector<8x16xf32>
    %317 = arith.addf %313, %316 : vector<8x16xf32>
    %c113 = arith.constant 113 : index
    %318 = memref.load %arg2[%c113] : memref<288xf32, #tpu.memory_space<smem>>
    %319 = vector.broadcast %318 : f32 to vector<8x16xf32>
    %320 = arith.mulf %319, %58 : vector<8x16xf32>
    %321 = arith.addf %317, %320 : vector<8x16xf32>
    %c145 = arith.constant 145 : index
    %322 = memref.load %arg2[%c145] : memref<288xf32, #tpu.memory_space<smem>>
    %323 = vector.broadcast %322 : f32 to vector<8x16xf32>
    %324 = arith.mulf %323, %60 : vector<8x16xf32>
    %325 = arith.addf %321, %324 : vector<8x16xf32>
    %c177 = arith.constant 177 : index
    %326 = memref.load %arg2[%c177] : memref<288xf32, #tpu.memory_space<smem>>
    %327 = vector.broadcast %326 : f32 to vector<8x16xf32>
    %328 = arith.mulf %327, %62 : vector<8x16xf32>
    %329 = arith.addf %325, %328 : vector<8x16xf32>
    %c209 = arith.constant 209 : index
    %330 = memref.load %arg2[%c209] : memref<288xf32, #tpu.memory_space<smem>>
    %331 = vector.broadcast %330 : f32 to vector<8x16xf32>
    %332 = arith.mulf %331, %64 : vector<8x16xf32>
    %333 = arith.addf %329, %332 : vector<8x16xf32>
    %c241 = arith.constant 241 : index
    %334 = memref.load %arg2[%c241] : memref<288xf32, #tpu.memory_space<smem>>
    %335 = vector.broadcast %334 : f32 to vector<8x16xf32>
    %336 = arith.mulf %335, %66 : vector<8x16xf32>
    %337 = arith.addf %333, %336 : vector<8x16xf32>
    %c273 = arith.constant 273 : index
    %338 = memref.load %arg2[%c273] : memref<288xf32, #tpu.memory_space<smem>>
    %339 = vector.broadcast %338 : f32 to vector<8x16xf32>
    %340 = arith.mulf %339, %68 : vector<8x16xf32>
    %341 = arith.addf %337, %340 : vector<8x16xf32>
    %c25 = arith.constant 25 : index
    %342 = memref.load %arg2[%c25] : memref<288xf32, #tpu.memory_space<smem>>
    %343 = vector.broadcast %342 : f32 to vector<8x16xf32>
    %344 = arith.mulf %343, %70 : vector<8x16xf32>
    %345 = arith.addf %341, %344 : vector<8x16xf32>
    %c57 = arith.constant 57 : index
    %346 = memref.load %arg2[%c57] : memref<288xf32, #tpu.memory_space<smem>>
    %347 = vector.broadcast %346 : f32 to vector<8x16xf32>
    %348 = arith.mulf %347, %72 : vector<8x16xf32>
    %349 = arith.addf %345, %348 : vector<8x16xf32>
    %c89 = arith.constant 89 : index
    %350 = memref.load %arg2[%c89] : memref<288xf32, #tpu.memory_space<smem>>
    %351 = vector.broadcast %350 : f32 to vector<8x16xf32>
    %352 = arith.mulf %351, %74 : vector<8x16xf32>
    %353 = arith.addf %349, %352 : vector<8x16xf32>
    %c121 = arith.constant 121 : index
    %354 = memref.load %arg2[%c121] : memref<288xf32, #tpu.memory_space<smem>>
    %355 = vector.broadcast %354 : f32 to vector<8x16xf32>
    %356 = arith.mulf %355, %76 : vector<8x16xf32>
    %357 = arith.addf %353, %356 : vector<8x16xf32>
    %c153 = arith.constant 153 : index
    %358 = memref.load %arg2[%c153] : memref<288xf32, #tpu.memory_space<smem>>
    %359 = vector.broadcast %358 : f32 to vector<8x16xf32>
    %360 = arith.mulf %359, %78 : vector<8x16xf32>
    %361 = arith.addf %357, %360 : vector<8x16xf32>
    %c185 = arith.constant 185 : index
    %362 = memref.load %arg2[%c185] : memref<288xf32, #tpu.memory_space<smem>>
    %363 = vector.broadcast %362 : f32 to vector<8x16xf32>
    %364 = arith.mulf %363, %80 : vector<8x16xf32>
    %365 = arith.addf %361, %364 : vector<8x16xf32>
    %c217 = arith.constant 217 : index
    %366 = memref.load %arg2[%c217] : memref<288xf32, #tpu.memory_space<smem>>
    %367 = vector.broadcast %366 : f32 to vector<8x16xf32>
    %368 = arith.mulf %367, %82 : vector<8x16xf32>
    %369 = arith.addf %365, %368 : vector<8x16xf32>
    %c249 = arith.constant 249 : index
    %370 = memref.load %arg2[%c249] : memref<288xf32, #tpu.memory_space<smem>>
    %371 = vector.broadcast %370 : f32 to vector<8x16xf32>
    %372 = arith.mulf %371, %84 : vector<8x16xf32>
    %373 = arith.addf %369, %372 : vector<8x16xf32>
    %c281 = arith.constant 281 : index
    %374 = memref.load %arg2[%c281] : memref<288xf32, #tpu.memory_space<smem>>
    %375 = vector.broadcast %374 : f32 to vector<8x16xf32>
    %376 = arith.mulf %375, %86 : vector<8x16xf32>
    %377 = arith.addf %373, %376 : vector<8x16xf32>
    %cst_135 = arith.constant 0.000000e+00 : f32
    %378 = vector.broadcast %cst_135 : f32 to vector<8x16xf32>
    %379 = arith.maximumf %377, %378 : vector<8x16xf32>
    %c0_136 = arith.constant 0 : index
    %c1_137 = arith.constant 1 : index
    %c0_138 = arith.constant 0 : index
    %c0_139 = arith.constant 0 : index
    %380 = vector.load %arg6[%c0_136, %c1_137, %c0_138, %c0_139] : memref<1x8x8x16xf32, #tpu.memory_space<vmem>>, vector<1x1x8x16xf32>
    %381 = vector.shape_cast %380 : vector<1x1x8x16xf32> to vector<8x16xf32>
    %382 = vector.shape_cast %379 : vector<8x16xf32> to vector<1x1x8x16xf32>
    tpu.vector_store %arg6[%c0_136, %c1_137, %c0_138, %c0_139], %382 {strides = array<i32>} : memref<1x8x8x16xf32, #tpu.memory_space<vmem>>, vector<1x1x8x16xf32>,
    %c2_140 = arith.constant 2 : index
    %383 = memref.load %arg2[%c2_140] : memref<288xf32, #tpu.memory_space<smem>>
    %384 = vector.broadcast %383 : f32 to vector<8x16xf32>
    %385 = arith.mulf %384, %16 : vector<8x16xf32>
    %c34 = arith.constant 34 : index
    %386 = memref.load %arg2[%c34] : memref<288xf32, #tpu.memory_space<smem>>
    %387 = vector.broadcast %386 : f32 to vector<8x16xf32>
    %388 = arith.mulf %387, %18 : vector<8x16xf32>
    %389 = arith.addf %385, %388 : vector<8x16xf32>
    %c66 = arith.constant 66 : index
    %390 = memref.load %arg2[%c66] : memref<288xf32, #tpu.memory_space<smem>>
    %391 = vector.broadcast %390 : f32 to vector<8x16xf32>
    %392 = arith.mulf %391, %20 : vector<8x16xf32>
    %393 = arith.addf %389, %392 : vector<8x16xf32>
    %c98 = arith.constant 98 : index
    %394 = memref.load %arg2[%c98] : memref<288xf32, #tpu.memory_space<smem>>
    %395 = vector.broadcast %394 : f32 to vector<8x16xf32>
    %396 = arith.mulf %395, %22 : vector<8x16xf32>
    %397 = arith.addf %393, %396 : vector<8x16xf32>
    %c130 = arith.constant 130 : index
    %398 = memref.load %arg2[%c130] : memref<288xf32, #tpu.memory_space<smem>>
    %399 = vector.broadcast %398 : f32 to vector<8x16xf32>
    %400 = arith.mulf %399, %24 : vector<8x16xf32>
    %401 = arith.addf %397, %400 : vector<8x16xf32>
    %c162 = arith.constant 162 : index
    %402 = memref.load %arg2[%c162] : memref<288xf32, #tpu.memory_space<smem>>
    %403 = vector.broadcast %402 : f32 to vector<8x16xf32>
    %404 = arith.mulf %403, %26 : vector<8x16xf32>
    %405 = arith.addf %401, %404 : vector<8x16xf32>
    %c194 = arith.constant 194 : index
    %406 = memref.load %arg2[%c194] : memref<288xf32, #tpu.memory_space<smem>>
    %407 = vector.broadcast %406 : f32 to vector<8x16xf32>
    %408 = arith.mulf %407, %28 : vector<8x16xf32>
    %409 = arith.addf %405, %408 : vector<8x16xf32>
    %c226 = arith.constant 226 : index
    %410 = memref.load %arg2[%c226] : memref<288xf32, #tpu.memory_space<smem>>
    %411 = vector.broadcast %410 : f32 to vector<8x16xf32>
    %412 = arith.mulf %411, %30 : vector<8x16xf32>
    %413 = arith.addf %409, %412 : vector<8x16xf32>
    %c258 = arith.constant 258 : index
    %414 = memref.load %arg2[%c258] : memref<288xf32, #tpu.memory_space<smem>>
    %415 = vector.broadcast %414 : f32 to vector<8x16xf32>
    %416 = arith.mulf %415, %32 : vector<8x16xf32>
    %417 = arith.addf %413, %416 : vector<8x16xf32>
    %c10 = arith.constant 10 : index
    %418 = memref.load %arg2[%c10] : memref<288xf32, #tpu.memory_space<smem>>
    %419 = vector.broadcast %418 : f32 to vector<8x16xf32>
    %420 = arith.mulf %419, %34 : vector<8x16xf32>
    %421 = arith.addf %417, %420 : vector<8x16xf32>
    %c42 = arith.constant 42 : index
    %422 = memref.load %arg2[%c42] : memref<288xf32, #tpu.memory_space<smem>>
    %423 = vector.broadcast %422 : f32 to vector<8x16xf32>
    %424 = arith.mulf %423, %36 : vector<8x16xf32>
    %425 = arith.addf %421, %424 : vector<8x16xf32>
    %c74 = arith.constant 74 : index
    %426 = memref.load %arg2[%c74] : memref<288xf32, #tpu.memory_space<smem>>
    %427 = vector.broadcast %426 : f32 to vector<8x16xf32>
    %428 = arith.mulf %427, %38 : vector<8x16xf32>
    %429 = arith.addf %425, %428 : vector<8x16xf32>
    %c106 = arith.constant 106 : index
    %430 = memref.load %arg2[%c106] : memref<288xf32, #tpu.memory_space<smem>>
    %431 = vector.broadcast %430 : f32 to vector<8x16xf32>
    %432 = arith.mulf %431, %40 : vector<8x16xf32>
    %433 = arith.addf %429, %432 : vector<8x16xf32>
    %c138 = arith.constant 138 : index
    %434 = memref.load %arg2[%c138] : memref<288xf32, #tpu.memory_space<smem>>
    %435 = vector.broadcast %434 : f32 to vector<8x16xf32>
    %436 = arith.mulf %435, %42 : vector<8x16xf32>
    %437 = arith.addf %433, %436 : vector<8x16xf32>
    %c170 = arith.constant 170 : index
    %438 = memref.load %arg2[%c170] : memref<288xf32, #tpu.memory_space<smem>>
    %439 = vector.broadcast %438 : f32 to vector<8x16xf32>
    %440 = arith.mulf %439, %44 : vector<8x16xf32>
    %441 = arith.addf %437, %440 : vector<8x16xf32>
    %c202 = arith.constant 202 : index
    %442 = memref.load %arg2[%c202] : memref<288xf32, #tpu.memory_space<smem>>
    %443 = vector.broadcast %442 : f32 to vector<8x16xf32>
    %444 = arith.mulf %443, %46 : vector<8x16xf32>
    %445 = arith.addf %441, %444 : vector<8x16xf32>
    %c234 = arith.constant 234 : index
    %446 = memref.load %arg2[%c234] : memref<288xf32, #tpu.memory_space<smem>>
    %447 = vector.broadcast %446 : f32 to vector<8x16xf32>
    %448 = arith.mulf %447, %48 : vector<8x16xf32>
    %449 = arith.addf %445, %448 : vector<8x16xf32>
    %c266 = arith.constant 266 : index
    %450 = memref.load %arg2[%c266] : memref<288xf32, #tpu.memory_space<smem>>
    %451 = vector.broadcast %450 : f32 to vector<8x16xf32>
    %452 = arith.mulf %451, %50 : vector<8x16xf32>
    %453 = arith.addf %449, %452 : vector<8x16xf32>
    %c18 = arith.constant 18 : index
    %454 = memref.load %arg2[%c18] : memref<288xf32, #tpu.memory_space<smem>>
    %455 = vector.broadcast %454 : f32 to vector<8x16xf32>
    %456 = arith.mulf %455, %52 : vector<8x16xf32>
    %457 = arith.addf %453, %456 : vector<8x16xf32>
    %c50 = arith.constant 50 : index
    %458 = memref.load %arg2[%c50] : memref<288xf32, #tpu.memory_space<smem>>
    %459 = vector.broadcast %458 : f32 to vector<8x16xf32>
    %460 = arith.mulf %459, %54 : vector<8x16xf32>
    %461 = arith.addf %457, %460 : vector<8x16xf32>
    %c82 = arith.constant 82 : index
    %462 = memref.load %arg2[%c82] : memref<288xf32, #tpu.memory_space<smem>>
    %463 = vector.broadcast %462 : f32 to vector<8x16xf32>
    %464 = arith.mulf %463, %56 : vector<8x16xf32>
    %465 = arith.addf %461, %464 : vector<8x16xf32>
    %c114 = arith.constant 114 : index
    %466 = memref.load %arg2[%c114] : memref<288xf32, #tpu.memory_space<smem>>
    %467 = vector.broadcast %466 : f32 to vector<8x16xf32>
    %468 = arith.mulf %467, %58 : vector<8x16xf32>
    %469 = arith.addf %465, %468 : vector<8x16xf32>
    %c146 = arith.constant 146 : index
    %470 = memref.load %arg2[%c146] : memref<288xf32, #tpu.memory_space<smem>>
    %471 = vector.broadcast %470 : f32 to vector<8x16xf32>
    %472 = arith.mulf %471, %60 : vector<8x16xf32>
    %473 = arith.addf %469, %472 : vector<8x16xf32>
    %c178 = arith.constant 178 : index
    %474 = memref.load %arg2[%c178] : memref<288xf32, #tpu.memory_space<smem>>
    %475 = vector.broadcast %474 : f32 to vector<8x16xf32>
    %476 = arith.mulf %475, %62 : vector<8x16xf32>
    %477 = arith.addf %473, %476 : vector<8x16xf32>
    %c210 = arith.constant 210 : index
    %478 = memref.load %arg2[%c210] : memref<288xf32, #tpu.memory_space<smem>>
    %479 = vector.broadcast %478 : f32 to vector<8x16xf32>
    %480 = arith.mulf %479, %64 : vector<8x16xf32>
    %481 = arith.addf %477, %480 : vector<8x16xf32>
    %c242 = arith.constant 242 : index
    %482 = memref.load %arg2[%c242] : memref<288xf32, #tpu.memory_space<smem>>
    %483 = vector.broadcast %482 : f32 to vector<8x16xf32>
    %484 = arith.mulf %483, %66 : vector<8x16xf32>
    %485 = arith.addf %481, %484 : vector<8x16xf32>
    %c274 = arith.constant 274 : index
    %486 = memref.load %arg2[%c274] : memref<288xf32, #tpu.memory_space<smem>>
    %487 = vector.broadcast %486 : f32 to vector<8x16xf32>
    %488 = arith.mulf %487, %68 : vector<8x16xf32>
    %489 = arith.addf %485, %488 : vector<8x16xf32>
    %c26 = arith.constant 26 : index
    %490 = memref.load %arg2[%c26] : memref<288xf32, #tpu.memory_space<smem>>
    %491 = vector.broadcast %490 : f32 to vector<8x16xf32>
    %492 = arith.mulf %491, %70 : vector<8x16xf32>
    %493 = arith.addf %489, %492 : vector<8x16xf32>
    %c58 = arith.constant 58 : index
    %494 = memref.load %arg2[%c58] : memref<288xf32, #tpu.memory_space<smem>>
    %495 = vector.broadcast %494 : f32 to vector<8x16xf32>
    %496 = arith.mulf %495, %72 : vector<8x16xf32>
    %497 = arith.addf %493, %496 : vector<8x16xf32>
    %c90 = arith.constant 90 : index
    %498 = memref.load %arg2[%c90] : memref<288xf32, #tpu.memory_space<smem>>
    %499 = vector.broadcast %498 : f32 to vector<8x16xf32>
    %500 = arith.mulf %499, %74 : vector<8x16xf32>
    %501 = arith.addf %497, %500 : vector<8x16xf32>
    %c122 = arith.constant 122 : index
    %502 = memref.load %arg2[%c122] : memref<288xf32, #tpu.memory_space<smem>>
    %503 = vector.broadcast %502 : f32 to vector<8x16xf32>
    %504 = arith.mulf %503, %76 : vector<8x16xf32>
    %505 = arith.addf %501, %504 : vector<8x16xf32>
    %c154 = arith.constant 154 : index
    %506 = memref.load %arg2[%c154] : memref<288xf32, #tpu.memory_space<smem>>
    %507 = vector.broadcast %506 : f32 to vector<8x16xf32>
    %508 = arith.mulf %507, %78 : vector<8x16xf32>
    %509 = arith.addf %505, %508 : vector<8x16xf32>
    %c186 = arith.constant 186 : index
    %510 = memref.load %arg2[%c186] : memref<288xf32, #tpu.memory_space<smem>>
    %511 = vector.broadcast %510 : f32 to vector<8x16xf32>
    %512 = arith.mulf %511, %80 : vector<8x16xf32>
    %513 = arith.addf %509, %512 : vector<8x16xf32>
    %c218 = arith.constant 218 : index
    %514 = memref.load %arg2[%c218] : memref<288xf32, #tpu.memory_space<smem>>
    %515 = vector.broadcast %514 : f32 to vector<8x16xf32>
    %516 = arith.mulf %515, %82 : vector<8x16xf32>
    %517 = arith.addf %513, %516 : vector<8x16xf32>
    %c250 = arith.constant 250 : index
    %518 = memref.load %arg2[%c250] : memref<288xf32, #tpu.memory_space<smem>>
    %519 = vector.broadcast %518 : f32 to vector<8x16xf32>
    %520 = arith.mulf %519, %84 : vector<8x16xf32>
    %521 = arith.addf %517, %520 : vector<8x16xf32>
    %c282 = arith.constant 282 : index
    %522 = memref.load %arg2[%c282] : memref<288xf32, #tpu.memory_space<smem>>
    %523 = vector.broadcast %522 : f32 to vector<8x16xf32>
    %524 = arith.mulf %523, %86 : vector<8x16xf32>
    %525 = arith.addf %521, %524 : vector<8x16xf32>
    %cst_141 = arith.constant 0.000000e+00 : f32
    %526 = vector.broadcast %cst_141 : f32 to vector<8x16xf32>
    %527 = arith.maximumf %525, %526 : vector<8x16xf32>
    %c0_142 = arith.constant 0 : index
    %c2_143 = arith.constant 2 : index
    %c0_144 = arith.constant 0 : index
    %c0_145 = arith.constant 0 : index
    %528 = vector.load %arg6[%c0_142, %c2_143, %c0_144, %c0_145] : memref<1x8x8x16xf32, #tpu.memory_space<vmem>>, vector<1x1x8x16xf32>
    %529 = vector.shape_cast %528 : vector<1x1x8x16xf32> to vector<8x16xf32>
    %530 = vector.shape_cast %527 : vector<8x16xf32> to vector<1x1x8x16xf32>
    tpu.vector_store %arg6[%c0_142, %c2_143, %c0_144, %c0_145], %530 {strides = array<i32>} : memref<1x8x8x16xf32, #tpu.memory_space<vmem>>, vector<1x1x8x16xf32>,
    %c3_146 = arith.constant 3 : index
    %531 = memref.load %arg2[%c3_146] : memref<288xf32, #tpu.memory_space<smem>>
    %532 = vector.broadcast %531 : f32 to vector<8x16xf32>
    %533 = arith.mulf %532, %16 : vector<8x16xf32>
    %c35 = arith.constant 35 : index
    %534 = memref.load %arg2[%c35] : memref<288xf32, #tpu.memory_space<smem>>
    %535 = vector.broadcast %534 : f32 to vector<8x16xf32>
    %536 = arith.mulf %535, %18 : vector<8x16xf32>
    %537 = arith.addf %533, %536 : vector<8x16xf32>
    %c67 = arith.constant 67 : index
    %538 = memref.load %arg2[%c67] : memref<288xf32, #tpu.memory_space<smem>>
    %539 = vector.broadcast %538 : f32 to vector<8x16xf32>
    %540 = arith.mulf %539, %20 : vector<8x16xf32>
    %541 = arith.addf %537, %540 : vector<8x16xf32>
    %c99 = arith.constant 99 : index
    %542 = memref.load %arg2[%c99] : memref<288xf32, #tpu.memory_space<smem>>
    %543 = vector.broadcast %542 : f32 to vector<8x16xf32>
    %544 = arith.mulf %543, %22 : vector<8x16xf32>
    %545 = arith.addf %541, %544 : vector<8x16xf32>
    %c131 = arith.constant 131 : index
    %546 = memref.load %arg2[%c131] : memref<288xf32, #tpu.memory_space<smem>>
    %547 = vector.broadcast %546 : f32 to vector<8x16xf32>
    %548 = arith.mulf %547, %24 : vector<8x16xf32>
    %549 = arith.addf %545, %548 : vector<8x16xf32>
    %c163 = arith.constant 163 : index
    %550 = memref.load %arg2[%c163] : memref<288xf32, #tpu.memory_space<smem>>
    %551 = vector.broadcast %550 : f32 to vector<8x16xf32>
    %552 = arith.mulf %551, %26 : vector<8x16xf32>
    %553 = arith.addf %549, %552 : vector<8x16xf32>
    %c195 = arith.constant 195 : index
    %554 = memref.load %arg2[%c195] : memref<288xf32, #tpu.memory_space<smem>>
    %555 = vector.broadcast %554 : f32 to vector<8x16xf32>
    %556 = arith.mulf %555, %28 : vector<8x16xf32>
    %557 = arith.addf %553, %556 : vector<8x16xf32>
    %c227 = arith.constant 227 : index
    %558 = memref.load %arg2[%c227] : memref<288xf32, #tpu.memory_space<smem>>
    %559 = vector.broadcast %558 : f32 to vector<8x16xf32>
    %560 = arith.mulf %559, %30 : vector<8x16xf32>
    %561 = arith.addf %557, %560 : vector<8x16xf32>
    %c259 = arith.constant 259 : index
    %562 = memref.load %arg2[%c259] : memref<288xf32, #tpu.memory_space<smem>>
    %563 = vector.broadcast %562 : f32 to vector<8x16xf32>
    %564 = arith.mulf %563, %32 : vector<8x16xf32>
    %565 = arith.addf %561, %564 : vector<8x16xf32>
    %c11 = arith.constant 11 : index
    %566 = memref.load %arg2[%c11] : memref<288xf32, #tpu.memory_space<smem>>
    %567 = vector.broadcast %566 : f32 to vector<8x16xf32>
    %568 = arith.mulf %567, %34 : vector<8x16xf32>
    %569 = arith.addf %565, %568 : vector<8x16xf32>
    %c43 = arith.constant 43 : index
    %570 = memref.load %arg2[%c43] : memref<288xf32, #tpu.memory_space<smem>>
    %571 = vector.broadcast %570 : f32 to vector<8x16xf32>
    %572 = arith.mulf %571, %36 : vector<8x16xf32>
    %573 = arith.addf %569, %572 : vector<8x16xf32>
    %c75 = arith.constant 75 : index
    %574 = memref.load %arg2[%c75] : memref<288xf32, #tpu.memory_space<smem>>
    %575 = vector.broadcast %574 : f32 to vector<8x16xf32>
    %576 = arith.mulf %575, %38 : vector<8x16xf32>
    %577 = arith.addf %573, %576 : vector<8x16xf32>
    %c107 = arith.constant 107 : index
    %578 = memref.load %arg2[%c107] : memref<288xf32, #tpu.memory_space<smem>>
    %579 = vector.broadcast %578 : f32 to vector<8x16xf32>
    %580 = arith.mulf %579, %40 : vector<8x16xf32>
    %581 = arith.addf %577, %580 : vector<8x16xf32>
    %c139 = arith.constant 139 : index
    %582 = memref.load %arg2[%c139] : memref<288xf32, #tpu.memory_space<smem>>
    %583 = vector.broadcast %582 : f32 to vector<8x16xf32>
    %584 = arith.mulf %583, %42 : vector<8x16xf32>
    %585 = arith.addf %581, %584 : vector<8x16xf32>
    %c171 = arith.constant 171 : index
    %586 = memref.load %arg2[%c171] : memref<288xf32, #tpu.memory_space<smem>>
    %587 = vector.broadcast %586 : f32 to vector<8x16xf32>
    %588 = arith.mulf %587, %44 : vector<8x16xf32>
    %589 = arith.addf %585, %588 : vector<8x16xf32>
    %c203 = arith.constant 203 : index
    %590 = memref.load %arg2[%c203] : memref<288xf32, #tpu.memory_space<smem>>
    %591 = vector.broadcast %590 : f32 to vector<8x16xf32>
    %592 = arith.mulf %591, %46 : vector<8x16xf32>
    %593 = arith.addf %589, %592 : vector<8x16xf32>
    %c235 = arith.constant 235 : index
    %594 = memref.load %arg2[%c235] : memref<288xf32, #tpu.memory_space<smem>>
    %595 = vector.broadcast %594 : f32 to vector<8x16xf32>
    %596 = arith.mulf %595, %48 : vector<8x16xf32>
    %597 = arith.addf %593, %596 : vector<8x16xf32>
    %c267 = arith.constant 267 : index
    %598 = memref.load %arg2[%c267] : memref<288xf32, #tpu.memory_space<smem>>
    %599 = vector.broadcast %598 : f32 to vector<8x16xf32>
    %600 = arith.mulf %599, %50 : vector<8x16xf32>
    %601 = arith.addf %597, %600 : vector<8x16xf32>
    %c19 = arith.constant 19 : index
    %602 = memref.load %arg2[%c19] : memref<288xf32, #tpu.memory_space<smem>>
    %603 = vector.broadcast %602 : f32 to vector<8x16xf32>
    %604 = arith.mulf %603, %52 : vector<8x16xf32>
    %605 = arith.addf %601, %604 : vector<8x16xf32>
    %c51 = arith.constant 51 : index
    %606 = memref.load %arg2[%c51] : memref<288xf32, #tpu.memory_space<smem>>
    %607 = vector.broadcast %606 : f32 to vector<8x16xf32>
    %608 = arith.mulf %607, %54 : vector<8x16xf32>
    %609 = arith.addf %605, %608 : vector<8x16xf32>
    %c83 = arith.constant 83 : index
    %610 = memref.load %arg2[%c83] : memref<288xf32, #tpu.memory_space<smem>>
    %611 = vector.broadcast %610 : f32 to vector<8x16xf32>
    %612 = arith.mulf %611, %56 : vector<8x16xf32>
    %613 = arith.addf %609, %612 : vector<8x16xf32>
    %c115 = arith.constant 115 : index
    %614 = memref.load %arg2[%c115] : memref<288xf32, #tpu.memory_space<smem>>
    %615 = vector.broadcast %614 : f32 to vector<8x16xf32>
    %616 = arith.mulf %615, %58 : vector<8x16xf32>
    %617 = arith.addf %613, %616 : vector<8x16xf32>
    %c147 = arith.constant 147 : index
    %618 = memref.load %arg2[%c147] : memref<288xf32, #tpu.memory_space<smem>>
    %619 = vector.broadcast %618 : f32 to vector<8x16xf32>
    %620 = arith.mulf %619, %60 : vector<8x16xf32>
    %621 = arith.addf %617, %620 : vector<8x16xf32>
    %c179 = arith.constant 179 : index
    %622 = memref.load %arg2[%c179] : memref<288xf32, #tpu.memory_space<smem>>
    %623 = vector.broadcast %622 : f32 to vector<8x16xf32>
    %624 = arith.mulf %623, %62 : vector<8x16xf32>
    %625 = arith.addf %621, %624 : vector<8x16xf32>
    %c211 = arith.constant 211 : index
    %626 = memref.load %arg2[%c211] : memref<288xf32, #tpu.memory_space<smem>>
    %627 = vector.broadcast %626 : f32 to vector<8x16xf32>
    %628 = arith.mulf %627, %64 : vector<8x16xf32>
    %629 = arith.addf %625, %628 : vector<8x16xf32>
    %c243 = arith.constant 243 : index
    %630 = memref.load %arg2[%c243] : memref<288xf32, #tpu.memory_space<smem>>
    %631 = vector.broadcast %630 : f32 to vector<8x16xf32>
    %632 = arith.mulf %631, %66 : vector<8x16xf32>
    %633 = arith.addf %629, %632 : vector<8x16xf32>
    %c275 = arith.constant 275 : index
    %634 = memref.load %arg2[%c275] : memref<288xf32, #tpu.memory_space<smem>>
    %635 = vector.broadcast %634 : f32 to vector<8x16xf32>
    %636 = arith.mulf %635, %68 : vector<8x16xf32>
    %637 = arith.addf %633, %636 : vector<8x16xf32>
    %c27 = arith.constant 27 : index
    %638 = memref.load %arg2[%c27] : memref<288xf32, #tpu.memory_space<smem>>
    %639 = vector.broadcast %638 : f32 to vector<8x16xf32>
    %640 = arith.mulf %639, %70 : vector<8x16xf32>
    %641 = arith.addf %637, %640 : vector<8x16xf32>
    %c59 = arith.constant 59 : index
    %642 = memref.load %arg2[%c59] : memref<288xf32, #tpu.memory_space<smem>>
    %643 = vector.broadcast %642 : f32 to vector<8x16xf32>
    %644 = arith.mulf %643, %72 : vector<8x16xf32>
    %645 = arith.addf %641, %644 : vector<8x16xf32>
    %c91 = arith.constant 91 : index
    %646 = memref.load %arg2[%c91] : memref<288xf32, #tpu.memory_space<smem>>
    %647 = vector.broadcast %646 : f32 to vector<8x16xf32>
    %648 = arith.mulf %647, %74 : vector<8x16xf32>
    %649 = arith.addf %645, %648 : vector<8x16xf32>
    %c123 = arith.constant 123 : index
    %650 = memref.load %arg2[%c123] : memref<288xf32, #tpu.memory_space<smem>>
    %651 = vector.broadcast %650 : f32 to vector<8x16xf32>
    %652 = arith.mulf %651, %76 : vector<8x16xf32>
    %653 = arith.addf %649, %652 : vector<8x16xf32>
    %c155 = arith.constant 155 : index
    %654 = memref.load %arg2[%c155] : memref<288xf32, #tpu.memory_space<smem>>
    %655 = vector.broadcast %654 : f32 to vector<8x16xf32>
    %656 = arith.mulf %655, %78 : vector<8x16xf32>
    %657 = arith.addf %653, %656 : vector<8x16xf32>
    %c187 = arith.constant 187 : index
    %658 = memref.load %arg2[%c187] : memref<288xf32, #tpu.memory_space<smem>>
    %659 = vector.broadcast %658 : f32 to vector<8x16xf32>
    %660 = arith.mulf %659, %80 : vector<8x16xf32>
    %661 = arith.addf %657, %660 : vector<8x16xf32>
    %c219 = arith.constant 219 : index
    %662 = memref.load %arg2[%c219] : memref<288xf32, #tpu.memory_space<smem>>
    %663 = vector.broadcast %662 : f32 to vector<8x16xf32>
    %664 = arith.mulf %663, %82 : vector<8x16xf32>
    %665 = arith.addf %661, %664 : vector<8x16xf32>
    %c251 = arith.constant 251 : index
    %666 = memref.load %arg2[%c251] : memref<288xf32, #tpu.memory_space<smem>>
    %667 = vector.broadcast %666 : f32 to vector<8x16xf32>
    %668 = arith.mulf %667, %84 : vector<8x16xf32>
    %669 = arith.addf %665, %668 : vector<8x16xf32>
    %c283 = arith.constant 283 : index
    %670 = memref.load %arg2[%c283] : memref<288xf32, #tpu.memory_space<smem>>
    %671 = vector.broadcast %670 : f32 to vector<8x16xf32>
    %672 = arith.mulf %671, %86 : vector<8x16xf32>
    %673 = arith.addf %669, %672 : vector<8x16xf32>
    %cst_147 = arith.constant 0.000000e+00 : f32
    %674 = vector.broadcast %cst_147 : f32 to vector<8x16xf32>
    %675 = arith.maximumf %673, %674 : vector<8x16xf32>
    %c0_148 = arith.constant 0 : index
    %c3_149 = arith.constant 3 : index
    %c0_150 = arith.constant 0 : index
    %c0_151 = arith.constant 0 : index
    %676 = vector.load %arg6[%c0_148, %c3_149, %c0_150, %c0_151] : memref<1x8x8x16xf32, #tpu.memory_space<vmem>>, vector<1x1x8x16xf32>
    %677 = vector.shape_cast %676 : vector<1x1x8x16xf32> to vector<8x16xf32>
    %678 = vector.shape_cast %675 : vector<8x16xf32> to vector<1x1x8x16xf32>
    tpu.vector_store %arg6[%c0_148, %c3_149, %c0_150, %c0_151], %678 {strides = array<i32>} : memref<1x8x8x16xf32, #tpu.memory_space<vmem>>, vector<1x1x8x16xf32>,
    %c4 = arith.constant 4 : index
    %679 = memref.load %arg2[%c4] : memref<288xf32, #tpu.memory_space<smem>>
    %680 = vector.broadcast %679 : f32 to vector<8x16xf32>
    %681 = arith.mulf %680, %16 : vector<8x16xf32>
    %c36 = arith.constant 36 : index
    %682 = memref.load %arg2[%c36] : memref<288xf32, #tpu.memory_space<smem>>
    %683 = vector.broadcast %682 : f32 to vector<8x16xf32>
    %684 = arith.mulf %683, %18 : vector<8x16xf32>
    %685 = arith.addf %681, %684 : vector<8x16xf32>
    %c68 = arith.constant 68 : index
    %686 = memref.load %arg2[%c68] : memref<288xf32, #tpu.memory_space<smem>>
    %687 = vector.broadcast %686 : f32 to vector<8x16xf32>
    %688 = arith.mulf %687, %20 : vector<8x16xf32>
    %689 = arith.addf %685, %688 : vector<8x16xf32>
    %c100 = arith.constant 100 : index
    %690 = memref.load %arg2[%c100] : memref<288xf32, #tpu.memory_space<smem>>
    %691 = vector.broadcast %690 : f32 to vector<8x16xf32>
    %692 = arith.mulf %691, %22 : vector<8x16xf32>
    %693 = arith.addf %689, %692 : vector<8x16xf32>
    %c132 = arith.constant 132 : index
    %694 = memref.load %arg2[%c132] : memref<288xf32, #tpu.memory_space<smem>>
    %695 = vector.broadcast %694 : f32 to vector<8x16xf32>
    %696 = arith.mulf %695, %24 : vector<8x16xf32>
    %697 = arith.addf %693, %696 : vector<8x16xf32>
    %c164 = arith.constant 164 : index
    %698 = memref.load %arg2[%c164] : memref<288xf32, #tpu.memory_space<smem>>
    %699 = vector.broadcast %698 : f32 to vector<8x16xf32>
    %700 = arith.mulf %699, %26 : vector<8x16xf32>
    %701 = arith.addf %697, %700 : vector<8x16xf32>
    %c196 = arith.constant 196 : index
    %702 = memref.load %arg2[%c196] : memref<288xf32, #tpu.memory_space<smem>>
    %703 = vector.broadcast %702 : f32 to vector<8x16xf32>
    %704 = arith.mulf %703, %28 : vector<8x16xf32>
    %705 = arith.addf %701, %704 : vector<8x16xf32>
    %c228 = arith.constant 228 : index
    %706 = memref.load %arg2[%c228] : memref<288xf32, #tpu.memory_space<smem>>
    %707 = vector.broadcast %706 : f32 to vector<8x16xf32>
    %708 = arith.mulf %707, %30 : vector<8x16xf32>
    %709 = arith.addf %705, %708 : vector<8x16xf32>
    %c260 = arith.constant 260 : index
    %710 = memref.load %arg2[%c260] : memref<288xf32, #tpu.memory_space<smem>>
    %711 = vector.broadcast %710 : f32 to vector<8x16xf32>
    %712 = arith.mulf %711, %32 : vector<8x16xf32>
    %713 = arith.addf %709, %712 : vector<8x16xf32>
    %c12 = arith.constant 12 : index
    %714 = memref.load %arg2[%c12] : memref<288xf32, #tpu.memory_space<smem>>
    %715 = vector.broadcast %714 : f32 to vector<8x16xf32>
    %716 = arith.mulf %715, %34 : vector<8x16xf32>
    %717 = arith.addf %713, %716 : vector<8x16xf32>
    %c44 = arith.constant 44 : index
    %718 = memref.load %arg2[%c44] : memref<288xf32, #tpu.memory_space<smem>>
    %719 = vector.broadcast %718 : f32 to vector<8x16xf32>
    %720 = arith.mulf %719, %36 : vector<8x16xf32>
    %721 = arith.addf %717, %720 : vector<8x16xf32>
    %c76 = arith.constant 76 : index
    %722 = memref.load %arg2[%c76] : memref<288xf32, #tpu.memory_space<smem>>
    %723 = vector.broadcast %722 : f32 to vector<8x16xf32>
    %724 = arith.mulf %723, %38 : vector<8x16xf32>
    %725 = arith.addf %721, %724 : vector<8x16xf32>
    %c108 = arith.constant 108 : index
    %726 = memref.load %arg2[%c108] : memref<288xf32, #tpu.memory_space<smem>>
    %727 = vector.broadcast %726 : f32 to vector<8x16xf32>
    %728 = arith.mulf %727, %40 : vector<8x16xf32>
    %729 = arith.addf %725, %728 : vector<8x16xf32>
    %c140 = arith.constant 140 : index
    %730 = memref.load %arg2[%c140] : memref<288xf32, #tpu.memory_space<smem>>
    %731 = vector.broadcast %730 : f32 to vector<8x16xf32>
    %732 = arith.mulf %731, %42 : vector<8x16xf32>
    %733 = arith.addf %729, %732 : vector<8x16xf32>
    %c172 = arith.constant 172 : index
    %734 = memref.load %arg2[%c172] : memref<288xf32, #tpu.memory_space<smem>>
    %735 = vector.broadcast %734 : f32 to vector<8x16xf32>
    %736 = arith.mulf %735, %44 : vector<8x16xf32>
    %737 = arith.addf %733, %736 : vector<8x16xf32>
    %c204 = arith.constant 204 : index
    %738 = memref.load %arg2[%c204] : memref<288xf32, #tpu.memory_space<smem>>
    %739 = vector.broadcast %738 : f32 to vector<8x16xf32>
    %740 = arith.mulf %739, %46 : vector<8x16xf32>
    %741 = arith.addf %737, %740 : vector<8x16xf32>
    %c236 = arith.constant 236 : index
    %742 = memref.load %arg2[%c236] : memref<288xf32, #tpu.memory_space<smem>>
    %743 = vector.broadcast %742 : f32 to vector<8x16xf32>
    %744 = arith.mulf %743, %48 : vector<8x16xf32>
    %745 = arith.addf %741, %744 : vector<8x16xf32>
    %c268 = arith.constant 268 : index
    %746 = memref.load %arg2[%c268] : memref<288xf32, #tpu.memory_space<smem>>
    %747 = vector.broadcast %746 : f32 to vector<8x16xf32>
    %748 = arith.mulf %747, %50 : vector<8x16xf32>
    %749 = arith.addf %745, %748 : vector<8x16xf32>
    %c20 = arith.constant 20 : index
    %750 = memref.load %arg2[%c20] : memref<288xf32, #tpu.memory_space<smem>>
    %751 = vector.broadcast %750 : f32 to vector<8x16xf32>
    %752 = arith.mulf %751, %52 : vector<8x16xf32>
    %753 = arith.addf %749, %752 : vector<8x16xf32>
    %c52 = arith.constant 52 : index
    %754 = memref.load %arg2[%c52] : memref<288xf32, #tpu.memory_space<smem>>
    %755 = vector.broadcast %754 : f32 to vector<8x16xf32>
    %756 = arith.mulf %755, %54 : vector<8x16xf32>
    %757 = arith.addf %753, %756 : vector<8x16xf32>
    %c84 = arith.constant 84 : index
    %758 = memref.load %arg2[%c84] : memref<288xf32, #tpu.memory_space<smem>>
    %759 = vector.broadcast %758 : f32 to vector<8x16xf32>
    %760 = arith.mulf %759, %56 : vector<8x16xf32>
    %761 = arith.addf %757, %760 : vector<8x16xf32>
    %c116 = arith.constant 116 : index
    %762 = memref.load %arg2[%c116] : memref<288xf32, #tpu.memory_space<smem>>
    %763 = vector.broadcast %762 : f32 to vector<8x16xf32>
    %764 = arith.mulf %763, %58 : vector<8x16xf32>
    %765 = arith.addf %761, %764 : vector<8x16xf32>
    %c148 = arith.constant 148 : index
    %766 = memref.load %arg2[%c148] : memref<288xf32, #tpu.memory_space<smem>>
    %767 = vector.broadcast %766 : f32 to vector<8x16xf32>
    %768 = arith.mulf %767, %60 : vector<8x16xf32>
    %769 = arith.addf %765, %768 : vector<8x16xf32>
    %c180 = arith.constant 180 : index
    %770 = memref.load %arg2[%c180] : memref<288xf32, #tpu.memory_space<smem>>
    %771 = vector.broadcast %770 : f32 to vector<8x16xf32>
    %772 = arith.mulf %771, %62 : vector<8x16xf32>
    %773 = arith.addf %769, %772 : vector<8x16xf32>
    %c212 = arith.constant 212 : index
    %774 = memref.load %arg2[%c212] : memref<288xf32, #tpu.memory_space<smem>>
    %775 = vector.broadcast %774 : f32 to vector<8x16xf32>
    %776 = arith.mulf %775, %64 : vector<8x16xf32>
    %777 = arith.addf %773, %776 : vector<8x16xf32>
    %c244 = arith.constant 244 : index
    %778 = memref.load %arg2[%c244] : memref<288xf32, #tpu.memory_space<smem>>
    %779 = vector.broadcast %778 : f32 to vector<8x16xf32>
    %780 = arith.mulf %779, %66 : vector<8x16xf32>
    %781 = arith.addf %777, %780 : vector<8x16xf32>
    %c276 = arith.constant 276 : index
    %782 = memref.load %arg2[%c276] : memref<288xf32, #tpu.memory_space<smem>>
    %783 = vector.broadcast %782 : f32 to vector<8x16xf32>
    %784 = arith.mulf %783, %68 : vector<8x16xf32>
    %785 = arith.addf %781, %784 : vector<8x16xf32>
    %c28 = arith.constant 28 : index
    %786 = memref.load %arg2[%c28] : memref<288xf32, #tpu.memory_space<smem>>
    %787 = vector.broadcast %786 : f32 to vector<8x16xf32>
    %788 = arith.mulf %787, %70 : vector<8x16xf32>
    %789 = arith.addf %785, %788 : vector<8x16xf32>
    %c60 = arith.constant 60 : index
    %790 = memref.load %arg2[%c60] : memref<288xf32, #tpu.memory_space<smem>>
    %791 = vector.broadcast %790 : f32 to vector<8x16xf32>
    %792 = arith.mulf %791, %72 : vector<8x16xf32>
    %793 = arith.addf %789, %792 : vector<8x16xf32>
    %c92 = arith.constant 92 : index
    %794 = memref.load %arg2[%c92] : memref<288xf32, #tpu.memory_space<smem>>
    %795 = vector.broadcast %794 : f32 to vector<8x16xf32>
    %796 = arith.mulf %795, %74 : vector<8x16xf32>
    %797 = arith.addf %793, %796 : vector<8x16xf32>
    %c124 = arith.constant 124 : index
    %798 = memref.load %arg2[%c124] : memref<288xf32, #tpu.memory_space<smem>>
    %799 = vector.broadcast %798 : f32 to vector<8x16xf32>
    %800 = arith.mulf %799, %76 : vector<8x16xf32>
    %801 = arith.addf %797, %800 : vector<8x16xf32>
    %c156 = arith.constant 156 : index
    %802 = memref.load %arg2[%c156] : memref<288xf32, #tpu.memory_space<smem>>
    %803 = vector.broadcast %802 : f32 to vector<8x16xf32>
    %804 = arith.mulf %803, %78 : vector<8x16xf32>
    %805 = arith.addf %801, %804 : vector<8x16xf32>
    %c188 = arith.constant 188 : index
    %806 = memref.load %arg2[%c188] : memref<288xf32, #tpu.memory_space<smem>>
    %807 = vector.broadcast %806 : f32 to vector<8x16xf32>
    %808 = arith.mulf %807, %80 : vector<8x16xf32>
    %809 = arith.addf %805, %808 : vector<8x16xf32>
    %c220 = arith.constant 220 : index
    %810 = memref.load %arg2[%c220] : memref<288xf32, #tpu.memory_space<smem>>
    %811 = vector.broadcast %810 : f32 to vector<8x16xf32>
    %812 = arith.mulf %811, %82 : vector<8x16xf32>
    %813 = arith.addf %809, %812 : vector<8x16xf32>
    %c252 = arith.constant 252 : index
    %814 = memref.load %arg2[%c252] : memref<288xf32, #tpu.memory_space<smem>>
    %815 = vector.broadcast %814 : f32 to vector<8x16xf32>
    %816 = arith.mulf %815, %84 : vector<8x16xf32>
    %817 = arith.addf %813, %816 : vector<8x16xf32>
    %c284 = arith.constant 284 : index
    %818 = memref.load %arg2[%c284] : memref<288xf32, #tpu.memory_space<smem>>
    %819 = vector.broadcast %818 : f32 to vector<8x16xf32>
    %820 = arith.mulf %819, %86 : vector<8x16xf32>
    %821 = arith.addf %817, %820 : vector<8x16xf32>
    %cst_152 = arith.constant 0.000000e+00 : f32
    %822 = vector.broadcast %cst_152 : f32 to vector<8x16xf32>
    %823 = arith.maximumf %821, %822 : vector<8x16xf32>
    %c0_153 = arith.constant 0 : index
    %c4_154 = arith.constant 4 : index
    %c0_155 = arith.constant 0 : index
    %c0_156 = arith.constant 0 : index
    %824 = vector.load %arg6[%c0_153, %c4_154, %c0_155, %c0_156] : memref<1x8x8x16xf32, #tpu.memory_space<vmem>>, vector<1x1x8x16xf32>
    %825 = vector.shape_cast %824 : vector<1x1x8x16xf32> to vector<8x16xf32>
    %826 = vector.shape_cast %823 : vector<8x16xf32> to vector<1x1x8x16xf32>
    tpu.vector_store %arg6[%c0_153, %c4_154, %c0_155, %c0_156], %826 {strides = array<i32>} : memref<1x8x8x16xf32, #tpu.memory_space<vmem>>, vector<1x1x8x16xf32>,
    %c5 = arith.constant 5 : index
    %827 = memref.load %arg2[%c5] : memref<288xf32, #tpu.memory_space<smem>>
    %828 = vector.broadcast %827 : f32 to vector<8x16xf32>
    %829 = arith.mulf %828, %16 : vector<8x16xf32>
    %c37 = arith.constant 37 : index
    %830 = memref.load %arg2[%c37] : memref<288xf32, #tpu.memory_space<smem>>
    %831 = vector.broadcast %830 : f32 to vector<8x16xf32>
    %832 = arith.mulf %831, %18 : vector<8x16xf32>
    %833 = arith.addf %829, %832 : vector<8x16xf32>
    %c69 = arith.constant 69 : index
    %834 = memref.load %arg2[%c69] : memref<288xf32, #tpu.memory_space<smem>>
    %835 = vector.broadcast %834 : f32 to vector<8x16xf32>
    %836 = arith.mulf %835, %20 : vector<8x16xf32>
    %837 = arith.addf %833, %836 : vector<8x16xf32>
    %c101 = arith.constant 101 : index
    %838 = memref.load %arg2[%c101] : memref<288xf32, #tpu.memory_space<smem>>
    %839 = vector.broadcast %838 : f32 to vector<8x16xf32>
    %840 = arith.mulf %839, %22 : vector<8x16xf32>
    %841 = arith.addf %837, %840 : vector<8x16xf32>
    %c133 = arith.constant 133 : index
    %842 = memref.load %arg2[%c133] : memref<288xf32, #tpu.memory_space<smem>>
    %843 = vector.broadcast %842 : f32 to vector<8x16xf32>
    %844 = arith.mulf %843, %24 : vector<8x16xf32>
    %845 = arith.addf %841, %844 : vector<8x16xf32>
    %c165 = arith.constant 165 : index
    %846 = memref.load %arg2[%c165] : memref<288xf32, #tpu.memory_space<smem>>
    %847 = vector.broadcast %846 : f32 to vector<8x16xf32>
    %848 = arith.mulf %847, %26 : vector<8x16xf32>
    %849 = arith.addf %845, %848 : vector<8x16xf32>
    %c197 = arith.constant 197 : index
    %850 = memref.load %arg2[%c197] : memref<288xf32, #tpu.memory_space<smem>>
    %851 = vector.broadcast %850 : f32 to vector<8x16xf32>
    %852 = arith.mulf %851, %28 : vector<8x16xf32>
    %853 = arith.addf %849, %852 : vector<8x16xf32>
    %c229 = arith.constant 229 : index
    %854 = memref.load %arg2[%c229] : memref<288xf32, #tpu.memory_space<smem>>
    %855 = vector.broadcast %854 : f32 to vector<8x16xf32>
    %856 = arith.mulf %855, %30 : vector<8x16xf32>
    %857 = arith.addf %853, %856 : vector<8x16xf32>
    %c261 = arith.constant 261 : index
    %858 = memref.load %arg2[%c261] : memref<288xf32, #tpu.memory_space<smem>>
    %859 = vector.broadcast %858 : f32 to vector<8x16xf32>
    %860 = arith.mulf %859, %32 : vector<8x16xf32>
    %861 = arith.addf %857, %860 : vector<8x16xf32>
    %c13 = arith.constant 13 : index
    %862 = memref.load %arg2[%c13] : memref<288xf32, #tpu.memory_space<smem>>
    %863 = vector.broadcast %862 : f32 to vector<8x16xf32>
    %864 = arith.mulf %863, %34 : vector<8x16xf32>
    %865 = arith.addf %861, %864 : vector<8x16xf32>
    %c45 = arith.constant 45 : index
    %866 = memref.load %arg2[%c45] : memref<288xf32, #tpu.memory_space<smem>>
    %867 = vector.broadcast %866 : f32 to vector<8x16xf32>
    %868 = arith.mulf %867, %36 : vector<8x16xf32>
    %869 = arith.addf %865, %868 : vector<8x16xf32>
    %c77 = arith.constant 77 : index
    %870 = memref.load %arg2[%c77] : memref<288xf32, #tpu.memory_space<smem>>
    %871 = vector.broadcast %870 : f32 to vector<8x16xf32>
    %872 = arith.mulf %871, %38 : vector<8x16xf32>
    %873 = arith.addf %869, %872 : vector<8x16xf32>
    %c109 = arith.constant 109 : index
    %874 = memref.load %arg2[%c109] : memref<288xf32, #tpu.memory_space<smem>>
    %875 = vector.broadcast %874 : f32 to vector<8x16xf32>
    %876 = arith.mulf %875, %40 : vector<8x16xf32>
    %877 = arith.addf %873, %876 : vector<8x16xf32>
    %c141 = arith.constant 141 : index
    %878 = memref.load %arg2[%c141] : memref<288xf32, #tpu.memory_space<smem>>
    %879 = vector.broadcast %878 : f32 to vector<8x16xf32>
    %880 = arith.mulf %879, %42 : vector<8x16xf32>
    %881 = arith.addf %877, %880 : vector<8x16xf32>
    %c173 = arith.constant 173 : index
    %882 = memref.load %arg2[%c173] : memref<288xf32, #tpu.memory_space<smem>>
    %883 = vector.broadcast %882 : f32 to vector<8x16xf32>
    %884 = arith.mulf %883, %44 : vector<8x16xf32>
    %885 = arith.addf %881, %884 : vector<8x16xf32>
    %c205 = arith.constant 205 : index
    %886 = memref.load %arg2[%c205] : memref<288xf32, #tpu.memory_space<smem>>
    %887 = vector.broadcast %886 : f32 to vector<8x16xf32>
    %888 = arith.mulf %887, %46 : vector<8x16xf32>
    %889 = arith.addf %885, %888 : vector<8x16xf32>
    %c237 = arith.constant 237 : index
    %890 = memref.load %arg2[%c237] : memref<288xf32, #tpu.memory_space<smem>>
    %891 = vector.broadcast %890 : f32 to vector<8x16xf32>
    %892 = arith.mulf %891, %48 : vector<8x16xf32>
    %893 = arith.addf %889, %892 : vector<8x16xf32>
    %c269 = arith.constant 269 : index
    %894 = memref.load %arg2[%c269] : memref<288xf32, #tpu.memory_space<smem>>
    %895 = vector.broadcast %894 : f32 to vector<8x16xf32>
    %896 = arith.mulf %895, %50 : vector<8x16xf32>
    %897 = arith.addf %893, %896 : vector<8x16xf32>
    %c21 = arith.constant 21 : index
    %898 = memref.load %arg2[%c21] : memref<288xf32, #tpu.memory_space<smem>>
    %899 = vector.broadcast %898 : f32 to vector<8x16xf32>
    %900 = arith.mulf %899, %52 : vector<8x16xf32>
    %901 = arith.addf %897, %900 : vector<8x16xf32>
    %c53 = arith.constant 53 : index
    %902 = memref.load %arg2[%c53] : memref<288xf32, #tpu.memory_space<smem>>
    %903 = vector.broadcast %902 : f32 to vector<8x16xf32>
    %904 = arith.mulf %903, %54 : vector<8x16xf32>
    %905 = arith.addf %901, %904 : vector<8x16xf32>
    %c85 = arith.constant 85 : index
    %906 = memref.load %arg2[%c85] : memref<288xf32, #tpu.memory_space<smem>>
    %907 = vector.broadcast %906 : f32 to vector<8x16xf32>
    %908 = arith.mulf %907, %56 : vector<8x16xf32>
    %909 = arith.addf %905, %908 : vector<8x16xf32>
    %c117 = arith.constant 117 : index
    %910 = memref.load %arg2[%c117] : memref<288xf32, #tpu.memory_space<smem>>
    %911 = vector.broadcast %910 : f32 to vector<8x16xf32>
    %912 = arith.mulf %911, %58 : vector<8x16xf32>
    %913 = arith.addf %909, %912 : vector<8x16xf32>
    %c149 = arith.constant 149 : index
    %914 = memref.load %arg2[%c149] : memref<288xf32, #tpu.memory_space<smem>>
    %915 = vector.broadcast %914 : f32 to vector<8x16xf32>
    %916 = arith.mulf %915, %60 : vector<8x16xf32>
    %917 = arith.addf %913, %916 : vector<8x16xf32>
    %c181 = arith.constant 181 : index
    %918 = memref.load %arg2[%c181] : memref<288xf32, #tpu.memory_space<smem>>
    %919 = vector.broadcast %918 : f32 to vector<8x16xf32>
    %920 = arith.mulf %919, %62 : vector<8x16xf32>
    %921 = arith.addf %917, %920 : vector<8x16xf32>
    %c213 = arith.constant 213 : index
    %922 = memref.load %arg2[%c213] : memref<288xf32, #tpu.memory_space<smem>>
    %923 = vector.broadcast %922 : f32 to vector<8x16xf32>
    %924 = arith.mulf %923, %64 : vector<8x16xf32>
    %925 = arith.addf %921, %924 : vector<8x16xf32>
    %c245 = arith.constant 245 : index
    %926 = memref.load %arg2[%c245] : memref<288xf32, #tpu.memory_space<smem>>
    %927 = vector.broadcast %926 : f32 to vector<8x16xf32>
    %928 = arith.mulf %927, %66 : vector<8x16xf32>
    %929 = arith.addf %925, %928 : vector<8x16xf32>
    %c277 = arith.constant 277 : index
    %930 = memref.load %arg2[%c277] : memref<288xf32, #tpu.memory_space<smem>>
    %931 = vector.broadcast %930 : f32 to vector<8x16xf32>
    %932 = arith.mulf %931, %68 : vector<8x16xf32>
    %933 = arith.addf %929, %932 : vector<8x16xf32>
    %c29 = arith.constant 29 : index
    %934 = memref.load %arg2[%c29] : memref<288xf32, #tpu.memory_space<smem>>
    %935 = vector.broadcast %934 : f32 to vector<8x16xf32>
    %936 = arith.mulf %935, %70 : vector<8x16xf32>
    %937 = arith.addf %933, %936 : vector<8x16xf32>
    %c61 = arith.constant 61 : index
    %938 = memref.load %arg2[%c61] : memref<288xf32, #tpu.memory_space<smem>>
    %939 = vector.broadcast %938 : f32 to vector<8x16xf32>
    %940 = arith.mulf %939, %72 : vector<8x16xf32>
    %941 = arith.addf %937, %940 : vector<8x16xf32>
    %c93 = arith.constant 93 : index
    %942 = memref.load %arg2[%c93] : memref<288xf32, #tpu.memory_space<smem>>
    %943 = vector.broadcast %942 : f32 to vector<8x16xf32>
    %944 = arith.mulf %943, %74 : vector<8x16xf32>
    %945 = arith.addf %941, %944 : vector<8x16xf32>
    %c125 = arith.constant 125 : index
    %946 = memref.load %arg2[%c125] : memref<288xf32, #tpu.memory_space<smem>>
    %947 = vector.broadcast %946 : f32 to vector<8x16xf32>
    %948 = arith.mulf %947, %76 : vector<8x16xf32>
    %949 = arith.addf %945, %948 : vector<8x16xf32>
    %c157 = arith.constant 157 : index
    %950 = memref.load %arg2[%c157] : memref<288xf32, #tpu.memory_space<smem>>
    %951 = vector.broadcast %950 : f32 to vector<8x16xf32>
    %952 = arith.mulf %951, %78 : vector<8x16xf32>
    %953 = arith.addf %949, %952 : vector<8x16xf32>
    %c189 = arith.constant 189 : index
    %954 = memref.load %arg2[%c189] : memref<288xf32, #tpu.memory_space<smem>>
    %955 = vector.broadcast %954 : f32 to vector<8x16xf32>
    %956 = arith.mulf %955, %80 : vector<8x16xf32>
    %957 = arith.addf %953, %956 : vector<8x16xf32>
    %c221 = arith.constant 221 : index
    %958 = memref.load %arg2[%c221] : memref<288xf32, #tpu.memory_space<smem>>
    %959 = vector.broadcast %958 : f32 to vector<8x16xf32>
    %960 = arith.mulf %959, %82 : vector<8x16xf32>
    %961 = arith.addf %957, %960 : vector<8x16xf32>
    %c253 = arith.constant 253 : index
    %962 = memref.load %arg2[%c253] : memref<288xf32, #tpu.memory_space<smem>>
    %963 = vector.broadcast %962 : f32 to vector<8x16xf32>
    %964 = arith.mulf %963, %84 : vector<8x16xf32>
    %965 = arith.addf %961, %964 : vector<8x16xf32>
    %c285 = arith.constant 285 : index
    %966 = memref.load %arg2[%c285] : memref<288xf32, #tpu.memory_space<smem>>
    %967 = vector.broadcast %966 : f32 to vector<8x16xf32>
    %968 = arith.mulf %967, %86 : vector<8x16xf32>
    %969 = arith.addf %965, %968 : vector<8x16xf32>
    %cst_157 = arith.constant 0.000000e+00 : f32
    %970 = vector.broadcast %cst_157 : f32 to vector<8x16xf32>
    %971 = arith.maximumf %969, %970 : vector<8x16xf32>
    %c0_158 = arith.constant 0 : index
    %c5_159 = arith.constant 5 : index
    %c0_160 = arith.constant 0 : index
    %c0_161 = arith.constant 0 : index
    %972 = vector.load %arg6[%c0_158, %c5_159, %c0_160, %c0_161] : memref<1x8x8x16xf32, #tpu.memory_space<vmem>>, vector<1x1x8x16xf32>
    %973 = vector.shape_cast %972 : vector<1x1x8x16xf32> to vector<8x16xf32>
    %974 = vector.shape_cast %971 : vector<8x16xf32> to vector<1x1x8x16xf32>
    tpu.vector_store %arg6[%c0_158, %c5_159, %c0_160, %c0_161], %974 {strides = array<i32>} : memref<1x8x8x16xf32, #tpu.memory_space<vmem>>, vector<1x1x8x16xf32>,
    %c6 = arith.constant 6 : index
    %975 = memref.load %arg2[%c6] : memref<288xf32, #tpu.memory_space<smem>>
    %976 = vector.broadcast %975 : f32 to vector<8x16xf32>
    %977 = arith.mulf %976, %16 : vector<8x16xf32>
    %c38 = arith.constant 38 : index
    %978 = memref.load %arg2[%c38] : memref<288xf32, #tpu.memory_space<smem>>
    %979 = vector.broadcast %978 : f32 to vector<8x16xf32>
    %980 = arith.mulf %979, %18 : vector<8x16xf32>
    %981 = arith.addf %977, %980 : vector<8x16xf32>
    %c70 = arith.constant 70 : index
    %982 = memref.load %arg2[%c70] : memref<288xf32, #tpu.memory_space<smem>>
    %983 = vector.broadcast %982 : f32 to vector<8x16xf32>
    %984 = arith.mulf %983, %20 : vector<8x16xf32>
    %985 = arith.addf %981, %984 : vector<8x16xf32>
    %c102 = arith.constant 102 : index
    %986 = memref.load %arg2[%c102] : memref<288xf32, #tpu.memory_space<smem>>
    %987 = vector.broadcast %986 : f32 to vector<8x16xf32>
    %988 = arith.mulf %987, %22 : vector<8x16xf32>
    %989 = arith.addf %985, %988 : vector<8x16xf32>
    %c134 = arith.constant 134 : index
    %990 = memref.load %arg2[%c134] : memref<288xf32, #tpu.memory_space<smem>>
    %991 = vector.broadcast %990 : f32 to vector<8x16xf32>
    %992 = arith.mulf %991, %24 : vector<8x16xf32>
    %993 = arith.addf %989, %992 : vector<8x16xf32>
    %c166 = arith.constant 166 : index
    %994 = memref.load %arg2[%c166] : memref<288xf32, #tpu.memory_space<smem>>
    %995 = vector.broadcast %994 : f32 to vector<8x16xf32>
    %996 = arith.mulf %995, %26 : vector<8x16xf32>
    %997 = arith.addf %993, %996 : vector<8x16xf32>
    %c198 = arith.constant 198 : index
    %998 = memref.load %arg2[%c198] : memref<288xf32, #tpu.memory_space<smem>>
    %999 = vector.broadcast %998 : f32 to vector<8x16xf32>
    %1000 = arith.mulf %999, %28 : vector<8x16xf32>
    %1001 = arith.addf %997, %1000 : vector<8x16xf32>
    %c230 = arith.constant 230 : index
    %1002 = memref.load %arg2[%c230] : memref<288xf32, #tpu.memory_space<smem>>
    %1003 = vector.broadcast %1002 : f32 to vector<8x16xf32>
    %1004 = arith.mulf %1003, %30 : vector<8x16xf32>
    %1005 = arith.addf %1001, %1004 : vector<8x16xf32>
    %c262 = arith.constant 262 : index
    %1006 = memref.load %arg2[%c262] : memref<288xf32, #tpu.memory_space<smem>>
    %1007 = vector.broadcast %1006 : f32 to vector<8x16xf32>
    %1008 = arith.mulf %1007, %32 : vector<8x16xf32>
    %1009 = arith.addf %1005, %1008 : vector<8x16xf32>
    %c14 = arith.constant 14 : index
    %1010 = memref.load %arg2[%c14] : memref<288xf32, #tpu.memory_space<smem>>
    %1011 = vector.broadcast %1010 : f32 to vector<8x16xf32>
    %1012 = arith.mulf %1011, %34 : vector<8x16xf32>
    %1013 = arith.addf %1009, %1012 : vector<8x16xf32>
    %c46 = arith.constant 46 : index
    %1014 = memref.load %arg2[%c46] : memref<288xf32, #tpu.memory_space<smem>>
    %1015 = vector.broadcast %1014 : f32 to vector<8x16xf32>
    %1016 = arith.mulf %1015, %36 : vector<8x16xf32>
    %1017 = arith.addf %1013, %1016 : vector<8x16xf32>
    %c78 = arith.constant 78 : index
    %1018 = memref.load %arg2[%c78] : memref<288xf32, #tpu.memory_space<smem>>
    %1019 = vector.broadcast %1018 : f32 to vector<8x16xf32>
    %1020 = arith.mulf %1019, %38 : vector<8x16xf32>
    %1021 = arith.addf %1017, %1020 : vector<8x16xf32>
    %c110 = arith.constant 110 : index
    %1022 = memref.load %arg2[%c110] : memref<288xf32, #tpu.memory_space<smem>>
    %1023 = vector.broadcast %1022 : f32 to vector<8x16xf32>
    %1024 = arith.mulf %1023, %40 : vector<8x16xf32>
    %1025 = arith.addf %1021, %1024 : vector<8x16xf32>
    %c142 = arith.constant 142 : index
    %1026 = memref.load %arg2[%c142] : memref<288xf32, #tpu.memory_space<smem>>
    %1027 = vector.broadcast %1026 : f32 to vector<8x16xf32>
    %1028 = arith.mulf %1027, %42 : vector<8x16xf32>
    %1029 = arith.addf %1025, %1028 : vector<8x16xf32>
    %c174 = arith.constant 174 : index
    %1030 = memref.load %arg2[%c174] : memref<288xf32, #tpu.memory_space<smem>>
    %1031 = vector.broadcast %1030 : f32 to vector<8x16xf32>
    %1032 = arith.mulf %1031, %44 : vector<8x16xf32>
    %1033 = arith.addf %1029, %1032 : vector<8x16xf32>
    %c206 = arith.constant 206 : index
    %1034 = memref.load %arg2[%c206] : memref<288xf32, #tpu.memory_space<smem>>
    %1035 = vector.broadcast %1034 : f32 to vector<8x16xf32>
    %1036 = arith.mulf %1035, %46 : vector<8x16xf32>
    %1037 = arith.addf %1033, %1036 : vector<8x16xf32>
    %c238 = arith.constant 238 : index
    %1038 = memref.load %arg2[%c238] : memref<288xf32, #tpu.memory_space<smem>>
    %1039 = vector.broadcast %1038 : f32 to vector<8x16xf32>
    %1040 = arith.mulf %1039, %48 : vector<8x16xf32>
    %1041 = arith.addf %1037, %1040 : vector<8x16xf32>
    %c270 = arith.constant 270 : index
    %1042 = memref.load %arg2[%c270] : memref<288xf32, #tpu.memory_space<smem>>
    %1043 = vector.broadcast %1042 : f32 to vector<8x16xf32>
    %1044 = arith.mulf %1043, %50 : vector<8x16xf32>
    %1045 = arith.addf %1041, %1044 : vector<8x16xf32>
    %c22 = arith.constant 22 : index
    %1046 = memref.load %arg2[%c22] : memref<288xf32, #tpu.memory_space<smem>>
    %1047 = vector.broadcast %1046 : f32 to vector<8x16xf32>
    %1048 = arith.mulf %1047, %52 : vector<8x16xf32>
    %1049 = arith.addf %1045, %1048 : vector<8x16xf32>
    %c54 = arith.constant 54 : index
    %1050 = memref.load %arg2[%c54] : memref<288xf32, #tpu.memory_space<smem>>
    %1051 = vector.broadcast %1050 : f32 to vector<8x16xf32>
    %1052 = arith.mulf %1051, %54 : vector<8x16xf32>
    %1053 = arith.addf %1049, %1052 : vector<8x16xf32>
    %c86 = arith.constant 86 : index
    %1054 = memref.load %arg2[%c86] : memref<288xf32, #tpu.memory_space<smem>>
    %1055 = vector.broadcast %1054 : f32 to vector<8x16xf32>
    %1056 = arith.mulf %1055, %56 : vector<8x16xf32>
    %1057 = arith.addf %1053, %1056 : vector<8x16xf32>
    %c118 = arith.constant 118 : index
    %1058 = memref.load %arg2[%c118] : memref<288xf32, #tpu.memory_space<smem>>
    %1059 = vector.broadcast %1058 : f32 to vector<8x16xf32>
    %1060 = arith.mulf %1059, %58 : vector<8x16xf32>
    %1061 = arith.addf %1057, %1060 : vector<8x16xf32>
    %c150 = arith.constant 150 : index
    %1062 = memref.load %arg2[%c150] : memref<288xf32, #tpu.memory_space<smem>>
    %1063 = vector.broadcast %1062 : f32 to vector<8x16xf32>
    %1064 = arith.mulf %1063, %60 : vector<8x16xf32>
    %1065 = arith.addf %1061, %1064 : vector<8x16xf32>
    %c182 = arith.constant 182 : index
    %1066 = memref.load %arg2[%c182] : memref<288xf32, #tpu.memory_space<smem>>
    %1067 = vector.broadcast %1066 : f32 to vector<8x16xf32>
    %1068 = arith.mulf %1067, %62 : vector<8x16xf32>
    %1069 = arith.addf %1065, %1068 : vector<8x16xf32>
    %c214 = arith.constant 214 : index
    %1070 = memref.load %arg2[%c214] : memref<288xf32, #tpu.memory_space<smem>>
    %1071 = vector.broadcast %1070 : f32 to vector<8x16xf32>
    %1072 = arith.mulf %1071, %64 : vector<8x16xf32>
    %1073 = arith.addf %1069, %1072 : vector<8x16xf32>
    %c246 = arith.constant 246 : index
    %1074 = memref.load %arg2[%c246] : memref<288xf32, #tpu.memory_space<smem>>
    %1075 = vector.broadcast %1074 : f32 to vector<8x16xf32>
    %1076 = arith.mulf %1075, %66 : vector<8x16xf32>
    %1077 = arith.addf %1073, %1076 : vector<8x16xf32>
    %c278 = arith.constant 278 : index
    %1078 = memref.load %arg2[%c278] : memref<288xf32, #tpu.memory_space<smem>>
    %1079 = vector.broadcast %1078 : f32 to vector<8x16xf32>
    %1080 = arith.mulf %1079, %68 : vector<8x16xf32>
    %1081 = arith.addf %1077, %1080 : vector<8x16xf32>
    %c30 = arith.constant 30 : index
    %1082 = memref.load %arg2[%c30] : memref<288xf32, #tpu.memory_space<smem>>
    %1083 = vector.broadcast %1082 : f32 to vector<8x16xf32>
    %1084 = arith.mulf %1083, %70 : vector<8x16xf32>
    %1085 = arith.addf %1081, %1084 : vector<8x16xf32>
    %c62 = arith.constant 62 : index
    %1086 = memref.load %arg2[%c62] : memref<288xf32, #tpu.memory_space<smem>>
    %1087 = vector.broadcast %1086 : f32 to vector<8x16xf32>
    %1088 = arith.mulf %1087, %72 : vector<8x16xf32>
    %1089 = arith.addf %1085, %1088 : vector<8x16xf32>
    %c94 = arith.constant 94 : index
    %1090 = memref.load %arg2[%c94] : memref<288xf32, #tpu.memory_space<smem>>
    %1091 = vector.broadcast %1090 : f32 to vector<8x16xf32>
    %1092 = arith.mulf %1091, %74 : vector<8x16xf32>
    %1093 = arith.addf %1089, %1092 : vector<8x16xf32>
    %c126 = arith.constant 126 : index
    %1094 = memref.load %arg2[%c126] : memref<288xf32, #tpu.memory_space<smem>>
    %1095 = vector.broadcast %1094 : f32 to vector<8x16xf32>
    %1096 = arith.mulf %1095, %76 : vector<8x16xf32>
    %1097 = arith.addf %1093, %1096 : vector<8x16xf32>
    %c158 = arith.constant 158 : index
    %1098 = memref.load %arg2[%c158] : memref<288xf32, #tpu.memory_space<smem>>
    %1099 = vector.broadcast %1098 : f32 to vector<8x16xf32>
    %1100 = arith.mulf %1099, %78 : vector<8x16xf32>
    %1101 = arith.addf %1097, %1100 : vector<8x16xf32>
    %c190 = arith.constant 190 : index
    %1102 = memref.load %arg2[%c190] : memref<288xf32, #tpu.memory_space<smem>>
    %1103 = vector.broadcast %1102 : f32 to vector<8x16xf32>
    %1104 = arith.mulf %1103, %80 : vector<8x16xf32>
    %1105 = arith.addf %1101, %1104 : vector<8x16xf32>
    %c222 = arith.constant 222 : index
    %1106 = memref.load %arg2[%c222] : memref<288xf32, #tpu.memory_space<smem>>
    %1107 = vector.broadcast %1106 : f32 to vector<8x16xf32>
    %1108 = arith.mulf %1107, %82 : vector<8x16xf32>
    %1109 = arith.addf %1105, %1108 : vector<8x16xf32>
    %c254 = arith.constant 254 : index
    %1110 = memref.load %arg2[%c254] : memref<288xf32, #tpu.memory_space<smem>>
    %1111 = vector.broadcast %1110 : f32 to vector<8x16xf32>
    %1112 = arith.mulf %1111, %84 : vector<8x16xf32>
    %1113 = arith.addf %1109, %1112 : vector<8x16xf32>
    %c286 = arith.constant 286 : index
    %1114 = memref.load %arg2[%c286] : memref<288xf32, #tpu.memory_space<smem>>
    %1115 = vector.broadcast %1114 : f32 to vector<8x16xf32>
    %1116 = arith.mulf %1115, %86 : vector<8x16xf32>
    %1117 = arith.addf %1113, %1116 : vector<8x16xf32>
    %cst_162 = arith.constant 0.000000e+00 : f32
    %1118 = vector.broadcast %cst_162 : f32 to vector<8x16xf32>
    %1119 = arith.maximumf %1117, %1118 : vector<8x16xf32>
    %c0_163 = arith.constant 0 : index
    %c6_164 = arith.constant 6 : index
    %c0_165 = arith.constant 0 : index
    %c0_166 = arith.constant 0 : index
    %1120 = vector.load %arg6[%c0_163, %c6_164, %c0_165, %c0_166] : memref<1x8x8x16xf32, #tpu.memory_space<vmem>>, vector<1x1x8x16xf32>
    %1121 = vector.shape_cast %1120 : vector<1x1x8x16xf32> to vector<8x16xf32>
    %1122 = vector.shape_cast %1119 : vector<8x16xf32> to vector<1x1x8x16xf32>
    tpu.vector_store %arg6[%c0_163, %c6_164, %c0_165, %c0_166], %1122 {strides = array<i32>} : memref<1x8x8x16xf32, #tpu.memory_space<vmem>>, vector<1x1x8x16xf32>,
    %c7 = arith.constant 7 : index
    %1123 = memref.load %arg2[%c7] : memref<288xf32, #tpu.memory_space<smem>>
    %1124 = vector.broadcast %1123 : f32 to vector<8x16xf32>
    %1125 = arith.mulf %1124, %16 : vector<8x16xf32>
    %c39 = arith.constant 39 : index
    %1126 = memref.load %arg2[%c39] : memref<288xf32, #tpu.memory_space<smem>>
    %1127 = vector.broadcast %1126 : f32 to vector<8x16xf32>
    %1128 = arith.mulf %1127, %18 : vector<8x16xf32>
    %1129 = arith.addf %1125, %1128 : vector<8x16xf32>
    %c71 = arith.constant 71 : index
    %1130 = memref.load %arg2[%c71] : memref<288xf32, #tpu.memory_space<smem>>
    %1131 = vector.broadcast %1130 : f32 to vector<8x16xf32>
    %1132 = arith.mulf %1131, %20 : vector<8x16xf32>
    %1133 = arith.addf %1129, %1132 : vector<8x16xf32>
    %c103 = arith.constant 103 : index
    %1134 = memref.load %arg2[%c103] : memref<288xf32, #tpu.memory_space<smem>>
    %1135 = vector.broadcast %1134 : f32 to vector<8x16xf32>
    %1136 = arith.mulf %1135, %22 : vector<8x16xf32>
    %1137 = arith.addf %1133, %1136 : vector<8x16xf32>
    %c135 = arith.constant 135 : index
    %1138 = memref.load %arg2[%c135] : memref<288xf32, #tpu.memory_space<smem>>
    %1139 = vector.broadcast %1138 : f32 to vector<8x16xf32>
    %1140 = arith.mulf %1139, %24 : vector<8x16xf32>
    %1141 = arith.addf %1137, %1140 : vector<8x16xf32>
    %c167 = arith.constant 167 : index
    %1142 = memref.load %arg2[%c167] : memref<288xf32, #tpu.memory_space<smem>>
    %1143 = vector.broadcast %1142 : f32 to vector<8x16xf32>
    %1144 = arith.mulf %1143, %26 : vector<8x16xf32>
    %1145 = arith.addf %1141, %1144 : vector<8x16xf32>
    %c199 = arith.constant 199 : index
    %1146 = memref.load %arg2[%c199] : memref<288xf32, #tpu.memory_space<smem>>
    %1147 = vector.broadcast %1146 : f32 to vector<8x16xf32>
    %1148 = arith.mulf %1147, %28 : vector<8x16xf32>
    %1149 = arith.addf %1145, %1148 : vector<8x16xf32>
    %c231 = arith.constant 231 : index
    %1150 = memref.load %arg2[%c231] : memref<288xf32, #tpu.memory_space<smem>>
    %1151 = vector.broadcast %1150 : f32 to vector<8x16xf32>
    %1152 = arith.mulf %1151, %30 : vector<8x16xf32>
    %1153 = arith.addf %1149, %1152 : vector<8x16xf32>
    %c263 = arith.constant 263 : index
    %1154 = memref.load %arg2[%c263] : memref<288xf32, #tpu.memory_space<smem>>
    %1155 = vector.broadcast %1154 : f32 to vector<8x16xf32>
    %1156 = arith.mulf %1155, %32 : vector<8x16xf32>
    %1157 = arith.addf %1153, %1156 : vector<8x16xf32>
    %c15 = arith.constant 15 : index
    %1158 = memref.load %arg2[%c15] : memref<288xf32, #tpu.memory_space<smem>>
    %1159 = vector.broadcast %1158 : f32 to vector<8x16xf32>
    %1160 = arith.mulf %1159, %34 : vector<8x16xf32>
    %1161 = arith.addf %1157, %1160 : vector<8x16xf32>
    %c47 = arith.constant 47 : index
    %1162 = memref.load %arg2[%c47] : memref<288xf32, #tpu.memory_space<smem>>
    %1163 = vector.broadcast %1162 : f32 to vector<8x16xf32>
    %1164 = arith.mulf %1163, %36 : vector<8x16xf32>
    %1165 = arith.addf %1161, %1164 : vector<8x16xf32>
    %c79 = arith.constant 79 : index
    %1166 = memref.load %arg2[%c79] : memref<288xf32, #tpu.memory_space<smem>>
    %1167 = vector.broadcast %1166 : f32 to vector<8x16xf32>
    %1168 = arith.mulf %1167, %38 : vector<8x16xf32>
    %1169 = arith.addf %1165, %1168 : vector<8x16xf32>
    %c111 = arith.constant 111 : index
    %1170 = memref.load %arg2[%c111] : memref<288xf32, #tpu.memory_space<smem>>
    %1171 = vector.broadcast %1170 : f32 to vector<8x16xf32>
    %1172 = arith.mulf %1171, %40 : vector<8x16xf32>
    %1173 = arith.addf %1169, %1172 : vector<8x16xf32>
    %c143 = arith.constant 143 : index
    %1174 = memref.load %arg2[%c143] : memref<288xf32, #tpu.memory_space<smem>>
    %1175 = vector.broadcast %1174 : f32 to vector<8x16xf32>
    %1176 = arith.mulf %1175, %42 : vector<8x16xf32>
    %1177 = arith.addf %1173, %1176 : vector<8x16xf32>
    %c175 = arith.constant 175 : index
    %1178 = memref.load %arg2[%c175] : memref<288xf32, #tpu.memory_space<smem>>
    %1179 = vector.broadcast %1178 : f32 to vector<8x16xf32>
    %1180 = arith.mulf %1179, %44 : vector<8x16xf32>
    %1181 = arith.addf %1177, %1180 : vector<8x16xf32>
    %c207 = arith.constant 207 : index
    %1182 = memref.load %arg2[%c207] : memref<288xf32, #tpu.memory_space<smem>>
    %1183 = vector.broadcast %1182 : f32 to vector<8x16xf32>
    %1184 = arith.mulf %1183, %46 : vector<8x16xf32>
    %1185 = arith.addf %1181, %1184 : vector<8x16xf32>
    %c239 = arith.constant 239 : index
    %1186 = memref.load %arg2[%c239] : memref<288xf32, #tpu.memory_space<smem>>
    %1187 = vector.broadcast %1186 : f32 to vector<8x16xf32>
    %1188 = arith.mulf %1187, %48 : vector<8x16xf32>
    %1189 = arith.addf %1185, %1188 : vector<8x16xf32>
    %c271 = arith.constant 271 : index
    %1190 = memref.load %arg2[%c271] : memref<288xf32, #tpu.memory_space<smem>>
    %1191 = vector.broadcast %1190 : f32 to vector<8x16xf32>
    %1192 = arith.mulf %1191, %50 : vector<8x16xf32>
    %1193 = arith.addf %1189, %1192 : vector<8x16xf32>
    %c23 = arith.constant 23 : index
    %1194 = memref.load %arg2[%c23] : memref<288xf32, #tpu.memory_space<smem>>
    %1195 = vector.broadcast %1194 : f32 to vector<8x16xf32>
    %1196 = arith.mulf %1195, %52 : vector<8x16xf32>
    %1197 = arith.addf %1193, %1196 : vector<8x16xf32>
    %c55 = arith.constant 55 : index
    %1198 = memref.load %arg2[%c55] : memref<288xf32, #tpu.memory_space<smem>>
    %1199 = vector.broadcast %1198 : f32 to vector<8x16xf32>
    %1200 = arith.mulf %1199, %54 : vector<8x16xf32>
    %1201 = arith.addf %1197, %1200 : vector<8x16xf32>
    %c87 = arith.constant 87 : index
    %1202 = memref.load %arg2[%c87] : memref<288xf32, #tpu.memory_space<smem>>
    %1203 = vector.broadcast %1202 : f32 to vector<8x16xf32>
    %1204 = arith.mulf %1203, %56 : vector<8x16xf32>
    %1205 = arith.addf %1201, %1204 : vector<8x16xf32>
    %c119 = arith.constant 119 : index
    %1206 = memref.load %arg2[%c119] : memref<288xf32, #tpu.memory_space<smem>>
    %1207 = vector.broadcast %1206 : f32 to vector<8x16xf32>
    %1208 = arith.mulf %1207, %58 : vector<8x16xf32>
    %1209 = arith.addf %1205, %1208 : vector<8x16xf32>
    %c151 = arith.constant 151 : index
    %1210 = memref.load %arg2[%c151] : memref<288xf32, #tpu.memory_space<smem>>
    %1211 = vector.broadcast %1210 : f32 to vector<8x16xf32>
    %1212 = arith.mulf %1211, %60 : vector<8x16xf32>
    %1213 = arith.addf %1209, %1212 : vector<8x16xf32>
    %c183 = arith.constant 183 : index
    %1214 = memref.load %arg2[%c183] : memref<288xf32, #tpu.memory_space<smem>>
    %1215 = vector.broadcast %1214 : f32 to vector<8x16xf32>
    %1216 = arith.mulf %1215, %62 : vector<8x16xf32>
    %1217 = arith.addf %1213, %1216 : vector<8x16xf32>
    %c215 = arith.constant 215 : index
    %1218 = memref.load %arg2[%c215] : memref<288xf32, #tpu.memory_space<smem>>
    %1219 = vector.broadcast %1218 : f32 to vector<8x16xf32>
    %1220 = arith.mulf %1219, %64 : vector<8x16xf32>
    %1221 = arith.addf %1217, %1220 : vector<8x16xf32>
    %c247 = arith.constant 247 : index
    %1222 = memref.load %arg2[%c247] : memref<288xf32, #tpu.memory_space<smem>>
    %1223 = vector.broadcast %1222 : f32 to vector<8x16xf32>
    %1224 = arith.mulf %1223, %66 : vector<8x16xf32>
    %1225 = arith.addf %1221, %1224 : vector<8x16xf32>
    %c279 = arith.constant 279 : index
    %1226 = memref.load %arg2[%c279] : memref<288xf32, #tpu.memory_space<smem>>
    %1227 = vector.broadcast %1226 : f32 to vector<8x16xf32>
    %1228 = arith.mulf %1227, %68 : vector<8x16xf32>
    %1229 = arith.addf %1225, %1228 : vector<8x16xf32>
    %c31 = arith.constant 31 : index
    %1230 = memref.load %arg2[%c31] : memref<288xf32, #tpu.memory_space<smem>>
    %1231 = vector.broadcast %1230 : f32 to vector<8x16xf32>
    %1232 = arith.mulf %1231, %70 : vector<8x16xf32>
    %1233 = arith.addf %1229, %1232 : vector<8x16xf32>
    %c63 = arith.constant 63 : index
    %1234 = memref.load %arg2[%c63] : memref<288xf32, #tpu.memory_space<smem>>
    %1235 = vector.broadcast %1234 : f32 to vector<8x16xf32>
    %1236 = arith.mulf %1235, %72 : vector<8x16xf32>
    %1237 = arith.addf %1233, %1236 : vector<8x16xf32>
    %c95 = arith.constant 95 : index
    %1238 = memref.load %arg2[%c95] : memref<288xf32, #tpu.memory_space<smem>>
    %1239 = vector.broadcast %1238 : f32 to vector<8x16xf32>
    %1240 = arith.mulf %1239, %74 : vector<8x16xf32>
    %1241 = arith.addf %1237, %1240 : vector<8x16xf32>
    %c127 = arith.constant 127 : index
    %1242 = memref.load %arg2[%c127] : memref<288xf32, #tpu.memory_space<smem>>
    %1243 = vector.broadcast %1242 : f32 to vector<8x16xf32>
    %1244 = arith.mulf %1243, %76 : vector<8x16xf32>
    %1245 = arith.addf %1241, %1244 : vector<8x16xf32>
    %c159 = arith.constant 159 : index
    %1246 = memref.load %arg2[%c159] : memref<288xf32, #tpu.memory_space<smem>>
    %1247 = vector.broadcast %1246 : f32 to vector<8x16xf32>
    %1248 = arith.mulf %1247, %78 : vector<8x16xf32>
    %1249 = arith.addf %1245, %1248 : vector<8x16xf32>
    %c191 = arith.constant 191 : index
    %1250 = memref.load %arg2[%c191] : memref<288xf32, #tpu.memory_space<smem>>
    %1251 = vector.broadcast %1250 : f32 to vector<8x16xf32>
    %1252 = arith.mulf %1251, %80 : vector<8x16xf32>
    %1253 = arith.addf %1249, %1252 : vector<8x16xf32>
    %c223 = arith.constant 223 : index
    %1254 = memref.load %arg2[%c223] : memref<288xf32, #tpu.memory_space<smem>>
    %1255 = vector.broadcast %1254 : f32 to vector<8x16xf32>
    %1256 = arith.mulf %1255, %82 : vector<8x16xf32>
    %1257 = arith.addf %1253, %1256 : vector<8x16xf32>
    %c255 = arith.constant 255 : index
    %1258 = memref.load %arg2[%c255] : memref<288xf32, #tpu.memory_space<smem>>
    %1259 = vector.broadcast %1258 : f32 to vector<8x16xf32>
    %1260 = arith.mulf %1259, %84 : vector<8x16xf32>
    %1261 = arith.addf %1257, %1260 : vector<8x16xf32>
    %c287 = arith.constant 287 : index
    %1262 = memref.load %arg2[%c287] : memref<288xf32, #tpu.memory_space<smem>>
    %1263 = vector.broadcast %1262 : f32 to vector<8x16xf32>
    %1264 = arith.mulf %1263, %86 : vector<8x16xf32>
    %1265 = arith.addf %1261, %1264 : vector<8x16xf32>
    %cst_167 = arith.constant 0.000000e+00 : f32
    %1266 = vector.broadcast %cst_167 : f32 to vector<8x16xf32>
    %1267 = arith.maximumf %1265, %1266 : vector<8x16xf32>
    %c0_168 = arith.constant 0 : index
    %c7_169 = arith.constant 7 : index
    %c0_170 = arith.constant 0 : index
    %c0_171 = arith.constant 0 : index
    %1268 = vector.load %arg6[%c0_168, %c7_169, %c0_170, %c0_171] : memref<1x8x8x16xf32, #tpu.memory_space<vmem>>, vector<1x1x8x16xf32>
    %1269 = vector.shape_cast %1268 : vector<1x1x8x16xf32> to vector<8x16xf32>
    %1270 = vector.shape_cast %1267 : vector<8x16xf32> to vector<1x1x8x16xf32>
    tpu.vector_store %arg6[%c0_168, %c7_169, %c0_170, %c0_171], %1270 {strides = array<i32>} : memref<1x8x8x16xf32, #tpu.memory_space<vmem>>, vector<1x1x8x16xf32>,
    return
  }
  func.func @transform_0(%arg0: i32, %arg1: i32) -> i32 {
    %c0_i32 = arith.constant 0 : i32
    %c0_i32_0 = arith.constant 0 : i32
    return %c0_i32 : i32
  }
  func.func @transform_1(%arg0: i32, %arg1: i32) -> (i32, i32, i32, i32) {
    %c0_i32 = arith.constant 0 : i32
    %c0_i32_0 = arith.constant 0 : i32
    %c0_i32_1 = arith.constant 0 : i32
    return %arg0, %c0_i32, %arg1, %c0_i32_0 : i32, i32, i32, i32
  }
  func.func @transform_2(%arg0: i32, %arg1: i32) -> (i32, i32, i32, i32) {
    %c0_i32 = arith.constant 0 : i32
    %c0_i32_0 = arith.constant 0 : i32
    %c0_i32_1 = arith.constant 0 : i32
    return %arg0, %arg1, %c0_i32, %c0_i32_0 : i32, i32, i32, i32
  }
  func.func @transform_3(%arg0: i32, %arg1: i32) -> (i32, i32, i32, i32) {
    %c0_i32 = arith.constant 0 : i32
    %c0_i32_0 = arith.constant 0 : i32
    %c0_i32_1 = arith.constant 0 : i32
    return %arg0, %arg1, %c0_i32, %c0_i32_0 : i32, i32, i32, i32
  }
  func.func @transform_4(%arg0: i32, %arg1: i32) -> (i32, i32, i32, i32) {
    %c0_i32 = arith.constant 0 : i32
    %c0_i32_0 = arith.constant 0 : i32
    %c0_i32_1 = arith.constant 0 : i32
    return %arg0, %c0_i32, %arg1, %c0_i32_0 : i32, i32, i32, i32
  }
}

</mosaic_0001>

<llo_original>
// kernel: basic_conv_do_relu.1
$region0: #{basic_conv_do_relu.1}
  #allocation0 [shape = 'u32[]', space=smem, size = 0x4, offset = 0x4, fixed_abs, tag = 'smem constant byte address 0x4 - core index']
  #allocation1 [shape = 'u32[144,128]{1,0:T(1,128)}', space=vmem, size = 0x12000, scoped, tag = 'internal scratch']
  #allocation2 [shape = 'f32[4,10,18]{2,1,0:T(8,128)}', space=vmem, size = 0x8000, scoped, tag = 'scratch operand']
  %s0 = inlined_call_operand.vmem [shape: f32[288], index: 0, kind: input, shape index: {}]
  %s1 = inlined_call_operand.vmem [shape: f32[2,4,16,16], index: 1, kind: input, shape index: {}]
  %s2 = inlined_call_operand.vmem [shape: f32[2,2,4,16], index: 2, kind: input, shape index: {}]
  %s3 = inlined_call_operand.vmem [shape: f32[2,2,4,16], index: 3, kind: input, shape index: {}]
  %s4 = inlined_call_operand.hbm [shape: f32[2,8,16,16], index: 4, kind: output, shape index: {}]
  %s5 = sld [smem:[#allocation0]]
  $region91: #{basic_conv_do_relu.1} parent=0
    _
  %s7 = ssub.s32 1, %s5
  %s8 = scalar_select 0, %s7, %s5
  $region1: #{basic_conv_do_relu.1} parent=0
    #allocation3 [shape = 'u8[1536]{0}', space=smem, size = 0x600, scoped, tag = 'input window, operand 0, single buffered']
    #allocation4 [shape = 's32[2]{0}', space=sflag, size = 0x8, scoped, tag = 'scoped memory for basic_conv_do_relu.1']
    #allocation5 [shape = 's32[2]{0}', space=sflag, size = 0x8, scoped, tag = 'scoped memory for basic_conv_do_relu.1']
    #allocation6 [shape = 'u8[32768]{0}', space=vmem, size = 0x8000, scoped, tag = 'input window, operand 1']
    #allocation7 [shape = 'u8[65536]{0}', space=vmem, size = 0x10000, scoped, tag = 'output window, operand 0']
    %9 = vsyncpa [#allocation5], 0
    %10 = vsyncpa [#allocation4], 0
    %s11 = scalar_lea.sflag [#allocation4], 1
    %12 = vsyncpa %s11, 0
    loop: start=0, step=1, limit=6
    $region2: #{basic_conv_do_relu.1} parent=1 // loop_pre_header
      _
    $region3: #{basic_conv_do_relu.1} parent=1 // loop_header
      %s14 = sphi 0, %s18
      %p15 = scmp.ge.s32.totalorder %s14, 6
      %s21 = sphi 0, %s33
      %s22 = sphi 0, %s29
      %s23 = sphi 0, %s21
      %s24 = sphi 0, %s22
      %s25 = sphi 0, %s23
      %s26 = sphi 0, %s24
      %s34 = sphi 0, %s34
      %s36 = sphi 0, %s34
      %s37 = sphi 0, %s36
      %s51 = sphi 0, %s37
      %s59 = sphi 0, %s61
      %s62 = sphi 0, %s59
      %s63 = sphi 0, %s62
      %s79 = sphi 0, %s63
      %s87 = sphi 0, %s89
      %s90 = sphi 0, %s87
      %s91 = sphi 0, %s90
      %s107 = sphi 0, %s91
      %s115 = sphi 0, %s117
      %s118 = sphi 0, %s115
      %s119 = sphi 0, %s118
      %s135 = sphi 0, %s119
      %s143 = sphi 0, %s145
      %s146 = sphi 0, %s143
      %s147 = sphi 0, %s146
      %s163 = sphi 0, %s147
    $region4: #{basic_conv_do_relu.1} parent=1 // loop_header_branch
      %17 = sbr.rel (%p15) target = $region8
    $region5: #{basic_conv_do_relu.1} parent=1 // loop_body
      %s19 = ssub.s32 %s14, 1
      %s20 = ssub.s32 %s14, 2
      %s27 = sadd.s32 1, %s22
      %p28 = scmp.ge.s32.totalorder %s27, 2
      %s29 = scalar_select %p28, 0, %s27
      %s30 = sadd.s32 1, %s21
      %s31 = scalar_select %p28, %s30, %s21
      %p32 = scmp.ge.s32.totalorder %s31, 2
      %s33 = scalar_select %p32, 0, %s31
      %s35 = sadd.s32 %s34, 1
      %p38 = scmp.eq.s32.totalorder %s14, 3
      %p39 = scmp.ne.s32.totalorder %s34, %s36
      %p40 = scmp.eq.s32.totalorder %s14, 0
      %p41 = por %p39, %p40
      %p42 = scmp.ne.s32.totalorder %s34, %s36
      %p43 = scmp.eq.s32.totalorder %s19, 3
      %p44 = por %p42, %p43
      %p45 = scmp.ne.s32.totalorder %s36, %s37
      %p46 = scmp.eq.s32.totalorder %s19, 0
      %p47 = por %p45, %p46
      %p48 = scmp.ne.s32.totalorder %s36, %s37
      %p49 = scmp.eq.s32.totalorder %s20, 3
      %p50 = por %p48, %p49
      %p52 = scmp.ne.s32.totalorder %s37, %s51
      %p53 = scmp.eq.s32.totalorder %s20, 0
      %p54 = por %p52, %p53
      %s55 = ssub.s32 %s21, %s33
      %s56 = ssub.s32 %s22, %s29
      %s57 = sor.u32 %s55, %s56
      %p58 = scmp.eq.s32.totalorder %s57, 0
      %s60 = sadd.s32 %s59, 1
      %s61 = scalar_select %p58, %s59, %s60
      %p64 = pneg %p58
      %p65 = scmp.eq.s32.totalorder %s14, 3
      %p66 = por %p64, %p65
      %p67 = scmp.ne.s32.totalorder %s59, %s62
      %p68 = scmp.eq.s32.totalorder %s14, 0
      %p69 = por %p67, %p68
      %p70 = scmp.ne.s32.totalorder %s59, %s62
      %p71 = scmp.eq.s32.totalorder %s19, 3
      %p72 = por %p70, %p71
      %p73 = scmp.ne.s32.totalorder %s62, %s63
      %p74 = scmp.eq.s32.totalorder %s19, 0
      %p75 = por %p73, %p74
      %p76 = scmp.ne.s32.totalorder %s62, %s63
      %p77 = scmp.eq.s32.totalorder %s20, 3
      %p78 = por %p76, %p77
      %p80 = scmp.ne.s32.totalorder %s63, %s79
      %p81 = scmp.eq.s32.totalorder %s20, 0
      %p82 = por %p80, %p81
      %s83 = ssub.s32 %s21, %s33
      %s84 = ssub.s32 %s22, %s29
      %s85 = sor.u32 %s83, %s84
      %p86 = scmp.eq.s32.totalorder %s85, 0
      %s88 = sadd.s32 %s87, 1
      %s89 = scalar_select %p86, %s87, %s88
      %p92 = pneg %p86
      %p93 = scmp.eq.s32.totalorder %s14, 3
      %p94 = por %p92, %p93
      %p95 = scmp.ne.s32.totalorder %s87, %s90
      %p96 = scmp.eq.s32.totalorder %s14, 0
      %p97 = por %p95, %p96
      %p98 = scmp.ne.s32.totalorder %s87, %s90
      %p99 = scmp.eq.s32.totalorder %s19, 3
      %p100 = por %p98, %p99
      %p101 = scmp.ne.s32.totalorder %s90, %s91
      %p102 = scmp.eq.s32.totalorder %s19, 0
      %p103 = por %p101, %p102
      %p104 = scmp.ne.s32.totalorder %s90, %s91
      %p105 = scmp.eq.s32.totalorder %s20, 3
      %p106 = por %p104, %p105
      %p108 = scmp.ne.s32.totalorder %s91, %s107
      %p109 = scmp.eq.s32.totalorder %s20, 0
      %p110 = por %p108, %p109
      %s111 = ssub.s32 %s21, %s33
      %s112 = ssub.s32 %s22, %s29
      %s113 = sor.u32 %s111, %s112
      %p114 = scmp.eq.s32.totalorder %s113, 0
      %s116 = sadd.s32 %s115, 1
      %s117 = scalar_select %p114, %s115, %s116
      %p120 = pneg %p114
      %p121 = scmp.eq.s32.totalorder %s14, 3
      %p122 = por %p120, %p121
      %p123 = scmp.ne.s32.totalorder %s115, %s118
      %p124 = scmp.eq.s32.totalorder %s14, 0
      %p125 = por %p123, %p124
      %p126 = scmp.ne.s32.totalorder %s115, %s118
      %p127 = scmp.eq.s32.totalorder %s19, 3
      %p128 = por %p126, %p127
      %p129 = scmp.ne.s32.totalorder %s118, %s119
      %p130 = scmp.eq.s32.totalorder %s19, 0
      %p131 = por %p129, %p130
      %p132 = scmp.ne.s32.totalorder %s118, %s119
      %p133 = scmp.eq.s32.totalorder %s20, 3
      %p134 = por %p132, %p133
      %p136 = scmp.ne.s32.totalorder %s119, %s135
      %p137 = scmp.eq.s32.totalorder %s20, 0
      %p138 = por %p136, %p137
      %s139 = ssub.s32 %s21, %s33
      %s140 = ssub.s32 %s22, %s29
      %s141 = sor.u32 %s139, %s140
      %p142 = scmp.eq.s32.totalorder %s141, 0
      %s144 = sadd.s32 %s143, 1
      %s145 = scalar_select %p142, %s143, %s144
      %p148 = pneg %p142
      %p149 = scmp.eq.s32.totalorder %s14, 3
      %p150 = por %p148, %p149
      %p151 = scmp.ne.s32.totalorder %s143, %s146
      %p152 = scmp.eq.s32.totalorder %s14, 0
      %p153 = por %p151, %p152
      %p154 = scmp.ne.s32.totalorder %s143, %s146
      %p155 = scmp.eq.s32.totalorder %s19, 3
      %p156 = por %p154, %p155
      %p157 = scmp.ne.s32.totalorder %s146, %s147
      %p158 = scmp.eq.s32.totalorder %s19, 0
      %p159 = por %p157, %p158
      %p160 = scmp.ne.s32.totalorder %s146, %s147
      %p161 = scmp.eq.s32.totalorder %s20, 3
      %p162 = por %p160, %p161
      %p164 = scmp.ne.s32.totalorder %s147, %s163
      %p165 = scmp.eq.s32.totalorder %s20, 0
      %p166 = por %p164, %p165
      %p167 = scmp.le.s32.totalorder 1, %s14
      %p168 = scmp.lt.s32.totalorder %s14, 5
      %p169 = pnand %p167, %p168
      %p170 = pneg %p169
      // Predicated region
      $region9: #{basic_conv_do_relu.1} parent=5 // pred_check
        _
      $region10: #{basic_conv_do_relu.1} parent=5 // pred_check_branch
        %172 = sbr.rel (%p169) target = $region12
      $region11: #{basic_conv_do_relu.1} parent=5 // pred_region
        %s173 = ssub.s32 %s14, 1
        // Predicated region
        $region13: #{basic_conv_do_relu.1} parent=11 // pred_check
          %p174 = pneg %p47
        $region14: #{basic_conv_do_relu.1} parent=11 // pred_check_branch
          %176 = sbr.rel (%p174) target = $region16
        $region15: #{basic_conv_do_relu.1} parent=11 // pred_region
          %s178 = ssub.s32 48, 48
          %179 = vsyncadd [#allocation5], %s178
          %s181 = sshll.u32 %s0, 4
          %s182 = int_to_ptr.vmem [resolvable:$true] %s181
          %184 = dma.vmem_to_smem %s182, 48, [#allocation3], [#allocation5]
        $region16: #{basic_conv_do_relu.1} parent=11 // pred_fallthru
          _
      $region12: #{basic_conv_do_relu.1} parent=5 // pred_fallthru
        _
      %p185 = scmp.lt.s32.totalorder %s14, 4
      // Predicated region
      $region17: #{basic_conv_do_relu.1} parent=5 // pred_check
        %p186 = pneg %p185
      $region18: #{basic_conv_do_relu.1} parent=5 // pred_check_branch
        %188 = sbr.rel (%p186) target = $region20
      $region19: #{basic_conv_do_relu.1} parent=5 // pred_region
        // Predicated region
        $region21: #{basic_conv_do_relu.1} parent=19 // pred_check
          %p189 = pneg %p69
        $region22: #{basic_conv_do_relu.1} parent=19 // pred_check_branch
          %191 = sbr.rel (%p189) target = $region24
        $region23: #{basic_conv_do_relu.1} parent=19 // pred_region
          %s192 = sand.u32 %s59, 1
          %s193 = sand.u32 %s59, 1
          %s194 = smul.addr %s193, 32
          %s195 = scalar_lea.vmem [#allocation6], %s194
          %s196 = smul.addr %s21, 8
          %s197 = sadd.s32 %s22, %s196
          %s198 = smul.addr %s197, 8
          %s199 = scalar_lea.vmem %s1, %s198
          // Predicated region
          $region25: #{basic_conv_do_relu.1} parent=23 // pred_check
            _
          $region26: #{basic_conv_do_relu.1} parent=23 // pred_check_branch
            %201 = sbr.rel (0) target = $region28
          $region27: #{basic_conv_do_relu.1} parent=23 // pred_region
            // Predicated region
            $region29: #{basic_conv_do_relu.1} parent=27 // pred_check
              _
            $region30: #{basic_conv_do_relu.1} parent=27 // pred_check_branch
              %203 = sbr.rel (0) target = $region32
            $region31: #{basic_conv_do_relu.1} parent=27 // pred_region
              // Predicated region
              $region44: #{basic_conv_do_relu.1} parent=31 // pred_check
                _
              $region45: #{basic_conv_do_relu.1} parent=31 // pred_check_branch
                %224 = sbr.rel (0) target = $region47
              $region46: #{basic_conv_do_relu.1} parent=31 // pred_region
                loop: start=0, step=1, limit=1
                $region48: #{basic_conv_do_relu.1} parent=46 // loop_pre_header
                  _
                $region49: #{basic_conv_do_relu.1} parent=46 // loop_header
                  %s226 = sphi 0, %s230
                  %p227 = scmp.ge.s32.totalorder %s226, 1
                  %s231 = sphi %s199, %s199
                  %s232 = sphi %s195, %s195
                $region50: #{basic_conv_do_relu.1} parent=46 // loop_header_branch
                  %229 = sbr.rel (%p227) target = $region54
                $region51: #{basic_conv_do_relu.1} parent=46 // loop_body
                  %v233 = vld [vmem:[%s231] sm:$0xff]
                  %234 = vst [vmem:[%s232] sm:$0xff] %v233
                  %v235 = vld [vmem:[%s231 + $0x10] sm:$0xff]
                  %236 = vst [vmem:[%s232 + $0x8] sm:$0xff] %v235
                  %v237 = vld [vmem:[%s231 + $0x20] sm:$0xff]
                  %238 = vst [vmem:[%s232 + $0x10] sm:$0xff] %v237
                  %v239 = vld [vmem:[%s231 + $0x30] sm:$0xff]
                  %240 = vst [vmem:[%s232 + $0x18] sm:$0xff] %v239
                $region52: #{basic_conv_do_relu.1} parent=46 // loop_footer
                  %s230 = sadd.s32 1, %s226
                $region53: #{basic_conv_do_relu.1} parent=46 // loop_footer_branch
                  %225 = sbr.rel target = $region49
                $region54: #{basic_conv_do_relu.1} parent=46 // loop_exit
                  _
              $region47: #{basic_conv_do_relu.1} parent=31 // pred_fallthru
                _
              // Predicated region
              $region55: #{basic_conv_do_relu.1} parent=31 // pred_check
                _
              $region56: #{basic_conv_do_relu.1} parent=31 // pred_check_branch
                %242 = sbr.rel target = $region58
              $region57: #{basic_conv_do_relu.1} parent=31 // pred_region
                _
              $region58: #{basic_conv_do_relu.1} parent=31 // pred_fallthru
                _
            $region32: #{basic_conv_do_relu.1} parent=27 // pred_fallthru
              _
            // Predicated region
            $region33: #{basic_conv_do_relu.1} parent=27 // pred_check
              _
            $region34: #{basic_conv_do_relu.1} parent=27 // pred_check_branch
              %205 = sbr.rel target = $region36
            $region35: #{basic_conv_do_relu.1} parent=27 // pred_region
              loop: start=0, step=1, limit=1
              $region37: #{basic_conv_do_relu.1} parent=35 // loop_pre_header
                _
              $region38: #{basic_conv_do_relu.1} parent=35 // loop_header
                %s208 = sphi 0, %s212
                %p209 = scmp.ge.s32.totalorder %s208, 1
                %s213 = sphi %s199, %s199
                %s214 = sphi %s195, %s195
              $region39: #{basic_conv_do_relu.1} parent=35 // loop_header_branch
                %211 = sbr.rel (%p209) target = $region43
              $region40: #{basic_conv_do_relu.1} parent=35 // loop_body
                %v215 = vld [vmem:[%s213] sm:$0xff]
                %216 = vst [vmem:[%s214] sm:$0xff] %v215
                %v217 = vld [vmem:[%s213 + $0x10] sm:$0xff]
                %218 = vst [vmem:[%s214 + $0x8] sm:$0xff] %v217
                %v219 = vld [vmem:[%s213 + $0x20] sm:$0xff]
                %220 = vst [vmem:[%s214 + $0x10] sm:$0xff] %v219
                %v221 = vld [vmem:[%s213 + $0x30] sm:$0xff]
                %222 = vst [vmem:[%s214 + $0x18] sm:$0xff] %v221
              $region41: #{basic_conv_do_relu.1} parent=35 // loop_footer
                %s212 = sadd.s32 1, %s208
              $region42: #{basic_conv_do_relu.1} parent=35 // loop_footer_branch
                %207 = sbr.rel target = $region38
              $region43: #{basic_conv_do_relu.1} parent=35 // loop_exit
                _
            $region36: #{basic_conv_do_relu.1} parent=27 // pred_fallthru
              _
          $region28: #{basic_conv_do_relu.1} parent=23 // pred_fallthru
            _
          %243 = vnop
        $region24: #{basic_conv_do_relu.1} parent=19 // pred_fallthru
          _
        // Predicated region
        $region59: #{basic_conv_do_relu.1} parent=19 // pred_check
          %p244 = pneg %p97
        $region60: #{basic_conv_do_relu.1} parent=19 // pred_check_branch
          %246 = sbr.rel (%p244) target = $region62
        $region61: #{basic_conv_do_relu.1} parent=19 // pred_region
          %p247 = scmp.lt.s32.totalorder %s21, 1
          %s248 = scalar_select %p247, %s21, 1
          %p249 = scmp.lt.s32.totalorder %s22, 1
          %s250 = scalar_select %p249, %s22, 1
          %s251 = smul.addr %s248, 2
          %s252 = sadd.s32 %s250, %s251
          %s253 = smul.addr %s252, 4
          %s254 = scalar_lea.vmem %s2, %s253
        $region62: #{basic_conv_do_relu.1} parent=19 // pred_fallthru
          _
        // Predicated region
        $region63: #{basic_conv_do_relu.1} parent=19 // pred_check
          %p255 = pneg %p125
        $region64: #{basic_conv_do_relu.1} parent=19 // pred_check_branch
          %257 = sbr.rel (%p255) target = $region66
        $region65: #{basic_conv_do_relu.1} parent=19 // pred_region
          %p258 = scmp.lt.s32.totalorder %s21, 1
          %s259 = scalar_select %p258, %s21, 1
          %p260 = scmp.lt.s32.totalorder %s22, 1
          %s261 = scalar_select %p260, %s22, 1
          %s262 = smul.addr %s259, 2
          %s263 = sadd.s32 %s261, %s262
          %s264 = smul.addr %s263, 4
          %s265 = scalar_lea.vmem %s3, %s264
        $region66: #{basic_conv_do_relu.1} parent=19 // pred_fallthru
          _
      $region20: #{basic_conv_do_relu.1} parent=5 // pred_fallthru
        _
      %p266 = scmp.le.s32.totalorder 1, %s14
      %p267 = scmp.lt.s32.totalorder %s14, 5
      %p268 = pnand %p266, %p267
      %p269 = pneg %p268
      // Predicated region
      $region67: #{basic_conv_do_relu.1} parent=5 // pred_check
        _
      $region68: #{basic_conv_do_relu.1} parent=5 // pred_check_branch
        %271 = sbr.rel (%p268) target = $region70
      $region69: #{basic_conv_do_relu.1} parent=5 // pred_region
        %s272 = ssub.s32 %s14, 1
        // Predicated region
        $region71: #{basic_conv_do_relu.1} parent=69 // pred_check
          %p273 = pneg %p47
        $region72: #{basic_conv_do_relu.1} parent=69 // pred_check_branch
          %275 = sbr.rel (%p273) target = $region74
        $region73: #{basic_conv_do_relu.1} parent=69 // pred_region
          %276 = dma.done [#allocation5], 48
        $region74: #{basic_conv_do_relu.1} parent=69 // pred_fallthru
          _
        %s277 = sand.u32 %s62, 1
        %s278 = sand.u32 %s62, 1
        %s279 = smul.addr %s278, 32
        %s280 = scalar_lea.vmem [#allocation6], %s279
        // Predicated region
        $region75: #{basic_conv_do_relu.1} parent=69 // pred_check
          %p281 = pneg %p75
        $region76: #{basic_conv_do_relu.1} parent=69 // pred_check_branch
          %283 = sbr.rel (%p281) target = $region78
        $region77: #{basic_conv_do_relu.1} parent=69 // pred_region
          _
        $region78: #{basic_conv_do_relu.1} parent=69 // pred_fallthru
          _
        %284 = sfence
        %p285 = pneg %p47
        %p286 = pneg %p44
        %s287 = sand.u32 %s62, 1
        %s288 = sand.u32 %s62, 1
        %s289 = smul.addr %s288, 32
        %s290 = scalar_lea.vmem [#allocation6], %s289
        %p291 = pneg %p75
        %p292 = pneg %p72
        %p293 = scmp.lt.s32.totalorder %s23, 1
        %s294 = scalar_select %p293, %s23, 1
        %p295 = scmp.lt.s32.totalorder %s24, 1
        %s296 = scalar_select %p295, %s24, 1
        %s297 = smul.addr %s294, 2
        %s298 = sadd.s32 %s296, %s297
        %s299 = smul.addr %s298, 4
        %s300 = scalar_lea.vmem %s2, %s299
        %p301 = pneg %p103
        %p302 = pneg %p100
        %p303 = scmp.lt.s32.totalorder %s23, 1
        %s304 = scalar_select %p303, %s23, 1
        %p305 = scmp.lt.s32.totalorder %s24, 1
        %s306 = scalar_select %p305, %s24, 1
        %s307 = smul.addr %s304, 2
        %s308 = sadd.s32 %s306, %s307
        %s309 = smul.addr %s308, 4
        %s310 = scalar_lea.vmem %s3, %s309
        %p311 = pneg %p131
        %p312 = pneg %p128
        %p313 = pneg %p159
        %p314 = pneg %p156
        %s315 = sand.u32 %s146, 1
        %s316 = scalar_lea.sflag [#allocation4], %s315
        %s317 = sand.u32 %s146, 1
        %s318 = smul.addr %s317, 64
        %s319 = scalar_lea.vmem [#allocation7], %s318
        %p320 = scmp.lt.s32.totalorder %s23, 1
        %s321 = scalar_select %p320, %s23, 1
        %p322 = scmp.lt.s32.totalorder %s24, 1
        %s323 = scalar_select %p322, %s24, 1
        %s324 = smul.addr %s321, 2
        %s325 = sadd.s32 %s323, %s324
        %s326 = smul.addr %s325, 4
        %s327 = scalar_lea.vmem %s2, %s326
        %p328 = scmp.lt.s32.totalorder %s23, 1
        %s329 = scalar_select %p328, %s23, 1
        %p330 = scmp.lt.s32.totalorder %s24, 1
        %s331 = scalar_select %p330, %s24, 1
        %s332 = smul.addr %s329, 2
        %s333 = sadd.s32 %s331, %s332
        %s334 = smul.addr %s333, 4
        %s335 = scalar_lea.vmem %s3, %s334
        %vm336 = vcmask 146432
        %337 = vst.msk [vmem:[#allocation2] sm:$0xff] %vm336, 0.0
        %vm338 = vcmask 140288
        %339 = vst.msk [vmem:[#allocation2 + $0x8] sm:$0x3] %vm338, 0.0
        %340 = vst.msk [vmem:[#allocation2 + $0x10] sm:$0xff] %vm336, 0.0
        %341 = vst.msk [vmem:[#allocation2 + $0x18] sm:$0x3] %vm338, 0.0
        %342 = vst.msk [vmem:[#allocation2 + $0x20] sm:$0xff] %vm336, 0.0
        %343 = vst.msk [vmem:[#allocation2 + $0x28] sm:$0x3] %vm338, 0.0
        %344 = vst.msk [vmem:[#allocation2 + $0x30] sm:$0xff] %vm336, 0.0
        %345 = vst.msk [vmem:[#allocation2 + $0x38] sm:$0x3] %vm338, 0.0
        %v346 = vld [vmem:[%s280] sm:$0xff]
        %v347 = vld [vmem:[%s280 + $0x8] sm:$0xff]
        %v348 = vld [vmem:[%s280 + $0x10] sm:$0xff]
        %v349 = vld [vmem:[%s280 + $0x18] sm:$0xff]
        %354 = vrot.lane.b32.xlu0 %v346, 1
        %v355 = vpop.permute.xlu0 %354
        %356 = vrot.lane.b32.xlu0 %v347, 1
        %v357 = vpop.permute.xlu0 %356
        %358 = vrot.lane.b32.xlu0 %v348, 1
        %v359 = vpop.permute.xlu0 %358
        %360 = vrot.lane.b32.xlu0 %v349, 1
        %v361 = vpop.permute.xlu0 %360
        %vm366 = vcmask 138248
        %367 = vst.msk [vmem:[#allocation2 + $0x1] sm:$0xff] %vm366, %v355
        %368 = vst.msk [vmem:[#allocation2 + $0x11] sm:$0xff] %vm366, %v357
        %369 = vst.msk [vmem:[#allocation2 + $0x21] sm:$0xff] %vm366, %v359
        %370 = vst.msk [vmem:[#allocation2 + $0x31] sm:$0xff] %vm366, %v361
        %v371 = vld [vmem:[%s327] sm:$0xf]
        %v374 = vunpack.c.l.s4 1966171168
        %v375 = vunpack.c.0.s8 %v374
        %v376 = vlaneseq
        %v377 = vshrl.u32 %v376, 7
        %v378 = vsub.s32 %v375, %v377
        %v379 = vrot.slane %v371, %v378
        %v380 = vcombine.high %v379, %v379
        %v382 = vunpack.c.l.s4 1966171168
        %v383 = vunpack.c.0.s8 %v382
        %v384 = vlaneseq
        %v385 = vshrl.u32 %v384, 7
        %v386 = vsub.s32 %v383, %v385
        %v387 = vrot.slane %v379, %v386
        %v389 = vunpack.c.l.s4 1966171168
        %v390 = vunpack.c.0.s8 %v389
        %v391 = vlaneseq
        %v392 = vshrl.u32 %v391, 7
        %v393 = vsub.s32 %v390, %v392
        %v394 = vrot.slane %v380, %v393
        %v395 = vcombine.high %v387, %v387
        %v396 = vcombine.high %v394, %v394
        %v397 = vlaneseq
        %v398 = vshrl.u32 %v397, 7
        %v399 = vsub.s32 0, %v398
        %v400 = vrot.slane %v387, %v399
        %v401 = vlaneseq
        %v402 = vshrl.u32 %v401, 7
        %v403 = vsub.s32 0, %v402
        %v404 = vrot.slane %v394, %v403
        %v405 = vlaneseq
        %v406 = vshrl.u32 %v405, 7
        %v407 = vsub.s32 0, %v406
        %v408 = vrot.slane %v395, %v407
        %v409 = vlaneseq
        %v410 = vshrl.u32 %v409, 7
        %v411 = vsub.s32 0, %v410
        %v412 = vrot.slane %v396, %v411
        %413 = vrot.lane.b32.xlu0 %v400, 1
        %v414 = vpop.permute.xlu0 %413
        %415 = vrot.lane.b32.xlu0 %v404, 1
        %v416 = vpop.permute.xlu0 %415
        %417 = vrot.lane.b32.xlu0 %v408, 1
        %v418 = vpop.permute.xlu0 %417
        %419 = vrot.lane.b32.xlu0 %v412, 1
        %v420 = vpop.permute.xlu0 %419
        %vm425 = vcmask 131080
        %426 = vst.msk [vmem:[#allocation2] sm:$0x1] %vm425, %v414
        %427 = vst.msk [vmem:[#allocation2 + $0x10] sm:$0x1] %vm425, %v416
        %428 = vst.msk [vmem:[#allocation2 + $0x20] sm:$0x1] %vm425, %v418
        %429 = vst.msk [vmem:[#allocation2 + $0x30] sm:$0x1] %vm425, %v420
        %v430 = vld [vmem:[%s335] sm:$0xf]
        %v433 = vunpack.c.l.s4 1966171168
        %v434 = vunpack.c.0.s8 %v433
        %v435 = vlaneseq
        %v436 = vshrl.u32 %v435, 7
        %v437 = vsub.s32 %v434, %v436
        %v438 = vrot.slane %v430, %v437
        %v439 = vcombine.high %v438, %v438
        %v441 = vunpack.c.l.s4 1966171168
        %v442 = vunpack.c.0.s8 %v441
        %v443 = vlaneseq
        %v444 = vshrl.u32 %v443, 7
        %v445 = vsub.s32 %v442, %v444
        %v446 = vrot.slane %v438, %v445
        %v448 = vunpack.c.l.s4 1966171168
        %v449 = vunpack.c.0.s8 %v448
        %v450 = vlaneseq
        %v451 = vshrl.u32 %v450, 7
        %v452 = vsub.s32 %v449, %v451
        %v453 = vrot.slane %v439, %v452
        %v454 = vcombine.high %v446, %v446
        %v455 = vcombine.high %v453, %v453
        %v456 = vlaneseq
        %v457 = vshrl.u32 %v456, 7
        %v458 = vsub.s32 0, %v457
        %v459 = vrot.slane %v446, %v458
        %v460 = vlaneseq
        %v461 = vshrl.u32 %v460, 7
        %v462 = vsub.s32 0, %v461
        %v463 = vrot.slane %v453, %v462
        %v464 = vlaneseq
        %v465 = vshrl.u32 %v464, 7
        %v466 = vsub.s32 0, %v465
        %v467 = vrot.slane %v454, %v466
        %v468 = vlaneseq
        %v469 = vshrl.u32 %v468, 7
        %v470 = vsub.s32 0, %v469
        %v471 = vrot.slane %v455, %v470
        %472 = vrot.lane.b32.xlu0 %v459, 1
        %v473 = vpop.permute.xlu0 %472
        %474 = vrot.lane.b32.xlu0 %v463, 1
        %v475 = vpop.permute.xlu0 %474
        %476 = vrot.lane.b32.xlu0 %v467, 1
        %v477 = vpop.permute.xlu0 %476
        %478 = vrot.lane.b32.xlu0 %v471, 1
        %v479 = vpop.permute.xlu0 %478
        %484 = vst.msk [vmem:[#allocation2 + $0x9] sm:$0x1] %vm425, %v473
        %485 = vst.msk [vmem:[#allocation2 + $0x19] sm:$0x1] %vm425, %v475
        %486 = vst.msk [vmem:[#allocation2 + $0x29] sm:$0x1] %vm425, %v477
        %487 = vst.msk [vmem:[#allocation2 + $0x39] sm:$0x1] %vm425, %v479
        %v488 = vld [vmem:[#allocation2] sm:$0xff]
        %v489 = vld [vmem:[#allocation2 + $0x1] sm:$0xff]
        %v490 = vld [vmem:[#allocation2 + $0x2] sm:$0xff]
        %s491 = scalar_lea.vmem [#allocation2], 16
        %v492 = vld [vmem:[%s491] sm:$0xff]
        %v493 = vld [vmem:[%s491 + $0x1] sm:$0xff]
        %v494 = vld [vmem:[%s491 + $0x2] sm:$0xff]
        %s495 = scalar_lea.vmem [#allocation2], 32
        %v496 = vld [vmem:[%s495] sm:$0xff]
        %v497 = vld [vmem:[%s495 + $0x1] sm:$0xff]
        %v498 = vld [vmem:[%s495 + $0x2] sm:$0xff]
        %s499 = scalar_lea.vmem [#allocation2], 48
        %v500 = vld [vmem:[%s499] sm:$0xff]
        %v501 = vld [vmem:[%s499 + $0x1] sm:$0xff]
        %v502 = vld [vmem:[%s499 + $0x2] sm:$0xff]
        %s503 = sld [smem:[#allocation3]]
        %v504 = vstv %s503
        %v505 = vmul.f32 %v504, %v488
        %s506 = sld [smem:[#allocation3 + $0x20]]
        %v507 = vstv %s506
        %v508 = vmul.f32 %v507, %v488
        %510 = vrot.lane.b32.xlu0 %v508, 127
        %v511 = vpop.permute.xlu0 %510
        %v513 = vadd.f32 %v505, %v511
        %s514 = sld [smem:[#allocation3 + $0x40]]
        %v515 = vstv %s514
        %v516 = vmul.f32 %v515, %v488
        %518 = vrot.lane.b32.xlu0 %v516, 126
        %v519 = vpop.permute.xlu0 %518
        %v521 = vadd.f32 %v513, %v519
        %s522 = sld [smem:[#allocation3 + $0x60]]
        %v523 = vstv %s522
        %v524 = vmul.f32 %v523, %v489
        %v525 = vadd.f32 %v521, %v524
        %s526 = sld [smem:[#allocation3 + $0x80]]
        %v527 = vstv %s526
        %v528 = vmul.f32 %v527, %v489
        %530 = vrot.lane.b32.xlu0 %v528, 127
        %v531 = vpop.permute.xlu0 %530
        %v533 = vadd.f32 %v525, %v531
        %s534 = sld [smem:[#allocation3 + $0xa0]]
        %v535 = vstv %s534
        %v536 = vmul.f32 %v535, %v489
        %538 = vrot.lane.b32.xlu0 %v536, 126
        %v539 = vpop.permute.xlu0 %538
        %v541 = vadd.f32 %v533, %v539
        %s542 = sld [smem:[#allocation3 + $0xc0]]
        %v543 = vstv %s542
        %v544 = vmul.f32 %v543, %v490
        %v545 = vadd.f32 %v541, %v544
        %s546 = sld [smem:[#allocation3 + $0xe0]]
        %v547 = vstv %s546
        %v548 = vmul.f32 %v547, %v490
        %550 = vrot.lane.b32.xlu0 %v548, 127
        %v551 = vpop.permute.xlu0 %550
        %v553 = vadd.f32 %v545, %v551
        %s554 = sld [smem:[#allocation3 + $0x100]]
        %v555 = vstv %s554
        %v556 = vmul.f32 %v555, %v490
        %558 = vrot.lane.b32.xlu0 %v556, 126
        %v559 = vpop.permute.xlu0 %558
        %v561 = vadd.f32 %v553, %v559
        %s562 = sld [smem:[#allocation3 + $0x8]]
        %v563 = vstv %s562
        %v564 = vmul.f32 %v563, %v492
        %v565 = vadd.f32 %v561, %v564
        %s566 = sld [smem:[#allocation3 + $0x28]]
        %v567 = vstv %s566
        %v568 = vmul.f32 %v567, %v492
        %570 = vrot.lane.b32.xlu0 %v568, 127
        %v571 = vpop.permute.xlu0 %570
        %v573 = vadd.f32 %v565, %v571
        %s574 = sld [smem:[#allocation3 + $0x48]]
        %v575 = vstv %s574
        %v576 = vmul.f32 %v575, %v492
        %578 = vrot.lane.b32.xlu0 %v576, 126
        %v579 = vpop.permute.xlu0 %578
        %v581 = vadd.f32 %v573, %v579
        %s582 = sld [smem:[#allocation3 + $0x68]]
        %v583 = vstv %s582
        %v584 = vmul.f32 %v583, %v493
        %v585 = vadd.f32 %v581, %v584
        %s586 = sld [smem:[#allocation3 + $0x88]]
        %v587 = vstv %s586
        %v588 = vmul.f32 %v587, %v493
        %590 = vrot.lane.b32.xlu0 %v588, 127
        %v591 = vpop.permute.xlu0 %590
        %v593 = vadd.f32 %v585, %v591
        %s594 = sld [smem:[#allocation3 + $0xa8]]
        %v595 = vstv %s594
        %v596 = vmul.f32 %v595, %v493
        %598 = vrot.lane.b32.xlu0 %v596, 126
        %v599 = vpop.permute.xlu0 %598
        %v601 = vadd.f32 %v593, %v599
        %s602 = sld [smem:[#allocation3 + $0xc8]]
        %v603 = vstv %s602
        %v604 = vmul.f32 %v603, %v494
        %v605 = vadd.f32 %v601, %v604
        %s606 = sld [smem:[#allocation3 + $0xe8]]
        %v607 = vstv %s606
        %v608 = vmul.f32 %v607, %v494
        %610 = vrot.lane.b32.xlu0 %v608, 127
        %v611 = vpop.permute.xlu0 %610
        %v613 = vadd.f32 %v605, %v611
        %s614 = sld [smem:[#allocation3 + $0x108]]
        %v615 = vstv %s614
        %v616 = vmul.f32 %v615, %v494
        %618 = vrot.lane.b32.xlu0 %v616, 126
        %v619 = vpop.permute.xlu0 %618
        %v621 = vadd.f32 %v613, %v619
        %s622 = sld [smem:[#allocation3 + $0x10]]
        %v623 = vstv %s622
        %v624 = vmul.f32 %v623, %v496
        %v625 = vadd.f32 %v621, %v624
        %s626 = sld [smem:[#allocation3 + $0x30]]
        %v627 = vstv %s626
        %v628 = vmul.f32 %v627, %v496
        %630 = vrot.lane.b32.xlu0 %v628, 127
        %v631 = vpop.permute.xlu0 %630
        %v633 = vadd.f32 %v625, %v631
        %s634 = sld [smem:[#allocation3 + $0x50]]
        %v635 = vstv %s634
        %v636 = vmul.f32 %v635, %v496
        %638 = vrot.lane.b32.xlu0 %v636, 126
        %v639 = vpop.permute.xlu0 %638
        %v641 = vadd.f32 %v633, %v639
        %s642 = sld [smem:[#allocation3 + $0x70]]
        %v643 = vstv %s642
        %v644 = vmul.f32 %v643, %v497
        %v645 = vadd.f32 %v641, %v644
        %s646 = sld [smem:[#allocation3 + $0x90]]
        %v647 = vstv %s646
        %v648 = vmul.f32 %v647, %v497
        %650 = vrot.lane.b32.xlu0 %v648, 127
        %v651 = vpop.permute.xlu0 %650
        %v653 = vadd.f32 %v645, %v651
        %s654 = sld [smem:[#allocation3 + $0xb0]]
        %v655 = vstv %s654
        %v656 = vmul.f32 %v655, %v497
        %658 = vrot.lane.b32.xlu0 %v656, 126
        %v659 = vpop.permute.xlu0 %658
        %v661 = vadd.f32 %v653, %v659
        %s662 = sld [smem:[#allocation3 + $0xd0]]
        %v663 = vstv %s662
        %v664 = vmul.f32 %v663, %v498
        %v665 = vadd.f32 %v661, %v664
        %s666 = sld [smem:[#allocation3 + $0xf0]]
        %v667 = vstv %s666
        %v668 = vmul.f32 %v667, %v498
        %670 = vrot.lane.b32.xlu0 %v668, 127
        %v671 = vpop.permute.xlu0 %670
        %v673 = vadd.f32 %v665, %v671
        %s674 = sld [smem:[#allocation3 + $0x110]]
        %v675 = vstv %s674
        %v676 = vmul.f32 %v675, %v498
        %678 = vrot.lane.b32.xlu0 %v676, 126
        %v679 = vpop.permute.xlu0 %678
        %v681 = vadd.f32 %v673, %v679
        %s682 = sld [smem:[#allocation3 + $0x18]]
        %v683 = vstv %s682
        %v684 = vmul.f32 %v683, %v500
        %v685 = vadd.f32 %v681, %v684
        %s686 = sld [smem:[#allocation3 + $0x38]]
        %v687 = vstv %s686
        %v688 = vmul.f32 %v687, %v500
        %690 = vrot.lane.b32.xlu0 %v688, 127
        %v691 = vpop.permute.xlu0 %690
        %v693 = vadd.f32 %v685, %v691
        %s694 = sld [smem:[#allocation3 + $0x58]]
        %v695 = vstv %s694
        %v696 = vmul.f32 %v695, %v500
        %698 = vrot.lane.b32.xlu0 %v696, 126
        %v699 = vpop.permute.xlu0 %698
        %v701 = vadd.f32 %v693, %v699
        %s702 = sld [smem:[#allocation3 + $0x78]]
        %v703 = vstv %s702
        %v704 = vmul.f32 %v703, %v501
        %v705 = vadd.f32 %v701, %v704
        %s706 = sld [smem:[#allocation3 + $0x98]]
        %v707 = vstv %s706
        %v708 = vmul.f32 %v707, %v501
        %710 = vrot.lane.b32.xlu0 %v708, 127
        %v711 = vpop.permute.xlu0 %710
        %v713 = vadd.f32 %v705, %v711
        %s714 = sld [smem:[#allocation3 + $0xb8]]
        %v715 = vstv %s714
        %v716 = vmul.f32 %v715, %v501
        %718 = vrot.lane.b32.xlu0 %v716, 126
        %v719 = vpop.permute.xlu0 %718
        %v721 = vadd.f32 %v713, %v719
        %s722 = sld [smem:[#allocation3 + $0xd8]]
        %v723 = vstv %s722
        %v724 = vmul.f32 %v723, %v502
        %v725 = vadd.f32 %v721, %v724
        %s726 = sld [smem:[#allocation3 + $0xf8]]
        %v727 = vstv %s726
        %v728 = vmul.f32 %v727, %v502
        %730 = vrot.lane.b32.xlu0 %v728, 127
        %v731 = vpop.permute.xlu0 %730
        %v733 = vadd.f32 %v725, %v731
        %s734 = sld [smem:[#allocation3 + $0x118]]
        %v735 = vstv %s734
        %v736 = vmul.f32 %v735, %v502
        %738 = vrot.lane.b32.xlu0 %v736, 126
        %v739 = vpop.permute.xlu0 %738
        %v741 = vadd.f32 %v733, %v739
        %v742 = vmax.f32 %v741, 0.0
        %vm743 = vcmask 130048
        %744 = vst.msk [vmem:[%s319] sm:$0xff] %vm743, %v742
        %s745 = sld [smem:[#allocation3 + $0x1]]
        %v746 = vstv %s745
        %v747 = vmul.f32 %v746, %v488
        %s748 = sld [smem:[#allocation3 + $0x21]]
        %v749 = vstv %s748
        %v750 = vmul.f32 %v749, %v488
        %752 = vrot.lane.b32.xlu0 %v750, 127
        %v753 = vpop.permute.xlu0 %752
        %v755 = vadd.f32 %v747, %v753
        %s756 = sld [smem:[#allocation3 + $0x41]]
        %v757 = vstv %s756
        %v758 = vmul.f32 %v757, %v488
        %760 = vrot.lane.b32.xlu0 %v758, 126
        %v761 = vpop.permute.xlu0 %760
        %v763 = vadd.f32 %v755, %v761
        %s764 = sld [smem:[#allocation3 + $0x61]]
        %v765 = vstv %s764
        %v766 = vmul.f32 %v765, %v489
        %v767 = vadd.f32 %v763, %v766
        %s768 = sld [smem:[#allocation3 + $0x81]]
        %v769 = vstv %s768
        %v770 = vmul.f32 %v769, %v489
        %772 = vrot.lane.b32.xlu0 %v770, 127
        %v773 = vpop.permute.xlu0 %772
        %v775 = vadd.f32 %v767, %v773
        %s776 = sld [smem:[#allocation3 + $0xa1]]
        %v777 = vstv %s776
        %v778 = vmul.f32 %v777, %v489
        %780 = vrot.lane.b32.xlu0 %v778, 126
        %v781 = vpop.permute.xlu0 %780
        %v783 = vadd.f32 %v775, %v781
        %s784 = sld [smem:[#allocation3 + $0xc1]]
        %v785 = vstv %s784
        %v786 = vmul.f32 %v785, %v490
        %v787 = vadd.f32 %v783, %v786
        %s788 = sld [smem:[#allocation3 + $0xe1]]
        %v789 = vstv %s788
        %v790 = vmul.f32 %v789, %v490
        %792 = vrot.lane.b32.xlu0 %v790, 127
        %v793 = vpop.permute.xlu0 %792
        %v795 = vadd.f32 %v787, %v793
        %s796 = sld [smem:[#allocation3 + $0x101]]
        %v797 = vstv %s796
        %v798 = vmul.f32 %v797, %v490
        %800 = vrot.lane.b32.xlu0 %v798, 126
        %v801 = vpop.permute.xlu0 %800
        %v803 = vadd.f32 %v795, %v801
        %s804 = sld [smem:[#allocation3 + $0x9]]
        %v805 = vstv %s804
        %v806 = vmul.f32 %v805, %v492
        %v807 = vadd.f32 %v803, %v806
        %s808 = sld [smem:[#allocation3 + $0x29]]
        %v809 = vstv %s808
        %v810 = vmul.f32 %v809, %v492
        %812 = vrot.lane.b32.xlu0 %v810, 127
        %v813 = vpop.permute.xlu0 %812
        %v815 = vadd.f32 %v807, %v813
        %s816 = sld [smem:[#allocation3 + $0x49]]
        %v817 = vstv %s816
        %v818 = vmul.f32 %v817, %v492
        %820 = vrot.lane.b32.xlu0 %v818, 126
        %v821 = vpop.permute.xlu0 %820
        %v823 = vadd.f32 %v815, %v821
        %s824 = sld [smem:[#allocation3 + $0x69]]
        %v825 = vstv %s824
        %v826 = vmul.f32 %v825, %v493
        %v827 = vadd.f32 %v823, %v826
        %s828 = sld [smem:[#allocation3 + $0x89]]
        %v829 = vstv %s828
        %v830 = vmul.f32 %v829, %v493
        %832 = vrot.lane.b32.xlu0 %v830, 127
        %v833 = vpop.permute.xlu0 %832
        %v835 = vadd.f32 %v827, %v833
        %s836 = sld [smem:[#allocation3 + $0xa9]]
        %v837 = vstv %s836
        %v838 = vmul.f32 %v837, %v493
        %840 = vrot.lane.b32.xlu0 %v838, 126
        %v841 = vpop.permute.xlu0 %840
        %v843 = vadd.f32 %v835, %v841
        %s844 = sld [smem:[#allocation3 + $0xc9]]
        %v845 = vstv %s844
        %v846 = vmul.f32 %v845, %v494
        %v847 = vadd.f32 %v843, %v846
        %s848 = sld [smem:[#allocation3 + $0xe9]]
        %v849 = vstv %s848
        %v850 = vmul.f32 %v849, %v494
        %852 = vrot.lane.b32.xlu0 %v850, 127
        %v853 = vpop.permute.xlu0 %852
        %v855 = vadd.f32 %v847, %v853
        %s856 = sld [smem:[#allocation3 + $0x109]]
        %v857 = vstv %s856
        %v858 = vmul.f32 %v857, %v494
        %860 = vrot.lane.b32.xlu0 %v858, 126
        %v861 = vpop.permute.xlu0 %860
        %v863 = vadd.f32 %v855, %v861
        %s864 = sld [smem:[#allocation3 + $0x11]]
        %v865 = vstv %s864
        %v866 = vmul.f32 %v865, %v496
        %v867 = vadd.f32 %v863, %v866
        %s868 = sld [smem:[#allocation3 + $0x31]]
        %v869 = vstv %s868
        %v870 = vmul.f32 %v869, %v496
        %872 = vrot.lane.b32.xlu0 %v870, 127
        %v873 = vpop.permute.xlu0 %872
        %v875 = vadd.f32 %v867, %v873
        %s876 = sld [smem:[#allocation3 + $0x51]]
        %v877 = vstv %s876
        %v878 = vmul.f32 %v877, %v496
        %880 = vrot.lane.b32.xlu0 %v878, 126
        %v881 = vpop.permute.xlu0 %880
        %v883 = vadd.f32 %v875, %v881
        %s884 = sld [smem:[#allocation3 + $0x71]]
        %v885 = vstv %s884
        %v886 = vmul.f32 %v885, %v497
        %v887 = vadd.f32 %v883, %v886
        %s888 = sld [smem:[#allocation3 + $0x91]]
        %v889 = vstv %s888
        %v890 = vmul.f32 %v889, %v497
        %892 = vrot.lane.b32.xlu0 %v890, 127
        %v893 = vpop.permute.xlu0 %892
        %v895 = vadd.f32 %v887, %v893
        %s896 = sld [smem:[#allocation3 + $0xb1]]
        %v897 = vstv %s896
        %v898 = vmul.f32 %v897, %v497
        %900 = vrot.lane.b32.xlu0 %v898, 126
        %v901 = vpop.permute.xlu0 %900
        %v903 = vadd.f32 %v895, %v901
        %s904 = sld [smem:[#allocation3 + $0xd1]]
        %v905 = vstv %s904
        %v906 = vmul.f32 %v905, %v498
        %v907 = vadd.f32 %v903, %v906
        %s908 = sld [smem:[#allocation3 + $0xf1]]
        %v909 = vstv %s908
        %v910 = vmul.f32 %v909, %v498
        %912 = vrot.lane.b32.xlu0 %v910, 127
        %v913 = vpop.permute.xlu0 %912
        %v915 = vadd.f32 %v907, %v913
        %s916 = sld [smem:[#allocation3 + $0x111]]
        %v917 = vstv %s916
        %v918 = vmul.f32 %v917, %v498
        %920 = vrot.lane.b32.xlu0 %v918, 126
        %v921 = vpop.permute.xlu0 %920
        %v923 = vadd.f32 %v915, %v921
        %s924 = sld [smem:[#allocation3 + $0x19]]
        %v925 = vstv %s924
        %v926 = vmul.f32 %v925, %v500
        %v927 = vadd.f32 %v923, %v926
        %s928 = sld [smem:[#allocation3 + $0x39]]
        %v929 = vstv %s928
        %v930 = vmul.f32 %v929, %v500
        %932 = vrot.lane.b32.xlu0 %v930, 127
        %v933 = vpop.permute.xlu0 %932
        %v935 = vadd.f32 %v927, %v933
        %s936 = sld [smem:[#allocation3 + $0x59]]
        %v937 = vstv %s936
        %v938 = vmul.f32 %v937, %v500
        %940 = vrot.lane.b32.xlu0 %v938, 126
        %v941 = vpop.permute.xlu0 %940
        %v943 = vadd.f32 %v935, %v941
        %s944 = sld [smem:[#allocation3 + $0x79]]
        %v945 = vstv %s944
        %v946 = vmul.f32 %v945, %v501
        %v947 = vadd.f32 %v943, %v946
        %s948 = sld [smem:[#allocation3 + $0x99]]
        %v949 = vstv %s948
        %v950 = vmul.f32 %v949, %v501
        %952 = vrot.lane.b32.xlu0 %v950, 127
        %v953 = vpop.permute.xlu0 %952
        %v955 = vadd.f32 %v947, %v953
        %s956 = sld [smem:[#allocation3 + $0xb9]]
        %v957 = vstv %s956
        %v958 = vmul.f32 %v957, %v501
        %960 = vrot.lane.b32.xlu0 %v958, 126
        %v961 = vpop.permute.xlu0 %960
        %v963 = vadd.f32 %v955, %v961
        %s964 = sld [smem:[#allocation3 + $0xd9]]
        %v965 = vstv %s964
        %v966 = vmul.f32 %v965, %v502
        %v967 = vadd.f32 %v963, %v966
        %s968 = sld [smem:[#allocation3 + $0xf9]]
        %v969 = vstv %s968
        %v970 = vmul.f32 %v969, %v502
        %972 = vrot.lane.b32.xlu0 %v970, 127
        %v973 = vpop.permute.xlu0 %972
        %v975 = vadd.f32 %v967, %v973
        %s976 = sld [smem:[#allocation3 + $0x119]]
        %v977 = vstv %s976
        %v978 = vmul.f32 %v977, %v502
        %980 = vrot.lane.b32.xlu0 %v978, 126
        %v981 = vpop.permute.xlu0 %980
        %v983 = vadd.f32 %v975, %v981
        %v984 = vmax.f32 %v983, 0.0
        %s985 = scalar_lea.vmem %s319, 8 [#allocation7]
        %986 = vst.msk [vmem:[%s985] sm:$0xff] %vm743, %v984
        %s987 = sld [smem:[#allocation3 + $0x2]]
        %v988 = vstv %s987
        %v989 = vmul.f32 %v988, %v488
        %s990 = sld [smem:[#allocation3 + $0x22]]
        %v991 = vstv %s990
        %v992 = vmul.f32 %v991, %v488
        %994 = vrot.lane.b32.xlu0 %v992, 127
        %v995 = vpop.permute.xlu0 %994
        %v997 = vadd.f32 %v989, %v995
        %s998 = sld [smem:[#allocation3 + $0x42]]
        %v999 = vstv %s998
        %v1000 = vmul.f32 %v999, %v488
        %1002 = vrot.lane.b32.xlu0 %v1000, 126
        %v1003 = vpop.permute.xlu0 %1002
        %v1005 = vadd.f32 %v997, %v1003
        %s1006 = sld [smem:[#allocation3 + $0x62]]
        %v1007 = vstv %s1006
        %v1008 = vmul.f32 %v1007, %v489
        %v1009 = vadd.f32 %v1005, %v1008
        %s1010 = sld [smem:[#allocation3 + $0x82]]
        %v1011 = vstv %s1010
        %v1012 = vmul.f32 %v1011, %v489
        %1014 = vrot.lane.b32.xlu0 %v1012, 127
        %v1015 = vpop.permute.xlu0 %1014
        %v1017 = vadd.f32 %v1009, %v1015
        %s1018 = sld [smem:[#allocation3 + $0xa2]]
        %v1019 = vstv %s1018
        %v1020 = vmul.f32 %v1019, %v489
        %1022 = vrot.lane.b32.xlu0 %v1020, 126
        %v1023 = vpop.permute.xlu0 %1022
        %v1025 = vadd.f32 %v1017, %v1023
        %s1026 = sld [smem:[#allocation3 + $0xc2]]
        %v1027 = vstv %s1026
        %v1028 = vmul.f32 %v1027, %v490
        %v1029 = vadd.f32 %v1025, %v1028
        %s1030 = sld [smem:[#allocation3 + $0xe2]]
        %v1031 = vstv %s1030
        %v1032 = vmul.f32 %v1031, %v490
        %1034 = vrot.lane.b32.xlu0 %v1032, 127
        %v1035 = vpop.permute.xlu0 %1034
        %v1037 = vadd.f32 %v1029, %v1035
        %s1038 = sld [smem:[#allocation3 + $0x102]]
        %v1039 = vstv %s1038
        %v1040 = vmul.f32 %v1039, %v490
        %1042 = vrot.lane.b32.xlu0 %v1040, 126
        %v1043 = vpop.permute.xlu0 %1042
        %v1045 = vadd.f32 %v1037, %v1043
        %s1046 = sld [smem:[#allocation3 + $0xa]]
        %v1047 = vstv %s1046
        %v1048 = vmul.f32 %v1047, %v492
        %v1049 = vadd.f32 %v1045, %v1048
        %s1050 = sld [smem:[#allocation3 + $0x2a]]
        %v1051 = vstv %s1050
        %v1052 = vmul.f32 %v1051, %v492
        %1054 = vrot.lane.b32.xlu0 %v1052, 127
        %v1055 = vpop.permute.xlu0 %1054
        %v1057 = vadd.f32 %v1049, %v1055
        %s1058 = sld [smem:[#allocation3 + $0x4a]]
        %v1059 = vstv %s1058
        %v1060 = vmul.f32 %v1059, %v492
        %1062 = vrot.lane.b32.xlu0 %v1060, 126
        %v1063 = vpop.permute.xlu0 %1062
        %v1065 = vadd.f32 %v1057, %v1063
        %s1066 = sld [smem:[#allocation3 + $0x6a]]
        %v1067 = vstv %s1066
        %v1068 = vmul.f32 %v1067, %v493
        %v1069 = vadd.f32 %v1065, %v1068
        %s1070 = sld [smem:[#allocation3 + $0x8a]]
        %v1071 = vstv %s1070
        %v1072 = vmul.f32 %v1071, %v493
        %1074 = vrot.lane.b32.xlu0 %v1072, 127
        %v1075 = vpop.permute.xlu0 %1074
        %v1077 = vadd.f32 %v1069, %v1075
        %s1078 = sld [smem:[#allocation3 + $0xaa]]
        %v1079 = vstv %s1078
        %v1080 = vmul.f32 %v1079, %v493
        %1082 = vrot.lane.b32.xlu0 %v1080, 126
        %v1083 = vpop.permute.xlu0 %1082
        %v1085 = vadd.f32 %v1077, %v1083
        %s1086 = sld [smem:[#allocation3 + $0xca]]
        %v1087 = vstv %s1086
        %v1088 = vmul.f32 %v1087, %v494
        %v1089 = vadd.f32 %v1085, %v1088
        %s1090 = sld [smem:[#allocation3 + $0xea]]
        %v1091 = vstv %s1090
        %v1092 = vmul.f32 %v1091, %v494
        %1094 = vrot.lane.b32.xlu0 %v1092, 127
        %v1095 = vpop.permute.xlu0 %1094
        %v1097 = vadd.f32 %v1089, %v1095
        %s1098 = sld [smem:[#allocation3 + $0x10a]]
        %v1099 = vstv %s1098
        %v1100 = vmul.f32 %v1099, %v494
        %1102 = vrot.lane.b32.xlu0 %v1100, 126
        %v1103 = vpop.permute.xlu0 %1102
        %v1105 = vadd.f32 %v1097, %v1103
        %s1106 = sld [smem:[#allocation3 + $0x12]]
        %v1107 = vstv %s1106
        %v1108 = vmul.f32 %v1107, %v496
        %v1109 = vadd.f32 %v1105, %v1108
        %s1110 = sld [smem:[#allocation3 + $0x32]]
        %v1111 = vstv %s1110
        %v1112 = vmul.f32 %v1111, %v496
        %1114 = vrot.lane.b32.xlu0 %v1112, 127
        %v1115 = vpop.permute.xlu0 %1114
        %v1117 = vadd.f32 %v1109, %v1115
        %s1118 = sld [smem:[#allocation3 + $0x52]]
        %v1119 = vstv %s1118
        %v1120 = vmul.f32 %v1119, %v496
        %1122 = vrot.lane.b32.xlu0 %v1120, 126
        %v1123 = vpop.permute.xlu0 %1122
        %v1125 = vadd.f32 %v1117, %v1123
        %s1126 = sld [smem:[#allocation3 + $0x72]]
        %v1127 = vstv %s1126
        %v1128 = vmul.f32 %v1127, %v497
        %v1129 = vadd.f32 %v1125, %v1128
        %s1130 = sld [smem:[#allocation3 + $0x92]]
        %v1131 = vstv %s1130
        %v1132 = vmul.f32 %v1131, %v497
        %1134 = vrot.lane.b32.xlu0 %v1132, 127
        %v1135 = vpop.permute.xlu0 %1134
        %v1137 = vadd.f32 %v1129, %v1135
        %s1138 = sld [smem:[#allocation3 + $0xb2]]
        %v1139 = vstv %s1138
        %v1140 = vmul.f32 %v1139, %v497
        %1142 = vrot.lane.b32.xlu0 %v1140, 126
        %v1143 = vpop.permute.xlu0 %1142
        %v1145 = vadd.f32 %v1137, %v1143
        %s1146 = sld [smem:[#allocation3 + $0xd2]]
        %v1147 = vstv %s1146
        %v1148 = vmul.f32 %v1147, %v498
        %v1149 = vadd.f32 %v1145, %v1148
        %s1150 = sld [smem:[#allocation3 + $0xf2]]
        %v1151 = vstv %s1150
        %v1152 = vmul.f32 %v1151, %v498
        %1154 = vrot.lane.b32.xlu0 %v1152, 127
        %v1155 = vpop.permute.xlu0 %1154
        %v1157 = vadd.f32 %v1149, %v1155
        %s1158 = sld [smem:[#allocation3 + $0x112]]
        %v1159 = vstv %s1158
        %v1160 = vmul.f32 %v1159, %v498
        %1162 = vrot.lane.b32.xlu0 %v1160, 126
        %v1163 = vpop.permute.xlu0 %1162
        %v1165 = vadd.f32 %v1157, %v1163
        %s1166 = sld [smem:[#allocation3 + $0x1a]]
        %v1167 = vstv %s1166
        %v1168 = vmul.f32 %v1167, %v500
        %v1169 = vadd.f32 %v1165, %v1168
        %s1170 = sld [smem:[#allocation3 + $0x3a]]
        %v1171 = vstv %s1170
        %v1172 = vmul.f32 %v1171, %v500
        %1174 = vrot.lane.b32.xlu0 %v1172, 127
        %v1175 = vpop.permute.xlu0 %1174
        %v1177 = vadd.f32 %v1169, %v1175
        %s1178 = sld [smem:[#allocation3 + $0x5a]]
        %v1179 = vstv %s1178
        %v1180 = vmul.f32 %v1179, %v500
        %1182 = vrot.lane.b32.xlu0 %v1180, 126
        %v1183 = vpop.permute.xlu0 %1182
        %v1185 = vadd.f32 %v1177, %v1183
        %s1186 = sld [smem:[#allocation3 + $0x7a]]
        %v1187 = vstv %s1186
        %v1188 = vmul.f32 %v1187, %v501
        %v1189 = vadd.f32 %v1185, %v1188
        %s1190 = sld [smem:[#allocation3 + $0x9a]]
        %v1191 = vstv %s1190
        %v1192 = vmul.f32 %v1191, %v501
        %1194 = vrot.lane.b32.xlu0 %v1192, 127
        %v1195 = vpop.permute.xlu0 %1194
        %v1197 = vadd.f32 %v1189, %v1195
        %s1198 = sld [smem:[#allocation3 + $0xba]]
        %v1199 = vstv %s1198
        %v1200 = vmul.f32 %v1199, %v501
        %1202 = vrot.lane.b32.xlu0 %v1200, 126
        %v1203 = vpop.permute.xlu0 %1202
        %v1205 = vadd.f32 %v1197, %v1203
        %s1206 = sld [smem:[#allocation3 + $0xda]]
        %v1207 = vstv %s1206
        %v1208 = vmul.f32 %v1207, %v502
        %v1209 = vadd.f32 %v1205, %v1208
        %s1210 = sld [smem:[#allocation3 + $0xfa]]
        %v1211 = vstv %s1210
        %v1212 = vmul.f32 %v1211, %v502
        %1214 = vrot.lane.b32.xlu0 %v1212, 127
        %v1215 = vpop.permute.xlu0 %1214
        %v1217 = vadd.f32 %v1209, %v1215
        %s1218 = sld [smem:[#allocation3 + $0x11a]]
        %v1219 = vstv %s1218
        %v1220 = vmul.f32 %v1219, %v502
        %1222 = vrot.lane.b32.xlu0 %v1220, 126
        %v1223 = vpop.permute.xlu0 %1222
        %v1225 = vadd.f32 %v1217, %v1223
        %v1226 = vmax.f32 %v1225, 0.0
        %s1227 = scalar_lea.vmem %s319, 16 [#allocation7]
        %1228 = vst.msk [vmem:[%s1227] sm:$0xff] %vm743, %v1226
        %s1229 = sld [smem:[#allocation3 + $0x3]]
        %v1230 = vstv %s1229
        %v1231 = vmul.f32 %v1230, %v488
        %s1232 = sld [smem:[#allocation3 + $0x23]]
        %v1233 = vstv %s1232
        %v1234 = vmul.f32 %v1233, %v488
        %1236 = vrot.lane.b32.xlu0 %v1234, 127
        %v1237 = vpop.permute.xlu0 %1236
        %v1239 = vadd.f32 %v1231, %v1237
        %s1240 = sld [smem:[#allocation3 + $0x43]]
        %v1241 = vstv %s1240
        %v1242 = vmul.f32 %v1241, %v488
        %1244 = vrot.lane.b32.xlu0 %v1242, 126
        %v1245 = vpop.permute.xlu0 %1244
        %v1247 = vadd.f32 %v1239, %v1245
        %s1248 = sld [smem:[#allocation3 + $0x63]]
        %v1249 = vstv %s1248
        %v1250 = vmul.f32 %v1249, %v489
        %v1251 = vadd.f32 %v1247, %v1250
        %s1252 = sld [smem:[#allocation3 + $0x83]]
        %v1253 = vstv %s1252
        %v1254 = vmul.f32 %v1253, %v489
        %1256 = vrot.lane.b32.xlu0 %v1254, 127
        %v1257 = vpop.permute.xlu0 %1256
        %v1259 = vadd.f32 %v1251, %v1257
        %s1260 = sld [smem:[#allocation3 + $0xa3]]
        %v1261 = vstv %s1260
        %v1262 = vmul.f32 %v1261, %v489
        %1264 = vrot.lane.b32.xlu0 %v1262, 126
        %v1265 = vpop.permute.xlu0 %1264
        %v1267 = vadd.f32 %v1259, %v1265
        %s1268 = sld [smem:[#allocation3 + $0xc3]]
        %v1269 = vstv %s1268
        %v1270 = vmul.f32 %v1269, %v490
        %v1271 = vadd.f32 %v1267, %v1270
        %s1272 = sld [smem:[#allocation3 + $0xe3]]
        %v1273 = vstv %s1272
        %v1274 = vmul.f32 %v1273, %v490
        %1276 = vrot.lane.b32.xlu0 %v1274, 127
        %v1277 = vpop.permute.xlu0 %1276
        %v1279 = vadd.f32 %v1271, %v1277
        %s1280 = sld [smem:[#allocation3 + $0x103]]
        %v1281 = vstv %s1280
        %v1282 = vmul.f32 %v1281, %v490
        %1284 = vrot.lane.b32.xlu0 %v1282, 126
        %v1285 = vpop.permute.xlu0 %1284
        %v1287 = vadd.f32 %v1279, %v1285
        %s1288 = sld [smem:[#allocation3 + $0xb]]
        %v1289 = vstv %s1288
        %v1290 = vmul.f32 %v1289, %v492
        %v1291 = vadd.f32 %v1287, %v1290
        %s1292 = sld [smem:[#allocation3 + $0x2b]]
        %v1293 = vstv %s1292
        %v1294 = vmul.f32 %v1293, %v492
        %1296 = vrot.lane.b32.xlu0 %v1294, 127
        %v1297 = vpop.permute.xlu0 %1296
        %v1299 = vadd.f32 %v1291, %v1297
        %s1300 = sld [smem:[#allocation3 + $0x4b]]
        %v1301 = vstv %s1300
        %v1302 = vmul.f32 %v1301, %v492
        %1304 = vrot.lane.b32.xlu0 %v1302, 126
        %v1305 = vpop.permute.xlu0 %1304
        %v1307 = vadd.f32 %v1299, %v1305
        %s1308 = sld [smem:[#allocation3 + $0x6b]]
        %v1309 = vstv %s1308
        %v1310 = vmul.f32 %v1309, %v493
        %v1311 = vadd.f32 %v1307, %v1310
        %s1312 = sld [smem:[#allocation3 + $0x8b]]
        %v1313 = vstv %s1312
        %v1314 = vmul.f32 %v1313, %v493
        %1316 = vrot.lane.b32.xlu0 %v1314, 127
        %v1317 = vpop.permute.xlu0 %1316
        %v1319 = vadd.f32 %v1311, %v1317
        %s1320 = sld [smem:[#allocation3 + $0xab]]
        %v1321 = vstv %s1320
        %v1322 = vmul.f32 %v1321, %v493
        %1324 = vrot.lane.b32.xlu0 %v1322, 126
        %v1325 = vpop.permute.xlu0 %1324
        %v1327 = vadd.f32 %v1319, %v1325
        %s1328 = sld [smem:[#allocation3 + $0xcb]]
        %v1329 = vstv %s1328
        %v1330 = vmul.f32 %v1329, %v494
        %v1331 = vadd.f32 %v1327, %v1330
        %s1332 = sld [smem:[#allocation3 + $0xeb]]
        %v1333 = vstv %s1332
        %v1334 = vmul.f32 %v1333, %v494
        %1336 = vrot.lane.b32.xlu0 %v1334, 127
        %v1337 = vpop.permute.xlu0 %1336
        %v1339 = vadd.f32 %v1331, %v1337
        %s1340 = sld [smem:[#allocation3 + $0x10b]]
        %v1341 = vstv %s1340
        %v1342 = vmul.f32 %v1341, %v494
        %1344 = vrot.lane.b32.xlu0 %v1342, 126
        %v1345 = vpop.permute.xlu0 %1344
        %v1347 = vadd.f32 %v1339, %v1345
        %s1348 = sld [smem:[#allocation3 + $0x13]]
        %v1349 = vstv %s1348
        %v1350 = vmul.f32 %v1349, %v496
        %v1351 = vadd.f32 %v1347, %v1350
        %s1352 = sld [smem:[#allocation3 + $0x33]]
        %v1353 = vstv %s1352
        %v1354 = vmul.f32 %v1353, %v496
        %1356 = vrot.lane.b32.xlu0 %v1354, 127
        %v1357 = vpop.permute.xlu0 %1356
        %v1359 = vadd.f32 %v1351, %v1357
        %s1360 = sld [smem:[#allocation3 + $0x53]]
        %v1361 = vstv %s1360
        %v1362 = vmul.f32 %v1361, %v496
        %1364 = vrot.lane.b32.xlu0 %v1362, 126
        %v1365 = vpop.permute.xlu0 %1364
        %v1367 = vadd.f32 %v1359, %v1365
        %s1368 = sld [smem:[#allocation3 + $0x73]]
        %v1369 = vstv %s1368
        %v1370 = vmul.f32 %v1369, %v497
        %v1371 = vadd.f32 %v1367, %v1370
        %s1372 = sld [smem:[#allocation3 + $0x93]]
        %v1373 = vstv %s1372
        %v1374 = vmul.f32 %v1373, %v497
        %1376 = vrot.lane.b32.xlu0 %v1374, 127
        %v1377 = vpop.permute.xlu0 %1376
        %v1379 = vadd.f32 %v1371, %v1377
        %s1380 = sld [smem:[#allocation3 + $0xb3]]
        %v1381 = vstv %s1380
        %v1382 = vmul.f32 %v1381, %v497
        %1384 = vrot.lane.b32.xlu0 %v1382, 126
        %v1385 = vpop.permute.xlu0 %1384
        %v1387 = vadd.f32 %v1379, %v1385
        %s1388 = sld [smem:[#allocation3 + $0xd3]]
        %v1389 = vstv %s1388
        %v1390 = vmul.f32 %v1389, %v498
        %v1391 = vadd.f32 %v1387, %v1390
        %s1392 = sld [smem:[#allocation3 + $0xf3]]
        %v1393 = vstv %s1392
        %v1394 = vmul.f32 %v1393, %v498
        %1396 = vrot.lane.b32.xlu0 %v1394, 127
        %v1397 = vpop.permute.xlu0 %1396
        %v1399 = vadd.f32 %v1391, %v1397
        %s1400 = sld [smem:[#allocation3 + $0x113]]
        %v1401 = vstv %s1400
        %v1402 = vmul.f32 %v1401, %v498
        %1404 = vrot.lane.b32.xlu0 %v1402, 126
        %v1405 = vpop.permute.xlu0 %1404
        %v1407 = vadd.f32 %v1399, %v1405
        %s1408 = sld [smem:[#allocation3 + $0x1b]]
        %v1409 = vstv %s1408
        %v1410 = vmul.f32 %v1409, %v500
        %v1411 = vadd.f32 %v1407, %v1410
        %s1412 = sld [smem:[#allocation3 + $0x3b]]
        %v1413 = vstv %s1412
        %v1414 = vmul.f32 %v1413, %v500
        %1416 = vrot.lane.b32.xlu0 %v1414, 127
        %v1417 = vpop.permute.xlu0 %1416
        %v1419 = vadd.f32 %v1411, %v1417
        %s1420 = sld [smem:[#allocation3 + $0x5b]]
        %v1421 = vstv %s1420
        %v1422 = vmul.f32 %v1421, %v500
        %1424 = vrot.lane.b32.xlu0 %v1422, 126
        %v1425 = vpop.permute.xlu0 %1424
        %v1427 = vadd.f32 %v1419, %v1425
        %s1428 = sld [smem:[#allocation3 + $0x7b]]
        %v1429 = vstv %s1428
        %v1430 = vmul.f32 %v1429, %v501
        %v1431 = vadd.f32 %v1427, %v1430
        %s1432 = sld [smem:[#allocation3 + $0x9b]]
        %v1433 = vstv %s1432
        %v1434 = vmul.f32 %v1433, %v501
        %1436 = vrot.lane.b32.xlu0 %v1434, 127
        %v1437 = vpop.permute.xlu0 %1436
        %v1439 = vadd.f32 %v1431, %v1437
        %s1440 = sld [smem:[#allocation3 + $0xbb]]
        %v1441 = vstv %s1440
        %v1442 = vmul.f32 %v1441, %v501
        %1444 = vrot.lane.b32.xlu0 %v1442, 126
        %v1445 = vpop.permute.xlu0 %1444
        %v1447 = vadd.f32 %v1439, %v1445
        %s1448 = sld [smem:[#allocation3 + $0xdb]]
        %v1449 = vstv %s1448
        %v1450 = vmul.f32 %v1449, %v502
        %v1451 = vadd.f32 %v1447, %v1450
        %s1452 = sld [smem:[#allocation3 + $0xfb]]
        %v1453 = vstv %s1452
        %v1454 = vmul.f32 %v1453, %v502
        %1456 = vrot.lane.b32.xlu0 %v1454, 127
        %v1457 = vpop.permute.xlu0 %1456
        %v1459 = vadd.f32 %v1451, %v1457
        %s1460 = sld [smem:[#allocation3 + $0x11b]]
        %v1461 = vstv %s1460
        %v1462 = vmul.f32 %v1461, %v502
        %1464 = vrot.lane.b32.xlu0 %v1462, 126
        %v1465 = vpop.permute.xlu0 %1464
        %v1467 = vadd.f32 %v1459, %v1465
        %v1468 = vmax.f32 %v1467, 0.0
        %s1469 = scalar_lea.vmem %s319, 24 [#allocation7]
        %1470 = vst.msk [vmem:[%s1469] sm:$0xff] %vm743, %v1468
        %s1471 = sld [smem:[#allocation3 + $0x4]]
        %v1472 = vstv %s1471
        %v1473 = vmul.f32 %v1472, %v488
        %s1474 = sld [smem:[#allocation3 + $0x24]]
        %v1475 = vstv %s1474
        %v1476 = vmul.f32 %v1475, %v488
        %1478 = vrot.lane.b32.xlu0 %v1476, 127
        %v1479 = vpop.permute.xlu0 %1478
        %v1481 = vadd.f32 %v1473, %v1479
        %s1482 = sld [smem:[#allocation3 + $0x44]]
        %v1483 = vstv %s1482
        %v1484 = vmul.f32 %v1483, %v488
        %1486 = vrot.lane.b32.xlu0 %v1484, 126
        %v1487 = vpop.permute.xlu0 %1486
        %v1489 = vadd.f32 %v1481, %v1487
        %s1490 = sld [smem:[#allocation3 + $0x64]]
        %v1491 = vstv %s1490
        %v1492 = vmul.f32 %v1491, %v489
        %v1493 = vadd.f32 %v1489, %v1492
        %s1494 = sld [smem:[#allocation3 + $0x84]]
        %v1495 = vstv %s1494
        %v1496 = vmul.f32 %v1495, %v489
        %1498 = vrot.lane.b32.xlu0 %v1496, 127
        %v1499 = vpop.permute.xlu0 %1498
        %v1501 = vadd.f32 %v1493, %v1499
        %s1502 = sld [smem:[#allocation3 + $0xa4]]
        %v1503 = vstv %s1502
        %v1504 = vmul.f32 %v1503, %v489
        %1506 = vrot.lane.b32.xlu0 %v1504, 126
        %v1507 = vpop.permute.xlu0 %1506
        %v1509 = vadd.f32 %v1501, %v1507
        %s1510 = sld [smem:[#allocation3 + $0xc4]]
        %v1511 = vstv %s1510
        %v1512 = vmul.f32 %v1511, %v490
        %v1513 = vadd.f32 %v1509, %v1512
        %s1514 = sld [smem:[#allocation3 + $0xe4]]
        %v1515 = vstv %s1514
        %v1516 = vmul.f32 %v1515, %v490
        %1518 = vrot.lane.b32.xlu0 %v1516, 127
        %v1519 = vpop.permute.xlu0 %1518
        %v1521 = vadd.f32 %v1513, %v1519
        %s1522 = sld [smem:[#allocation3 + $0x104]]
        %v1523 = vstv %s1522
        %v1524 = vmul.f32 %v1523, %v490
        %1526 = vrot.lane.b32.xlu0 %v1524, 126
        %v1527 = vpop.permute.xlu0 %1526
        %v1529 = vadd.f32 %v1521, %v1527
        %s1530 = sld [smem:[#allocation3 + $0xc]]
        %v1531 = vstv %s1530
        %v1532 = vmul.f32 %v1531, %v492
        %v1533 = vadd.f32 %v1529, %v1532
        %s1534 = sld [smem:[#allocation3 + $0x2c]]
        %v1535 = vstv %s1534
        %v1536 = vmul.f32 %v1535, %v492
        %1538 = vrot.lane.b32.xlu0 %v1536, 127
        %v1539 = vpop.permute.xlu0 %1538
        %v1541 = vadd.f32 %v1533, %v1539
        %s1542 = sld [smem:[#allocation3 + $0x4c]]
        %v1543 = vstv %s1542
        %v1544 = vmul.f32 %v1543, %v492
        %1546 = vrot.lane.b32.xlu0 %v1544, 126
        %v1547 = vpop.permute.xlu0 %1546
        %v1549 = vadd.f32 %v1541, %v1547
        %s1550 = sld [smem:[#allocation3 + $0x6c]]
        %v1551 = vstv %s1550
        %v1552 = vmul.f32 %v1551, %v493
        %v1553 = vadd.f32 %v1549, %v1552
        %s1554 = sld [smem:[#allocation3 + $0x8c]]
        %v1555 = vstv %s1554
        %v1556 = vmul.f32 %v1555, %v493
        %1558 = vrot.lane.b32.xlu0 %v1556, 127
        %v1559 = vpop.permute.xlu0 %1558
        %v1561 = vadd.f32 %v1553, %v1559
        %s1562 = sld [smem:[#allocation3 + $0xac]]
        %v1563 = vstv %s1562
        %v1564 = vmul.f32 %v1563, %v493
        %1566 = vrot.lane.b32.xlu0 %v1564, 126
        %v1567 = vpop.permute.xlu0 %1566
        %v1569 = vadd.f32 %v1561, %v1567
        %s1570 = sld [smem:[#allocation3 + $0xcc]]
        %v1571 = vstv %s1570
        %v1572 = vmul.f32 %v1571, %v494
        %v1573 = vadd.f32 %v1569, %v1572
        %s1574 = sld [smem:[#allocation3 + $0xec]]
        %v1575 = vstv %s1574
        %v1576 = vmul.f32 %v1575, %v494
        %1578 = vrot.lane.b32.xlu0 %v1576, 127
        %v1579 = vpop.permute.xlu0 %1578
        %v1581 = vadd.f32 %v1573, %v1579
        %s1582 = sld [smem:[#allocation3 + $0x10c]]
        %v1583 = vstv %s1582
        %v1584 = vmul.f32 %v1583, %v494
        %1586 = vrot.lane.b32.xlu0 %v1584, 126
        %v1587 = vpop.permute.xlu0 %1586
        %v1589 = vadd.f32 %v1581, %v1587
        %s1590 = sld [smem:[#allocation3 + $0x14]]
        %v1591 = vstv %s1590
        %v1592 = vmul.f32 %v1591, %v496
        %v1593 = vadd.f32 %v1589, %v1592
        %s1594 = sld [smem:[#allocation3 + $0x34]]
        %v1595 = vstv %s1594
        %v1596 = vmul.f32 %v1595, %v496
        %1598 = vrot.lane.b32.xlu0 %v1596, 127
        %v1599 = vpop.permute.xlu0 %1598
        %v1601 = vadd.f32 %v1593, %v1599
        %s1602 = sld [smem:[#allocation3 + $0x54]]
        %v1603 = vstv %s1602
        %v1604 = vmul.f32 %v1603, %v496
        %1606 = vrot.lane.b32.xlu0 %v1604, 126
        %v1607 = vpop.permute.xlu0 %1606
        %v1609 = vadd.f32 %v1601, %v1607
        %s1610 = sld [smem:[#allocation3 + $0x74]]
        %v1611 = vstv %s1610
        %v1612 = vmul.f32 %v1611, %v497
        %v1613 = vadd.f32 %v1609, %v1612
        %s1614 = sld [smem:[#allocation3 + $0x94]]
        %v1615 = vstv %s1614
        %v1616 = vmul.f32 %v1615, %v497
        %1618 = vrot.lane.b32.xlu0 %v1616, 127
        %v1619 = vpop.permute.xlu0 %1618
        %v1621 = vadd.f32 %v1613, %v1619
        %s1622 = sld [smem:[#allocation3 + $0xb4]]
        %v1623 = vstv %s1622
        %v1624 = vmul.f32 %v1623, %v497
        %1626 = vrot.lane.b32.xlu0 %v1624, 126
        %v1627 = vpop.permute.xlu0 %1626
        %v1629 = vadd.f32 %v1621, %v1627
        %s1630 = sld [smem:[#allocation3 + $0xd4]]
        %v1631 = vstv %s1630
        %v1632 = vmul.f32 %v1631, %v498
        %v1633 = vadd.f32 %v1629, %v1632
        %s1634 = sld [smem:[#allocation3 + $0xf4]]
        %v1635 = vstv %s1634
        %v1636 = vmul.f32 %v1635, %v498
        %1638 = vrot.lane.b32.xlu0 %v1636, 127
        %v1639 = vpop.permute.xlu0 %1638
        %v1641 = vadd.f32 %v1633, %v1639
        %s1642 = sld [smem:[#allocation3 + $0x114]]
        %v1643 = vstv %s1642
        %v1644 = vmul.f32 %v1643, %v498
        %1646 = vrot.lane.b32.xlu0 %v1644, 126
        %v1647 = vpop.permute.xlu0 %1646
        %v1649 = vadd.f32 %v1641, %v1647
        %s1650 = sld [smem:[#allocation3 + $0x1c]]
        %v1651 = vstv %s1650
        %v1652 = vmul.f32 %v1651, %v500
        %v1653 = vadd.f32 %v1649, %v1652
        %s1654 = sld [smem:[#allocation3 + $0x3c]]
        %v1655 = vstv %s1654
        %v1656 = vmul.f32 %v1655, %v500
        %1658 = vrot.lane.b32.xlu0 %v1656, 127
        %v1659 = vpop.permute.xlu0 %1658
        %v1661 = vadd.f32 %v1653, %v1659
        %s1662 = sld [smem:[#allocation3 + $0x5c]]
        %v1663 = vstv %s1662
        %v1664 = vmul.f32 %v1663, %v500
        %1666 = vrot.lane.b32.xlu0 %v1664, 126
        %v1667 = vpop.permute.xlu0 %1666
        %v1669 = vadd.f32 %v1661, %v1667
        %s1670 = sld [smem:[#allocation3 + $0x7c]]
        %v1671 = vstv %s1670
        %v1672 = vmul.f32 %v1671, %v501
        %v1673 = vadd.f32 %v1669, %v1672
        %s1674 = sld [smem:[#allocation3 + $0x9c]]
        %v1675 = vstv %s1674
        %v1676 = vmul.f32 %v1675, %v501
        %1678 = vrot.lane.b32.xlu0 %v1676, 127
        %v1679 = vpop.permute.xlu0 %1678
        %v1681 = vadd.f32 %v1673, %v1679
        %s1682 = sld [smem:[#allocation3 + $0xbc]]
        %v1683 = vstv %s1682
        %v1684 = vmul.f32 %v1683, %v501
        %1686 = vrot.lane.b32.xlu0 %v1684, 126
        %v1687 = vpop.permute.xlu0 %1686
        %v1689 = vadd.f32 %v1681, %v1687
        %s1690 = sld [smem:[#allocation3 + $0xdc]]
        %v1691 = vstv %s1690
        %v1692 = vmul.f32 %v1691, %v502
        %v1693 = vadd.f32 %v1689, %v1692
        %s1694 = sld [smem:[#allocation3 + $0xfc]]
        %v1695 = vstv %s1694
        %v1696 = vmul.f32 %v1695, %v502
        %1698 = vrot.lane.b32.xlu0 %v1696, 127
        %v1699 = vpop.permute.xlu0 %1698
        %v1701 = vadd.f32 %v1693, %v1699
        %s1702 = sld [smem:[#allocation3 + $0x11c]]
        %v1703 = vstv %s1702
        %v1704 = vmul.f32 %v1703, %v502
        %1706 = vrot.lane.b32.xlu0 %v1704, 126
        %v1707 = vpop.permute.xlu0 %1706
        %v1709 = vadd.f32 %v1701, %v1707
        %v1710 = vmax.f32 %v1709, 0.0
        %s1711 = scalar_lea.vmem %s319, 32 [#allocation7]
        %1712 = vst.msk [vmem:[%s1711] sm:$0xff] %vm743, %v1710
        %s1713 = sld [smem:[#allocation3 + $0x5]]
        %v1714 = vstv %s1713
        %v1715 = vmul.f32 %v1714, %v488
        %s1716 = sld [smem:[#allocation3 + $0x25]]
        %v1717 = vstv %s1716
        %v1718 = vmul.f32 %v1717, %v488
        %1720 = vrot.lane.b32.xlu0 %v1718, 127
        %v1721 = vpop.permute.xlu0 %1720
        %v1723 = vadd.f32 %v1715, %v1721
        %s1724 = sld [smem:[#allocation3 + $0x45]]
        %v1725 = vstv %s1724
        %v1726 = vmul.f32 %v1725, %v488
        %1728 = vrot.lane.b32.xlu0 %v1726, 126
        %v1729 = vpop.permute.xlu0 %1728
        %v1731 = vadd.f32 %v1723, %v1729
        %s1732 = sld [smem:[#allocation3 + $0x65]]
        %v1733 = vstv %s1732
        %v1734 = vmul.f32 %v1733, %v489
        %v1735 = vadd.f32 %v1731, %v1734
        %s1736 = sld [smem:[#allocation3 + $0x85]]
        %v1737 = vstv %s1736
        %v1738 = vmul.f32 %v1737, %v489
        %1740 = vrot.lane.b32.xlu0 %v1738, 127
        %v1741 = vpop.permute.xlu0 %1740
        %v1743 = vadd.f32 %v1735, %v1741
        %s1744 = sld [smem:[#allocation3 + $0xa5]]
        %v1745 = vstv %s1744
        %v1746 = vmul.f32 %v1745, %v489
        %1748 = vrot.lane.b32.xlu0 %v1746, 126
        %v1749 = vpop.permute.xlu0 %1748
        %v1751 = vadd.f32 %v1743, %v1749
        %s1752 = sld [smem:[#allocation3 + $0xc5]]
        %v1753 = vstv %s1752
        %v1754 = vmul.f32 %v1753, %v490
        %v1755 = vadd.f32 %v1751, %v1754
        %s1756 = sld [smem:[#allocation3 + $0xe5]]
        %v1757 = vstv %s1756
        %v1758 = vmul.f32 %v1757, %v490
        %1760 = vrot.lane.b32.xlu0 %v1758, 127
        %v1761 = vpop.permute.xlu0 %1760
        %v1763 = vadd.f32 %v1755, %v1761
        %s1764 = sld [smem:[#allocation3 + $0x105]]
        %v1765 = vstv %s1764
        %v1766 = vmul.f32 %v1765, %v490
        %1768 = vrot.lane.b32.xlu0 %v1766, 126
        %v1769 = vpop.permute.xlu0 %1768
        %v1771 = vadd.f32 %v1763, %v1769
        %s1772 = sld [smem:[#allocation3 + $0xd]]
        %v1773 = vstv %s1772
        %v1774 = vmul.f32 %v1773, %v492
        %v1775 = vadd.f32 %v1771, %v1774
        %s1776 = sld [smem:[#allocation3 + $0x2d]]
        %v1777 = vstv %s1776
        %v1778 = vmul.f32 %v1777, %v492
        %1780 = vrot.lane.b32.xlu0 %v1778, 127
        %v1781 = vpop.permute.xlu0 %1780
        %v1783 = vadd.f32 %v1775, %v1781
        %s1784 = sld [smem:[#allocation3 + $0x4d]]
        %v1785 = vstv %s1784
        %v1786 = vmul.f32 %v1785, %v492
        %1788 = vrot.lane.b32.xlu0 %v1786, 126
        %v1789 = vpop.permute.xlu0 %1788
        %v1791 = vadd.f32 %v1783, %v1789
        %s1792 = sld [smem:[#allocation3 + $0x6d]]
        %v1793 = vstv %s1792
        %v1794 = vmul.f32 %v1793, %v493
        %v1795 = vadd.f32 %v1791, %v1794
        %s1796 = sld [smem:[#allocation3 + $0x8d]]
        %v1797 = vstv %s1796
        %v1798 = vmul.f32 %v1797, %v493
        %1800 = vrot.lane.b32.xlu0 %v1798, 127
        %v1801 = vpop.permute.xlu0 %1800
        %v1803 = vadd.f32 %v1795, %v1801
        %s1804 = sld [smem:[#allocation3 + $0xad]]
        %v1805 = vstv %s1804
        %v1806 = vmul.f32 %v1805, %v493
        %1808 = vrot.lane.b32.xlu0 %v1806, 126
        %v1809 = vpop.permute.xlu0 %1808
        %v1811 = vadd.f32 %v1803, %v1809
        %s1812 = sld [smem:[#allocation3 + $0xcd]]
        %v1813 = vstv %s1812
        %v1814 = vmul.f32 %v1813, %v494
        %v1815 = vadd.f32 %v1811, %v1814
        %s1816 = sld [smem:[#allocation3 + $0xed]]
        %v1817 = vstv %s1816
        %v1818 = vmul.f32 %v1817, %v494
        %1820 = vrot.lane.b32.xlu0 %v1818, 127
        %v1821 = vpop.permute.xlu0 %1820
        %v1823 = vadd.f32 %v1815, %v1821
        %s1824 = sld [smem:[#allocation3 + $0x10d]]
        %v1825 = vstv %s1824
        %v1826 = vmul.f32 %v1825, %v494
        %1828 = vrot.lane.b32.xlu0 %v1826, 126
        %v1829 = vpop.permute.xlu0 %1828
        %v1831 = vadd.f32 %v1823, %v1829
        %s1832 = sld [smem:[#allocation3 + $0x15]]
        %v1833 = vstv %s1832
        %v1834 = vmul.f32 %v1833, %v496
        %v1835 = vadd.f32 %v1831, %v1834
        %s1836 = sld [smem:[#allocation3 + $0x35]]
        %v1837 = vstv %s1836
        %v1838 = vmul.f32 %v1837, %v496
        %1840 = vrot.lane.b32.xlu0 %v1838, 127
        %v1841 = vpop.permute.xlu0 %1840
        %v1843 = vadd.f32 %v1835, %v1841
        %s1844 = sld [smem:[#allocation3 + $0x55]]
        %v1845 = vstv %s1844
        %v1846 = vmul.f32 %v1845, %v496
        %1848 = vrot.lane.b32.xlu0 %v1846, 126
        %v1849 = vpop.permute.xlu0 %1848
        %v1851 = vadd.f32 %v1843, %v1849
        %s1852 = sld [smem:[#allocation3 + $0x75]]
        %v1853 = vstv %s1852
        %v1854 = vmul.f32 %v1853, %v497
        %v1855 = vadd.f32 %v1851, %v1854
        %s1856 = sld [smem:[#allocation3 + $0x95]]
        %v1857 = vstv %s1856
        %v1858 = vmul.f32 %v1857, %v497
        %1860 = vrot.lane.b32.xlu0 %v1858, 127
        %v1861 = vpop.permute.xlu0 %1860
        %v1863 = vadd.f32 %v1855, %v1861
        %s1864 = sld [smem:[#allocation3 + $0xb5]]
        %v1865 = vstv %s1864
        %v1866 = vmul.f32 %v1865, %v497
        %1868 = vrot.lane.b32.xlu0 %v1866, 126
        %v1869 = vpop.permute.xlu0 %1868
        %v1871 = vadd.f32 %v1863, %v1869
        %s1872 = sld [smem:[#allocation3 + $0xd5]]
        %v1873 = vstv %s1872
        %v1874 = vmul.f32 %v1873, %v498
        %v1875 = vadd.f32 %v1871, %v1874
        %s1876 = sld [smem:[#allocation3 + $0xf5]]
        %v1877 = vstv %s1876
        %v1878 = vmul.f32 %v1877, %v498
        %1880 = vrot.lane.b32.xlu0 %v1878, 127
        %v1881 = vpop.permute.xlu0 %1880
        %v1883 = vadd.f32 %v1875, %v1881
        %s1884 = sld [smem:[#allocation3 + $0x115]]
        %v1885 = vstv %s1884
        %v1886 = vmul.f32 %v1885, %v498
        %1888 = vrot.lane.b32.xlu0 %v1886, 126
        %v1889 = vpop.permute.xlu0 %1888
        %v1891 = vadd.f32 %v1883, %v1889
        %s1892 = sld [smem:[#allocation3 + $0x1d]]
        %v1893 = vstv %s1892
        %v1894 = vmul.f32 %v1893, %v500
        %v1895 = vadd.f32 %v1891, %v1894
        %s1896 = sld [smem:[#allocation3 + $0x3d]]
        %v1897 = vstv %s1896
        %v1898 = vmul.f32 %v1897, %v500
        %1900 = vrot.lane.b32.xlu0 %v1898, 127
        %v1901 = vpop.permute.xlu0 %1900
        %v1903 = vadd.f32 %v1895, %v1901
        %s1904 = sld [smem:[#allocation3 + $0x5d]]
        %v1905 = vstv %s1904
        %v1906 = vmul.f32 %v1905, %v500
        %1908 = vrot.lane.b32.xlu0 %v1906, 126
        %v1909 = vpop.permute.xlu0 %1908
        %v1911 = vadd.f32 %v1903, %v1909
        %s1912 = sld [smem:[#allocation3 + $0x7d]]
        %v1913 = vstv %s1912
        %v1914 = vmul.f32 %v1913, %v501
        %v1915 = vadd.f32 %v1911, %v1914
        %s1916 = sld [smem:[#allocation3 + $0x9d]]
        %v1917 = vstv %s1916
        %v1918 = vmul.f32 %v1917, %v501
        %1920 = vrot.lane.b32.xlu0 %v1918, 127
        %v1921 = vpop.permute.xlu0 %1920
        %v1923 = vadd.f32 %v1915, %v1921
        %s1924 = sld [smem:[#allocation3 + $0xbd]]
        %v1925 = vstv %s1924
        %v1926 = vmul.f32 %v1925, %v501
        %1928 = vrot.lane.b32.xlu0 %v1926, 126
        %v1929 = vpop.permute.xlu0 %1928
        %v1931 = vadd.f32 %v1923, %v1929
        %s1932 = sld [smem:[#allocation3 + $0xdd]]
        %v1933 = vstv %s1932
        %v1934 = vmul.f32 %v1933, %v502
        %v1935 = vadd.f32 %v1931, %v1934
        %s1936 = sld [smem:[#allocation3 + $0xfd]]
        %v1937 = vstv %s1936
        %v1938 = vmul.f32 %v1937, %v502
        %1940 = vrot.lane.b32.xlu0 %v1938, 127
        %v1941 = vpop.permute.xlu0 %1940
        %v1943 = vadd.f32 %v1935, %v1941
        %s1944 = sld [smem:[#allocation3 + $0x11d]]
        %v1945 = vstv %s1944
        %v1946 = vmul.f32 %v1945, %v502
        %1948 = vrot.lane.b32.xlu0 %v1946, 126
        %v1949 = vpop.permute.xlu0 %1948
        %v1951 = vadd.f32 %v1943, %v1949
        %v1952 = vmax.f32 %v1951, 0.0
        %s1953 = scalar_lea.vmem %s319, 40 [#allocation7]
        %1954 = vst.msk [vmem:[%s1953] sm:$0xff] %vm743, %v1952
        %s1955 = sld [smem:[#allocation3 + $0x6]]
        %v1956 = vstv %s1955
        %v1957 = vmul.f32 %v1956, %v488
        %s1958 = sld [smem:[#allocation3 + $0x26]]
        %v1959 = vstv %s1958
        %v1960 = vmul.f32 %v1959, %v488
        %1962 = vrot.lane.b32.xlu0 %v1960, 127
        %v1963 = vpop.permute.xlu0 %1962
        %v1965 = vadd.f32 %v1957, %v1963
        %s1966 = sld [smem:[#allocation3 + $0x46]]
        %v1967 = vstv %s1966
        %v1968 = vmul.f32 %v1967, %v488
        %1970 = vrot.lane.b32.xlu0 %v1968, 126
        %v1971 = vpop.permute.xlu0 %1970
        %v1973 = vadd.f32 %v1965, %v1971
        %s1974 = sld [smem:[#allocation3 + $0x66]]
        %v1975 = vstv %s1974
        %v1976 = vmul.f32 %v1975, %v489
        %v1977 = vadd.f32 %v1973, %v1976
        %s1978 = sld [smem:[#allocation3 + $0x86]]
        %v1979 = vstv %s1978
        %v1980 = vmul.f32 %v1979, %v489
        %1982 = vrot.lane.b32.xlu0 %v1980, 127
        %v1983 = vpop.permute.xlu0 %1982
        %v1985 = vadd.f32 %v1977, %v1983
        %s1986 = sld [smem:[#allocation3 + $0xa6]]
        %v1987 = vstv %s1986
        %v1988 = vmul.f32 %v1987, %v489
        %1990 = vrot.lane.b32.xlu0 %v1988, 126
        %v1991 = vpop.permute.xlu0 %1990
        %v1993 = vadd.f32 %v1985, %v1991
        %s1994 = sld [smem:[#allocation3 + $0xc6]]
        %v1995 = vstv %s1994
        %v1996 = vmul.f32 %v1995, %v490
        %v1997 = vadd.f32 %v1993, %v1996
        %s1998 = sld [smem:[#allocation3 + $0xe6]]
        %v1999 = vstv %s1998
        %v2000 = vmul.f32 %v1999, %v490
        %2002 = vrot.lane.b32.xlu0 %v2000, 127
        %v2003 = vpop.permute.xlu0 %2002
        %v2005 = vadd.f32 %v1997, %v2003
        %s2006 = sld [smem:[#allocation3 + $0x106]]
        %v2007 = vstv %s2006
        %v2008 = vmul.f32 %v2007, %v490
        %2010 = vrot.lane.b32.xlu0 %v2008, 126
        %v2011 = vpop.permute.xlu0 %2010
        %v2013 = vadd.f32 %v2005, %v2011
        %s2014 = sld [smem:[#allocation3 + $0xe]]
        %v2015 = vstv %s2014
        %v2016 = vmul.f32 %v2015, %v492
        %v2017 = vadd.f32 %v2013, %v2016
        %s2018 = sld [smem:[#allocation3 + $0x2e]]
        %v2019 = vstv %s2018
        %v2020 = vmul.f32 %v2019, %v492
        %2022 = vrot.lane.b32.xlu0 %v2020, 127
        %v2023 = vpop.permute.xlu0 %2022
        %v2025 = vadd.f32 %v2017, %v2023
        %s2026 = sld [smem:[#allocation3 + $0x4e]]
        %v2027 = vstv %s2026
        %v2028 = vmul.f32 %v2027, %v492
        %2030 = vrot.lane.b32.xlu0 %v2028, 126
        %v2031 = vpop.permute.xlu0 %2030
        %v2033 = vadd.f32 %v2025, %v2031
        %s2034 = sld [smem:[#allocation3 + $0x6e]]
        %v2035 = vstv %s2034
        %v2036 = vmul.f32 %v2035, %v493
        %v2037 = vadd.f32 %v2033, %v2036
        %s2038 = sld [smem:[#allocation3 + $0x8e]]
        %v2039 = vstv %s2038
        %v2040 = vmul.f32 %v2039, %v493
        %2042 = vrot.lane.b32.xlu0 %v2040, 127
        %v2043 = vpop.permute.xlu0 %2042
        %v2045 = vadd.f32 %v2037, %v2043
        %s2046 = sld [smem:[#allocation3 + $0xae]]
        %v2047 = vstv %s2046
        %v2048 = vmul.f32 %v2047, %v493
        %2050 = vrot.lane.b32.xlu0 %v2048, 126
        %v2051 = vpop.permute.xlu0 %2050
        %v2053 = vadd.f32 %v2045, %v2051
        %s2054 = sld [smem:[#allocation3 + $0xce]]
        %v2055 = vstv %s2054
        %v2056 = vmul.f32 %v2055, %v494
        %v2057 = vadd.f32 %v2053, %v2056
        %s2058 = sld [smem:[#allocation3 + $0xee]]
        %v2059 = vstv %s2058
        %v2060 = vmul.f32 %v2059, %v494
        %2062 = vrot.lane.b32.xlu0 %v2060, 127
        %v2063 = vpop.permute.xlu0 %2062
        %v2065 = vadd.f32 %v2057, %v2063
        %s2066 = sld [smem:[#allocation3 + $0x10e]]
        %v2067 = vstv %s2066
        %v2068 = vmul.f32 %v2067, %v494
        %2070 = vrot.lane.b32.xlu0 %v2068, 126
        %v2071 = vpop.permute.xlu0 %2070
        %v2073 = vadd.f32 %v2065, %v2071
        %s2074 = sld [smem:[#allocation3 + $0x16]]
        %v2075 = vstv %s2074
        %v2076 = vmul.f32 %v2075, %v496
        %v2077 = vadd.f32 %v2073, %v2076
        %s2078 = sld [smem:[#allocation3 + $0x36]]
        %v2079 = vstv %s2078
        %v2080 = vmul.f32 %v2079, %v496
        %2082 = vrot.lane.b32.xlu0 %v2080, 127
        %v2083 = vpop.permute.xlu0 %2082
        %v2085 = vadd.f32 %v2077, %v2083
        %s2086 = sld [smem:[#allocation3 + $0x56]]
        %v2087 = vstv %s2086
        %v2088 = vmul.f32 %v2087, %v496
        %2090 = vrot.lane.b32.xlu0 %v2088, 126
        %v2091 = vpop.permute.xlu0 %2090
        %v2093 = vadd.f32 %v2085, %v2091
        %s2094 = sld [smem:[#allocation3 + $0x76]]
        %v2095 = vstv %s2094
        %v2096 = vmul.f32 %v2095, %v497
        %v2097 = vadd.f32 %v2093, %v2096
        %s2098 = sld [smem:[#allocation3 + $0x96]]
        %v2099 = vstv %s2098
        %v2100 = vmul.f32 %v2099, %v497
        %2102 = vrot.lane.b32.xlu0 %v2100, 127
        %v2103 = vpop.permute.xlu0 %2102
        %v2105 = vadd.f32 %v2097, %v2103
        %s2106 = sld [smem:[#allocation3 + $0xb6]]
        %v2107 = vstv %s2106
        %v2108 = vmul.f32 %v2107, %v497
        %2110 = vrot.lane.b32.xlu0 %v2108, 126
        %v2111 = vpop.permute.xlu0 %2110
        %v2113 = vadd.f32 %v2105, %v2111
        %s2114 = sld [smem:[#allocation3 + $0xd6]]
        %v2115 = vstv %s2114
        %v2116 = vmul.f32 %v2115, %v498
        %v2117 = vadd.f32 %v2113, %v2116
        %s2118 = sld [smem:[#allocation3 + $0xf6]]
        %v2119 = vstv %s2118
        %v2120 = vmul.f32 %v2119, %v498
        %2122 = vrot.lane.b32.xlu0 %v2120, 127
        %v2123 = vpop.permute.xlu0 %2122
        %v2125 = vadd.f32 %v2117, %v2123
        %s2126 = sld [smem:[#allocation3 + $0x116]]
        %v2127 = vstv %s2126
        %v2128 = vmul.f32 %v2127, %v498
        %2130 = vrot.lane.b32.xlu0 %v2128, 126
        %v2131 = vpop.permute.xlu0 %2130
        %v2133 = vadd.f32 %v2125, %v2131
        %s2134 = sld [smem:[#allocation3 + $0x1e]]
        %v2135 = vstv %s2134
        %v2136 = vmul.f32 %v2135, %v500
        %v2137 = vadd.f32 %v2133, %v2136
        %s2138 = sld [smem:[#allocation3 + $0x3e]]
        %v2139 = vstv %s2138
        %v2140 = vmul.f32 %v2139, %v500
        %2142 = vrot.lane.b32.xlu0 %v2140, 127
        %v2143 = vpop.permute.xlu0 %2142
        %v2145 = vadd.f32 %v2137, %v2143
        %s2146 = sld [smem:[#allocation3 + $0x5e]]
        %v2147 = vstv %s2146
        %v2148 = vmul.f32 %v2147, %v500
        %2150 = vrot.lane.b32.xlu0 %v2148, 126
        %v2151 = vpop.permute.xlu0 %2150
        %v2153 = vadd.f32 %v2145, %v2151
        %s2154 = sld [smem:[#allocation3 + $0x7e]]
        %v2155 = vstv %s2154
        %v2156 = vmul.f32 %v2155, %v501
        %v2157 = vadd.f32 %v2153, %v2156
        %s2158 = sld [smem:[#allocation3 + $0x9e]]
        %v2159 = vstv %s2158
        %v2160 = vmul.f32 %v2159, %v501
        %2162 = vrot.lane.b32.xlu0 %v2160, 127
        %v2163 = vpop.permute.xlu0 %2162
        %v2165 = vadd.f32 %v2157, %v2163
        %s2166 = sld [smem:[#allocation3 + $0xbe]]
        %v2167 = vstv %s2166
        %v2168 = vmul.f32 %v2167, %v501
        %2170 = vrot.lane.b32.xlu0 %v2168, 126
        %v2171 = vpop.permute.xlu0 %2170
        %v2173 = vadd.f32 %v2165, %v2171
        %s2174 = sld [smem:[#allocation3 + $0xde]]
        %v2175 = vstv %s2174
        %v2176 = vmul.f32 %v2175, %v502
        %v2177 = vadd.f32 %v2173, %v2176
        %s2178 = sld [smem:[#allocation3 + $0xfe]]
        %v2179 = vstv %s2178
        %v2180 = vmul.f32 %v2179, %v502
        %2182 = vrot.lane.b32.xlu0 %v2180, 127
        %v2183 = vpop.permute.xlu0 %2182
        %v2185 = vadd.f32 %v2177, %v2183
        %s2186 = sld [smem:[#allocation3 + $0x11e]]
        %v2187 = vstv %s2186
        %v2188 = vmul.f32 %v2187, %v502
        %2190 = vrot.lane.b32.xlu0 %v2188, 126
        %v2191 = vpop.permute.xlu0 %2190
        %v2193 = vadd.f32 %v2185, %v2191
        %v2194 = vmax.f32 %v2193, 0.0
        %s2195 = scalar_lea.vmem %s319, 48 [#allocation7]
        %2196 = vst.msk [vmem:[%s2195] sm:$0xff] %vm743, %v2194
        %s2197 = sld [smem:[#allocation3 + $0x7]]
        %v2198 = vstv %s2197
        %v2199 = vmul.f32 %v2198, %v488
        %s2200 = sld [smem:[#allocation3 + $0x27]]
        %v2201 = vstv %s2200
        %v2202 = vmul.f32 %v2201, %v488
        %2204 = vrot.lane.b32.xlu0 %v2202, 127
        %v2205 = vpop.permute.xlu0 %2204
        %v2207 = vadd.f32 %v2199, %v2205
        %s2208 = sld [smem:[#allocation3 + $0x47]]
        %v2209 = vstv %s2208
        %v2210 = vmul.f32 %v2209, %v488
        %2212 = vrot.lane.b32.xlu0 %v2210, 126
        %v2213 = vpop.permute.xlu0 %2212
        %v2215 = vadd.f32 %v2207, %v2213
        %s2216 = sld [smem:[#allocation3 + $0x67]]
        %v2217 = vstv %s2216
        %v2218 = vmul.f32 %v2217, %v489
        %v2219 = vadd.f32 %v2215, %v2218
        %s2220 = sld [smem:[#allocation3 + $0x87]]
        %v2221 = vstv %s2220
        %v2222 = vmul.f32 %v2221, %v489
        %2224 = vrot.lane.b32.xlu0 %v2222, 127
        %v2225 = vpop.permute.xlu0 %2224
        %v2227 = vadd.f32 %v2219, %v2225
        %s2228 = sld [smem:[#allocation3 + $0xa7]]
        %v2229 = vstv %s2228
        %v2230 = vmul.f32 %v2229, %v489
        %2232 = vrot.lane.b32.xlu0 %v2230, 126
        %v2233 = vpop.permute.xlu0 %2232
        %v2235 = vadd.f32 %v2227, %v2233
        %s2236 = sld [smem:[#allocation3 + $0xc7]]
        %v2237 = vstv %s2236
        %v2238 = vmul.f32 %v2237, %v490
        %v2239 = vadd.f32 %v2235, %v2238
        %s2240 = sld [smem:[#allocation3 + $0xe7]]
        %v2241 = vstv %s2240
        %v2242 = vmul.f32 %v2241, %v490
        %2244 = vrot.lane.b32.xlu0 %v2242, 127
        %v2245 = vpop.permute.xlu0 %2244
        %v2247 = vadd.f32 %v2239, %v2245
        %s2248 = sld [smem:[#allocation3 + $0x107]]
        %v2249 = vstv %s2248
        %v2250 = vmul.f32 %v2249, %v490
        %2252 = vrot.lane.b32.xlu0 %v2250, 126
        %v2253 = vpop.permute.xlu0 %2252
        %v2255 = vadd.f32 %v2247, %v2253
        %s2256 = sld [smem:[#allocation3 + $0xf]]
        %v2257 = vstv %s2256
        %v2258 = vmul.f32 %v2257, %v492
        %v2259 = vadd.f32 %v2255, %v2258
        %s2260 = sld [smem:[#allocation3 + $0x2f]]
        %v2261 = vstv %s2260
        %v2262 = vmul.f32 %v2261, %v492
        %2264 = vrot.lane.b32.xlu0 %v2262, 127
        %v2265 = vpop.permute.xlu0 %2264
        %v2267 = vadd.f32 %v2259, %v2265
        %s2268 = sld [smem:[#allocation3 + $0x4f]]
        %v2269 = vstv %s2268
        %v2270 = vmul.f32 %v2269, %v492
        %2272 = vrot.lane.b32.xlu0 %v2270, 126
        %v2273 = vpop.permute.xlu0 %2272
        %v2275 = vadd.f32 %v2267, %v2273
        %s2276 = sld [smem:[#allocation3 + $0x6f]]
        %v2277 = vstv %s2276
        %v2278 = vmul.f32 %v2277, %v493
        %v2279 = vadd.f32 %v2275, %v2278
        %s2280 = sld [smem:[#allocation3 + $0x8f]]
        %v2281 = vstv %s2280
        %v2282 = vmul.f32 %v2281, %v493
        %2284 = vrot.lane.b32.xlu0 %v2282, 127
        %v2285 = vpop.permute.xlu0 %2284
        %v2287 = vadd.f32 %v2279, %v2285
        %s2288 = sld [smem:[#allocation3 + $0xaf]]
        %v2289 = vstv %s2288
        %v2290 = vmul.f32 %v2289, %v493
        %2292 = vrot.lane.b32.xlu0 %v2290, 126
        %v2293 = vpop.permute.xlu0 %2292
        %v2295 = vadd.f32 %v2287, %v2293
        %s2296 = sld [smem:[#allocation3 + $0xcf]]
        %v2297 = vstv %s2296
        %v2298 = vmul.f32 %v2297, %v494
        %v2299 = vadd.f32 %v2295, %v2298
        %s2300 = sld [smem:[#allocation3 + $0xef]]
        %v2301 = vstv %s2300
        %v2302 = vmul.f32 %v2301, %v494
        %2304 = vrot.lane.b32.xlu0 %v2302, 127
        %v2305 = vpop.permute.xlu0 %2304
        %v2307 = vadd.f32 %v2299, %v2305
        %s2308 = sld [smem:[#allocation3 + $0x10f]]
        %v2309 = vstv %s2308
        %v2310 = vmul.f32 %v2309, %v494
        %2312 = vrot.lane.b32.xlu0 %v2310, 126
        %v2313 = vpop.permute.xlu0 %2312
        %v2315 = vadd.f32 %v2307, %v2313
        %s2316 = sld [smem:[#allocation3 + $0x17]]
        %v2317 = vstv %s2316
        %v2318 = vmul.f32 %v2317, %v496
        %v2319 = vadd.f32 %v2315, %v2318
        %s2320 = sld [smem:[#allocation3 + $0x37]]
        %v2321 = vstv %s2320
        %v2322 = vmul.f32 %v2321, %v496
        %2324 = vrot.lane.b32.xlu0 %v2322, 127
        %v2325 = vpop.permute.xlu0 %2324
        %v2327 = vadd.f32 %v2319, %v2325
        %s2328 = sld [smem:[#allocation3 + $0x57]]
        %v2329 = vstv %s2328
        %v2330 = vmul.f32 %v2329, %v496
        %2332 = vrot.lane.b32.xlu0 %v2330, 126
        %v2333 = vpop.permute.xlu0 %2332
        %v2335 = vadd.f32 %v2327, %v2333
        %s2336 = sld [smem:[#allocation3 + $0x77]]
        %v2337 = vstv %s2336
        %v2338 = vmul.f32 %v2337, %v497
        %v2339 = vadd.f32 %v2335, %v2338
        %s2340 = sld [smem:[#allocation3 + $0x97]]
        %v2341 = vstv %s2340
        %v2342 = vmul.f32 %v2341, %v497
        %2344 = vrot.lane.b32.xlu0 %v2342, 127
        %v2345 = vpop.permute.xlu0 %2344
        %v2347 = vadd.f32 %v2339, %v2345
        %s2348 = sld [smem:[#allocation3 + $0xb7]]
        %v2349 = vstv %s2348
        %v2350 = vmul.f32 %v2349, %v497
        %2352 = vrot.lane.b32.xlu0 %v2350, 126
        %v2353 = vpop.permute.xlu0 %2352
        %v2355 = vadd.f32 %v2347, %v2353
        %s2356 = sld [smem:[#allocation3 + $0xd7]]
        %v2357 = vstv %s2356
        %v2358 = vmul.f32 %v2357, %v498
        %v2359 = vadd.f32 %v2355, %v2358
        %s2360 = sld [smem:[#allocation3 + $0xf7]]
        %v2361 = vstv %s2360
        %v2362 = vmul.f32 %v2361, %v498
        %2364 = vrot.lane.b32.xlu0 %v2362, 127
        %v2365 = vpop.permute.xlu0 %2364
        %v2367 = vadd.f32 %v2359, %v2365
        %s2368 = sld [smem:[#allocation3 + $0x117]]
        %v2369 = vstv %s2368
        %v2370 = vmul.f32 %v2369, %v498
        %2372 = vrot.lane.b32.xlu0 %v2370, 126
        %v2373 = vpop.permute.xlu0 %2372
        %v2375 = vadd.f32 %v2367, %v2373
        %s2376 = sld [smem:[#allocation3 + $0x1f]]
        %v2377 = vstv %s2376
        %v2378 = vmul.f32 %v2377, %v500
        %v2379 = vadd.f32 %v2375, %v2378
        %s2380 = sld [smem:[#allocation3 + $0x3f]]
        %v2381 = vstv %s2380
        %v2382 = vmul.f32 %v2381, %v500
        %2384 = vrot.lane.b32.xlu0 %v2382, 127
        %v2385 = vpop.permute.xlu0 %2384
        %v2387 = vadd.f32 %v2379, %v2385
        %s2388 = sld [smem:[#allocation3 + $0x5f]]
        %v2389 = vstv %s2388
        %v2390 = vmul.f32 %v2389, %v500
        %2392 = vrot.lane.b32.xlu0 %v2390, 126
        %v2393 = vpop.permute.xlu0 %2392
        %v2395 = vadd.f32 %v2387, %v2393
        %s2396 = sld [smem:[#allocation3 + $0x7f]]
        %v2397 = vstv %s2396
        %v2398 = vmul.f32 %v2397, %v501
        %v2399 = vadd.f32 %v2395, %v2398
        %s2400 = sld [smem:[#allocation3 + $0x9f]]
        %v2401 = vstv %s2400
        %v2402 = vmul.f32 %v2401, %v501
        %2404 = vrot.lane.b32.xlu0 %v2402, 127
        %v2405 = vpop.permute.xlu0 %2404
        %v2407 = vadd.f32 %v2399, %v2405
        %s2408 = sld [smem:[#allocation3 + $0xbf]]
        %v2409 = vstv %s2408
        %v2410 = vmul.f32 %v2409, %v501
        %2412 = vrot.lane.b32.xlu0 %v2410, 126
        %v2413 = vpop.permute.xlu0 %2412
        %v2415 = vadd.f32 %v2407, %v2413
        %s2416 = sld [smem:[#allocation3 + $0xdf]]
        %v2417 = vstv %s2416
        %v2418 = vmul.f32 %v2417, %v502
        %v2419 = vadd.f32 %v2415, %v2418
        %s2420 = sld [smem:[#allocation3 + $0xff]]
        %v2421 = vstv %s2420
        %v2422 = vmul.f32 %v2421, %v502
        %2424 = vrot.lane.b32.xlu0 %v2422, 127
        %v2425 = vpop.permute.xlu0 %2424
        %v2427 = vadd.f32 %v2419, %v2425
        %s2428 = sld [smem:[#allocation3 + $0x11f]]
        %v2429 = vstv %s2428
        %v2430 = vmul.f32 %v2429, %v502
        %2432 = vrot.lane.b32.xlu0 %v2430, 126
        %v2433 = vpop.permute.xlu0 %2432
        %v2435 = vadd.f32 %v2427, %v2433
        %v2436 = vmax.f32 %v2435, 0.0
        %s2437 = scalar_lea.vmem %s319, 56 [#allocation7]
        %2438 = vst.msk [vmem:[%s2437] sm:$0xff] %vm743, %v2436
        %s2439 = sand.u32 %s146, 1
        %s2440 = scalar_lea.sflag [#allocation4], %s2439
        %s2441 = sand.u32 %s146, 1
        %s2442 = smul.addr %s2441, 64
        %s2443 = scalar_lea.vmem [#allocation7], %s2442
        // Predicated region
        $region79: #{basic_conv_do_relu.1} parent=69 // pred_check
          %p2444 = pneg %p156
        $region80: #{basic_conv_do_relu.1} parent=69 // pred_check_branch
          %2446 = sbr.rel (%p2444) target = $region82
        $region81: #{basic_conv_do_relu.1} parent=69 // pred_region
          %s2448 = ssub.s32 1024, 1024
          %2449 = vsyncadd %s2440, %s2448
          %s2450 = smul.addr %s23, 16
          %s2451 = sadd.s32 %s24, %s2450
          %s2452 = smul.addr %s2451, 128
          %s2453 = scalar_lea.hbm %s4, %s2452
          %s2454 = sshll.u32 %s2443, 4
          %s2455 = int_to_ptr.vmem [resolvable:$true] %s2454
          %2460 = dma.vmem_to_hbm [thread:$0]  %s2455, 1024, %s2453, %s2440, 128, 256, 8
        $region82: #{basic_conv_do_relu.1} parent=69 // pred_fallthru
          _
      $region70: #{basic_conv_do_relu.1} parent=5 // pred_fallthru
        _
      %p2461 = scmp.le.s32.totalorder 2, %s14
      // Predicated region
      $region83: #{basic_conv_do_relu.1} parent=5 // pred_check
        %p2462 = pneg %p2461
      $region84: #{basic_conv_do_relu.1} parent=5 // pred_check_branch
        %2464 = sbr.rel (%p2462) target = $region86
      $region85: #{basic_conv_do_relu.1} parent=5 // pred_region
        %s2465 = ssub.s32 %s14, 2
        // Predicated region
        $region87: #{basic_conv_do_relu.1} parent=85 // pred_check
          %p2466 = pneg %p162
        $region88: #{basic_conv_do_relu.1} parent=85 // pred_check_branch
          %2468 = sbr.rel (%p2466) target = $region90
        $region89: #{basic_conv_do_relu.1} parent=85 // pred_region
          %s2469 = sand.u32 %s147, 1
          %s2470 = scalar_lea.sflag [#allocation4], %s2469
          %s2471 = sand.u32 %s147, 1
          %s2472 = smul.addr %s2471, 64
          %s2473 = scalar_lea.vmem [#allocation7], %s2472
          %2474 = dma.done %s2470, 1024
        $region90: #{basic_conv_do_relu.1} parent=85 // pred_fallthru
          _
      $region86: #{basic_conv_do_relu.1} parent=5 // pred_fallthru
        _
    $region6: #{basic_conv_do_relu.1} parent=1 // loop_footer
      %s18 = sadd.s32 1, %s14
    $region7: #{basic_conv_do_relu.1} parent=1 // loop_footer_branch
      %13 = sbr.rel target = $region3
    $region8: #{basic_conv_do_relu.1} parent=1 // loop_exit
      _
    %2475 = vsyncpa [#allocation4], 1
    %s2476 = scalar_lea.sflag [#allocation4], 1
    %2477 = vsyncpa %s2476, 1
    %2478 = vsyncpa [#allocation5], 1
    %s2479 = scalar_lea.sflag [#allocation5], 1
    %2480 = vsyncpa %s2479, 1

</llo_original>
